<compile_context>
chip_gen: v7x
topology: tpu7x:2x2x1
jax: 0.10.0
libtpu: 0.0.40
codegen_flags: <defaults>
</compile_context>

<pallas_src>
import functools

import jax
import jax.numpy as jnp
from jax.experimental import pallas as pl
from jax.experimental.pallas import tpu as pltpu

BN_EPS = 1e-5
LEAKY = 0.2
VMEM_LIMIT = 32 * 1024 * 1024   # explicit scoped-VMEM limit (safe on v5e/v6e/v7x)


def _round_up(x, m):
    return ((x + m - 1) // m) * m


def _choose_tm(m, tm_target):
    """Pick an M-tile: multiple of 16 (bf16 sublanes), and try to give the
    'parallel' grid axis >= 2 steps so both v7x TensorCores get work."""
    m16 = _round_up(m, 16)
    tm = min(tm_target, m16)
    if m16 <= tm and m16 >= 32:          # would be a single grid step -> split
        tm = _round_up((m16 + 1) // 2, 16)
    return tm


# ----------------------------------------------------------------------------
# Pallas kernels
# ----------------------------------------------------------------------------
def fused_matmul_bn_lrelu_kernel(a_ref, b_ref, shift_ref, o_ref, *, leaky):
    # a_ref: [TM, K] bf16, b_ref: [K, Cpad] bf16 (BN scale pre-folded),
    # shift_ref: [1, Cpad] f32 (conv bias + BN shift folded).
    acc = jnp.dot(a_ref[...], b_ref[...], preferred_element_type=jnp.float32)
    y = acc + shift_ref[...]
    o_ref[...] = jnp.maximum(y, leaky * y).astype(o_ref.dtype)   # LeakyReLU via vmax


def fc_sigmoid_kernel(x_ref, w_ref, b_ref, o_ref):
    # x_ref: [TM, 4096] bf16, w_ref: [1, 4096] bf16, b_ref: [1, 1] f32.
    prod = x_ref[...] * w_ref[...]                               # bf16 VPU multiply
    s = jnp.sum(prod.astype(jnp.float32), axis=-1, keepdims=True)  # f32 XLU reduce
    o_ref[...] = jax.nn.sigmoid(s + b_ref[0, 0])


# ----------------------------------------------------------------------------
# Glue: NHWC im2col patch extraction (pure slicing / reshaping, bf16 input)
# ----------------------------------------------------------------------------
def im2col_nhwc(x_nhwc, k=4, s=2, p=1):
    n, h, w, c = x_nhwc.shape
    oh = (h + 2 * p - k) // s + 1
    ow = (w + 2 * p - k) // s + 1
    xp = jnp.pad(x_nhwc, ((0, 0), (p, p), (p, p), (0, 0)))
    cols = []
    for kh in range(k):
        for kw in range(k):
            cols.append(xp[:, kh:kh + s * oh:s, kw:kw + s * ow:s, :])  # [N,OH,OW,C]
    pat = jnp.stack(cols, axis=3)                        # [N, OH, OW, KH*KW, C]
    return pat.reshape(n * oh * ow, k * k * c), oh, ow   # columns ordered (kh,kw,cin)


# ----------------------------------------------------------------------------
# Layer wrappers
# ----------------------------------------------------------------------------
def conv_bn_lrelu_nhwc(x_nhwc, bmat, shift, *, cout, tm_target=512):
    """Conv2d(k=4, s=2, p=1) + eval BatchNorm2d + LeakyReLU(0.2); NHWC in/out.

    `bmat`  : [K, Cpad] bf16 pre-folded (weight * BN scale), K = 16 * Cin.
    `shift` : [1, Cpad] f32 pre-folded (BN shift + conv bias * scale).
    """
    n = x_nhwc.shape[0]
    a, oh, ow = im2col_nhwc(x_nhwc, k=4)                 # bf16 [M, K]
    m, kdim = a.shape
    assert bmat.shape[0] == kdim, (bmat.shape, kdim)
    cpad = bmat.shape[1]

    tm = _choose_tm(m, tm_target)
    m_pad = _round_up(m, tm)
    if m_pad != m:
        a = jnp.pad(a, ((0, m_pad - m), (0, 0)))
    grid = (m_pad // tm,)

    out = pl.pallas_call(
        functools.partial(fused_matmul_bn_lrelu_kernel, leaky=LEAKY),
        out_shape=jax.ShapeDtypeStruct((m_pad, cpad), jnp.bfloat16),
        grid=grid,
        in_specs=[
            pl.BlockSpec((tm, kdim), lambda i: (i, 0)),    # A tiles (double-buffered)
            pl.BlockSpec((kdim, cpad), lambda i: (0, 0)),  # weights resident (const idx)
            pl.BlockSpec((1, cpad), lambda i: (0, 0)),     # shift resident
        ],
        out_specs=pl.BlockSpec((tm, cpad), lambda i: (i, 0)),
        compiler_params=pltpu.CompilerParams(
            dimension_semantics=("parallel",),             # megacore on v7x
            vmem_limit_bytes=VMEM_LIMIT),
    )(a, bmat, shift)

    out = out[:m, :cout]
    return out.reshape(n, oh, ow, cout)                    # NHWC


def fc_sigmoid(x_flat, w_fc_nhwc_bf16, b_fc, *, tm_target=512):
    """Linear(4096 -> 1) + Sigmoid as VPU multiply + row-reduce (no padded MXU)."""
    m, kdim = x_flat.shape
    x = x_flat.astype(jnp.bfloat16)
    tm = _choose_tm(m, tm_target)
    m_pad = _round_up(m, tm)
    if m_pad != m:
        x = jnp.pad(x, ((0, m_pad - m), (0, 0)))

    out = pl.pallas_call(
        fc_sigmoid_kernel,
        out_shape=jax.ShapeDtypeStruct((m_pad, 1), jnp.float32),
        grid=(m_pad // tm,),
        in_specs=[
            pl.BlockSpec((tm, kdim), lambda i: (i, 0)),
            pl.BlockSpec((1, kdim), lambda i: (0, 0)),
            pl.BlockSpec((1, 1), lambda i: (0, 0)),
        ],
        out_specs=pl.BlockSpec((tm, 1), lambda i: (i, 0)),
        compiler_params=pltpu.CompilerParams(
            dimension_semantics=("parallel",),
            vmem_limit_bytes=VMEM_LIMIT),
    )(x, w_fc_nhwc_bf16, b_fc)
    return out[:m]


# ----------------------------------------------------------------------------
# One-time parameter preparation (hoisted out of the per-call forward)
# ----------------------------------------------------------------------------
def prepare_params(params):
    """Fold BN into the conv weights, reorder/pad/cast them once."""
    def prep_conv(block, cin_pad=None):
        w, b, gamma, beta, mean, var = block          # w: [Cout, Cin, 4, 4] (OIHW)
        cout, cin, kh, kw = w.shape
        scale = gamma / jnp.sqrt(var + BN_EPS)                      # [Cout] f32
        shift = beta - mean * scale + b * scale                     # bias folded in
        w_f = w * scale[:, None, None, None]                        # fold scale (f32)
        if cin_pad is not None and cin_pad != cin:
            w_f = jnp.pad(w_f, ((0, 0), (0, cin_pad - cin), (0, 0), (0, 0)))
            cin = cin_pad
        # rows ordered (kh, kw, cin) to match NHWC im2col columns
        bmat = w_f.transpose(2, 3, 1, 0).reshape(kh * kw * cin, cout)
        cpad = _round_up(cout, 128)                   # lane-dense output stores
        if cpad != cout:
            bmat = jnp.pad(bmat, ((0, 0), (0, cpad - cout)))
            shift = jnp.pad(shift, (0, cpad - cout))
        return bmat.astype(jnp.bfloat16), shift.astype(jnp.float32).reshape(1, cpad)

    l1_b, l1_s = prep_conv(params["layer1"], cin_pad=4)   # K: 48 -> 64
    l2_b, l2_s = prep_conv(params["layer2"])
    l3_b, l3_s = prep_conv(params["layer3"])
    # FC weight is stored in PyTorch (NCHW-flatten) order; permute once to NHWC order.
    w_fc = params["fc_w"].reshape(1, 256, 4, 4).transpose(0, 2, 3, 1).reshape(1, 4096)
    return {
        "l1_bmat": l1_b, "l1_shift": l1_s,
        "l2_bmat": l2_b, "l2_shift": l2_s,
        "l3_bmat": l3_b, "l3_shift": l3_s,
        "fc_w": w_fc.astype(jnp.bfloat16),
        "fc_b": params["fc_b"].reshape(1, 1).astype(jnp.float32),
    }


# ----------------------------------------------------------------------------
# Full Discriminator forward (eval mode)
# ----------------------------------------------------------------------------
def discriminator_forward(x, prepped):
    x = x.reshape(-1, 3, 32, 32)                         # input.view(-1, 3, 32, 32)
    x = x.transpose(0, 2, 3, 1).astype(jnp.bfloat16)     # NCHW -> NHWC once, bf16 early
    x = jnp.pad(x, ((0, 0), (0, 0), (0, 0), (0, 1)))     # Cin 3 -> 4 (matches padded W)
    x = conv_bn_lrelu_nhwc(x, prepped["l1_bmat"], prepped["l1_shift"], cout=64)
    # Dropout(0.4): identity in eval mode
    x = conv_bn_lrelu_nhwc(x, prepped["l2_bmat"], prepped["l2_shift"], cout=128)
    # Dropout(0.4): identity in eval mode
    x = conv_bn_lrelu_nhwc(x, prepped["l3_bmat"], prepped["l3_shift"], cout=256)
    n = x.shape[0]
    x_flat = x.reshape(n, 4 * 4 * 256)                   # NHWC flatten
    return fc_sigmoid(x_flat, prepped["fc_w"], prepped["fc_b"])   # [N, 1]


# ----------------------------------------------------------------------------
# Deterministic example params / run
# ----------------------------------------------------------------------------
def init_params(key):
    def conv_block(key, cin, cout):
        k1, k2, k3, k4, k5, k6 = jax.random.split(key, 6)
        w = 0.05 * jax.random.normal(k1, (cout, cin, 4, 4), jnp.float32)
        b = 0.01 * jax.random.normal(k2, (cout,), jnp.float32)
        gamma = 1.0 + 0.1 * jax.random.normal(k3, (cout,), jnp.float32)
        beta = 0.1 * jax.random.normal(k4, (cout,), jnp.float32)
        mean = 0.05 * jax.random.normal(k5, (cout,), jnp.float32)
        var = jnp.abs(jax.random.normal(k6, (cout,), jnp.float32)) + 0.5
        return (w, b, gamma, beta, mean, var)

    k1, k2, k3, k4, k5 = jax.random.split(key, 5)
    return {
        "layer1": conv_block(k1, 3, 64),
        "layer2": conv_block(k2, 64, 128),
        "layer3": conv_block(k3, 128, 256),
        "fc_w": 0.02 * jax.random.normal(k4, (1, 4096), jnp.float32),
        "fc_b": 0.01 * jax.random.normal(k5, (1,), jnp.float32),
    }


if __name__ == "__main__":
    key = jax.random.PRNGKey(0)
    pkey, xkey = jax.random.split(key)
    params = init_params(pkey)
    prepped = prepare_params(params)                          # one-time weight prep
    x = jax.random.normal(xkey, (2, 3, 32, 32), jnp.float32)  # NCHW, CIFAR10 size

    fwd = jax.jit(discriminator_forward)
    out = fwd(x, prepped)
    out = jax.block_until_ready(out)

    assert out.shape == (2, 1), out.shape
    assert bool(jnp.all(jnp.isfinite(out)))
    assert bool(jnp.all((out >= 0.0) & (out <= 1.0)))         # sigmoid range
    print("KERNEL_OK")
</pallas_src>

<mosaic_0001>
module attributes {stable_mosaic.version = 11 : i64} {
  func.func @fused_matmul_bn_lrelu_kernel(%arg0: i32, %arg1: memref<256x64xbf16, #tpu.memory_space<vmem>>, %arg2: memref<64x128xbf16, #tpu.memory_space<vmem>>, %arg3: memref<1x128xf32, #tpu.memory_space<vmem>>, %arg4: memref<256x128xbf16, #tpu.memory_space<vmem>>) attributes {dimension_semantics = [#tpu.dimension_semantics<parallel>], iteration_bounds = array<i64: 2>, scalar_prefetch = 0 : i64, scratch_operands = 0 : i64, tpu.core_type = #tpu.core_type<tc>, window_params = [{transform_indices = @transform_0, window_bounds = array<i64: 256, 64>}, {pipeline_mode = #tpu.pipeline_mode<synchronous>, transform_indices = @transform_1, window_bounds = array<i64: 64, 128>}, {pipeline_mode = #tpu.pipeline_mode<synchronous>, transform_indices = @transform_2, window_bounds = array<i64: 1, 128>}, {transform_indices = @transform_3, window_bounds = array<i64: 256, 128>}]} {
    %c0 = arith.constant 0 : index
    %c0_0 = arith.constant 0 : index
    %0 = vector.load %arg1[%c0, %c0_0] : memref<256x64xbf16, #tpu.memory_space<vmem>>, vector<256x64xbf16>
    %c0_1 = arith.constant 0 : index
    %c0_2 = arith.constant 0 : index
    %1 = vector.load %arg2[%c0_1, %c0_2] : memref<64x128xbf16, #tpu.memory_space<vmem>>, vector<64x128xbf16>
    %cst = arith.constant dense<0.000000e+00> : vector<256x128xf32>
    %2 = tpu.matmul %0, %1, %cst {dimension_numbers = #tpu.dot_dimension_numbers<[1], [0], [0], [1], [0, 0, 1, 1], [], []>} : vector<256x64xbf16>, vector<64x128xbf16>, vector<256x128xf32> -> vector<256x128xf32>
    %c0_3 = arith.constant 0 : index
    %c0_4 = arith.constant 0 : index
    %3 = vector.load %arg3[%c0_3, %c0_4] : memref<1x128xf32, #tpu.memory_space<vmem>>, vector<1x128xf32>
    %4 = vector.broadcast %3 : vector<1x128xf32> to vector<256x128xf32>
    %5 = arith.addf %2, %4 : vector<256x128xf32>
    %cst_5 = arith.constant 2.000000e-01 : f32
    %6 = vector.broadcast %cst_5 : f32 to vector<256x128xf32>
    %7 = arith.mulf %6, %5 : vector<256x128xf32>
    %8 = arith.maximumf %5, %7 : vector<256x128xf32>
    %9 = arith.truncf %8 : vector<256x128xf32> to vector<256x128xbf16>
    %c0_6 = arith.constant 0 : index
    %c0_7 = arith.constant 0 : index
    %10 = vector.load %arg4[%c0_6, %c0_7] : memref<256x128xbf16, #tpu.memory_space<vmem>>, vector<256x128xbf16>
    tpu.vector_store %arg4[%c0_6, %c0_7], %9 {strides = array<i32>} : memref<256x128xbf16, #tpu.memory_space<vmem>>, vector<256x128xbf16>,
    return
  }
  func.func @transform_0(%arg0: i32) -> (i32, i32) {
    %c0_i32 = arith.constant 0 : i32
    %c0_i32_0 = arith.constant 0 : i32
    return %arg0, %c0_i32 : i32, i32
  }
  func.func @transform_1(%arg0: i32) -> (i32, i32) {
    %c0_i32 = arith.constant 0 : i32
    %c0_i32_0 = arith.constant 0 : i32
    %c0_i32_1 = arith.constant 0 : i32
    return %c0_i32, %c0_i32_0 : i32, i32
  }
  func.func @transform_2(%arg0: i32) -> (i32, i32) {
    %c0_i32 = arith.constant 0 : i32
    %c0_i32_0 = arith.constant 0 : i32
    %c0_i32_1 = arith.constant 0 : i32
    return %c0_i32, %c0_i32_0 : i32, i32
  }
  func.func @transform_3(%arg0: i32) -> (i32, i32) {
    %c0_i32 = arith.constant 0 : i32
    %c0_i32_0 = arith.constant 0 : i32
    return %arg0, %c0_i32 : i32, i32
  }
}

module attributes {stable_mosaic.version = 11 : i64} {
  func.func @fused_matmul_bn_lrelu_kernel(%arg0: i32, %arg1: memref<64x1024xbf16, #tpu.memory_space<vmem>>, %arg2: memref<1024x128xbf16, #tpu.memory_space<vmem>>, %arg3: memref<1x128xf32, #tpu.memory_space<vmem>>, %arg4: memref<64x128xbf16, #tpu.memory_space<vmem>>) attributes {dimension_semantics = [#tpu.dimension_semantics<parallel>], iteration_bounds = array<i64: 2>, scalar_prefetch = 0 : i64, scratch_operands = 0 : i64, tpu.core_type = #tpu.core_type<tc>, window_params = [{transform_indices = @transform_0, window_bounds = array<i64: 64, 1024>}, {pipeline_mode = #tpu.pipeline_mode<synchronous>, transform_indices = @transform_1, window_bounds = array<i64: 1024, 128>}, {pipeline_mode = #tpu.pipeline_mode<synchronous>, transform_indices = @transform_2, window_bounds = array<i64: 1, 128>}, {transform_indices = @transform_3, window_bounds = array<i64: 64, 128>}]} {
    %c0 = arith.constant 0 : index
    %c0_0 = arith.constant 0 : index
    %0 = vector.load %arg1[%c0, %c0_0] : memref<64x1024xbf16, #tpu.memory_space<vmem>>, vector<64x1024xbf16>
    %c0_1 = arith.constant 0 : index
    %c0_2 = arith.constant 0 : index
    %1 = vector.load %arg2[%c0_1, %c0_2] : memref<1024x128xbf16, #tpu.memory_space<vmem>>, vector<1024x128xbf16>
    %cst = arith.constant dense<0.000000e+00> : vector<64x128xf32>
    %2 = tpu.matmul %0, %1, %cst {dimension_numbers = #tpu.dot_dimension_numbers<[1], [0], [0], [1], [0, 0, 1, 1], [], []>} : vector<64x1024xbf16>, vector<1024x128xbf16>, vector<64x128xf32> -> vector<64x128xf32>
    %c0_3 = arith.constant 0 : index
    %c0_4 = arith.constant 0 : index
    %3 = vector.load %arg3[%c0_3, %c0_4] : memref<1x128xf32, #tpu.memory_space<vmem>>, vector<1x128xf32>
    %4 = vector.broadcast %3 : vector<1x128xf32> to vector<64x128xf32>
    %5 = arith.addf %2, %4 : vector<64x128xf32>
    %cst_5 = arith.constant 2.000000e-01 : f32
    %6 = vector.broadcast %cst_5 : f32 to vector<64x128xf32>
    %7 = arith.mulf %6, %5 : vector<64x128xf32>
    %8 = arith.maximumf %5, %7 : vector<64x128xf32>
    %9 = arith.truncf %8 : vector<64x128xf32> to vector<64x128xbf16>
    %c0_6 = arith.constant 0 : index
    %c0_7 = arith.constant 0 : index
    %10 = vector.load %arg4[%c0_6, %c0_7] : memref<64x128xbf16, #tpu.memory_space<vmem>>, vector<64x128xbf16>
    tpu.vector_store %arg4[%c0_6, %c0_7], %9 {strides = array<i32>} : memref<64x128xbf16, #tpu.memory_space<vmem>>, vector<64x128xbf16>,
    return
  }
  func.func @transform_0(%arg0: i32) -> (i32, i32) {
    %c0_i32 = arith.constant 0 : i32
    %c0_i32_0 = arith.constant 0 : i32
    return %arg0, %c0_i32 : i32, i32
  }
  func.func @transform_1(%arg0: i32) -> (i32, i32) {
    %c0_i32 = arith.constant 0 : i32
    %c0_i32_0 = arith.constant 0 : i32
    %c0_i32_1 = arith.constant 0 : i32
    return %c0_i32, %c0_i32_0 : i32, i32
  }
  func.func @transform_2(%arg0: i32) -> (i32, i32) {
    %c0_i32 = arith.constant 0 : i32
    %c0_i32_0 = arith.constant 0 : i32
    %c0_i32_1 = arith.constant 0 : i32
    return %c0_i32, %c0_i32_0 : i32, i32
  }
  func.func @transform_3(%arg0: i32) -> (i32, i32) {
    %c0_i32 = arith.constant 0 : i32
    %c0_i32_0 = arith.constant 0 : i32
    return %arg0, %c0_i32 : i32, i32
  }
}

module attributes {stable_mosaic.version = 11 : i64} {
  func.func @fused_matmul_bn_lrelu_kernel(%arg0: i32, %arg1: memref<16x2048xbf16, #tpu.memory_space<vmem>>, %arg2: memref<2048x256xbf16, #tpu.memory_space<vmem>>, %arg3: memref<1x256xf32, #tpu.memory_space<vmem>>, %arg4: memref<16x256xbf16, #tpu.memory_space<vmem>>) attributes {dimension_semantics = [#tpu.dimension_semantics<parallel>], iteration_bounds = array<i64: 2>, scalar_prefetch = 0 : i64, scratch_operands = 0 : i64, tpu.core_type = #tpu.core_type<tc>, window_params = [{transform_indices = @transform_0, window_bounds = array<i64: 16, 2048>}, {pipeline_mode = #tpu.pipeline_mode<synchronous>, transform_indices = @transform_1, window_bounds = array<i64: 2048, 256>}, {pipeline_mode = #tpu.pipeline_mode<synchronous>, transform_indices = @transform_2, window_bounds = array<i64: 1, 256>}, {transform_indices = @transform_3, window_bounds = array<i64: 16, 256>}]} {
    %c0 = arith.constant 0 : index
    %c0_0 = arith.constant 0 : index
    %0 = vector.load %arg1[%c0, %c0_0] : memref<16x2048xbf16, #tpu.memory_space<vmem>>, vector<16x2048xbf16>
    %c0_1 = arith.constant 0 : index
    %c0_2 = arith.constant 0 : index
    %1 = vector.load %arg2[%c0_1, %c0_2] : memref<2048x256xbf16, #tpu.memory_space<vmem>>, vector<2048x256xbf16>
    %cst = arith.constant dense<0.000000e+00> : vector<16x256xf32>
    %2 = tpu.matmul %0, %1, %cst {dimension_numbers = #tpu.dot_dimension_numbers<[1], [0], [0], [1], [0, 0, 1, 1], [], []>} : vector<16x2048xbf16>, vector<2048x256xbf16>, vector<16x256xf32> -> vector<16x256xf32>
    %c0_3 = arith.constant 0 : index
    %c0_4 = arith.constant 0 : index
    %3 = vector.load %arg3[%c0_3, %c0_4] : memref<1x256xf32, #tpu.memory_space<vmem>>, vector<1x256xf32>
    %4 = vector.broadcast %3 : vector<1x256xf32> to vector<16x256xf32>
    %5 = arith.addf %2, %4 : vector<16x256xf32>
    %cst_5 = arith.constant 2.000000e-01 : f32
    %6 = vector.broadcast %cst_5 : f32 to vector<16x256xf32>
    %7 = arith.mulf %6, %5 : vector<16x256xf32>
    %8 = arith.maximumf %5, %7 : vector<16x256xf32>
    %9 = arith.truncf %8 : vector<16x256xf32> to vector<16x256xbf16>
    %c0_6 = arith.constant 0 : index
    %c0_7 = arith.constant 0 : index
    %10 = vector.load %arg4[%c0_6, %c0_7] : memref<16x256xbf16, #tpu.memory_space<vmem>>, vector<16x256xbf16>
    tpu.vector_store %arg4[%c0_6, %c0_7], %9 {strides = array<i32>} : memref<16x256xbf16, #tpu.memory_space<vmem>>, vector<16x256xbf16>,
    return
  }
  func.func @transform_0(%arg0: i32) -> (i32, i32) {
    %c0_i32 = arith.constant 0 : i32
    %c0_i32_0 = arith.constant 0 : i32
    return %arg0, %c0_i32 : i32, i32
  }
  func.func @transform_1(%arg0: i32) -> (i32, i32) {
    %c0_i32 = arith.constant 0 : i32
    %c0_i32_0 = arith.constant 0 : i32
    %c0_i32_1 = arith.constant 0 : i32
    return %c0_i32, %c0_i32_0 : i32, i32
  }
  func.func @transform_2(%arg0: i32) -> (i32, i32) {
    %c0_i32 = arith.constant 0 : i32
    %c0_i32_0 = arith.constant 0 : i32
    %c0_i32_1 = arith.constant 0 : i32
    return %c0_i32, %c0_i32_0 : i32, i32
  }
  func.func @transform_3(%arg0: i32) -> (i32, i32) {
    %c0_i32 = arith.constant 0 : i32
    %c0_i32_0 = arith.constant 0 : i32
    return %arg0, %c0_i32 : i32, i32
  }
}

module attributes {stable_mosaic.version = 11 : i64} {
  func.func @fc_sigmoid_kernel(%arg0: i32, %arg1: memref<16x4096xbf16, #tpu.memory_space<vmem>>, %arg2: memref<1x4096xbf16, #tpu.memory_space<vmem>>, %arg3: memref<1x1xf32, #tpu.memory_space<vmem>>, %arg4: memref<16x1xf32, #tpu.memory_space<vmem>>) attributes {dimension_semantics = [#tpu.dimension_semantics<parallel>], iteration_bounds = array<i64: 1>, scalar_prefetch = 0 : i64, scratch_operands = 0 : i64, tpu.core_type = #tpu.core_type<tc>, window_params = [{transform_indices = @transform_0, window_bounds = array<i64: 16, 4096>}, {pipeline_mode = #tpu.pipeline_mode<synchronous>, transform_indices = @transform_1, window_bounds = array<i64: 1, 4096>}, {pipeline_mode = #tpu.pipeline_mode<synchronous>, transform_indices = @transform_2, window_bounds = array<i64: 1, 1>}, {transform_indices = @transform_3, window_bounds = array<i64: 16, 1>}]} {
    %c0 = arith.constant 0 : index
    %c0_0 = arith.constant 0 : index
    %0 = vector.load %arg1[%c0, %c0_0] : memref<16x4096xbf16, #tpu.memory_space<vmem>>, vector<16x4096xbf16>
    %c0_1 = arith.constant 0 : index
    %c0_2 = arith.constant 0 : index
    %1 = vector.load %arg2[%c0_1, %c0_2] : memref<1x4096xbf16, #tpu.memory_space<vmem>>, vector<1x4096xbf16>
    %2 = vector.broadcast %1 : vector<1x4096xbf16> to vector<16x4096xbf16>
    %3 = arith.mulf %0, %2 : vector<16x4096xbf16>
    %4 = arith.extf %3 : vector<16x4096xbf16> to vector<16x4096xf32>
    %cst = arith.constant dense<0.000000e+00> : vector<16xf32>
    %5 = vector.multi_reduction <add>, %4, %cst [1] : vector<16x4096xf32> to vector<16xf32>
    %6 = vector.shape_cast %5 : vector<16xf32> to vector<16x1xf32>
    %c0_3 = arith.constant 0 : index
    %c0_4 = arith.constant 0 : index
    %7 = vector.load %arg3[%c0_3, %c0_4] : memref<1x1xf32, #tpu.memory_space<vmem>>, vector<1x1xf32>
    %8 = vector.extract %7[0, 0] : f32 from vector<1x1xf32>
    %9 = vector.broadcast %8 : f32 to vector<16x1xf32>
    %10 = arith.addf %6, %9 : vector<16x1xf32>
    %11 = arith.negf %10 : vector<16x1xf32>
    %12 = math.exp %11 : vector<16x1xf32>
    %cst_5 = arith.constant 1.000000e+00 : f32
    %13 = vector.broadcast %cst_5 : f32 to vector<16x1xf32>
    %14 = arith.addf %13, %12 : vector<16x1xf32>
    %15 = arith.divf %13, %14 : vector<16x1xf32>
    %c0_6 = arith.constant 0 : index
    %c0_7 = arith.constant 0 : index
    %16 = vector.load %arg4[%c0_6, %c0_7] : memref<16x1xf32, #tpu.memory_space<vmem>>, vector<16x1xf32>
    tpu.vector_store %arg4[%c0_6, %c0_7], %15 {strides = array<i32>} : memref<16x1xf32, #tpu.memory_space<vmem>>, vector<16x1xf32>,
    return
  }
  func.func @transform_0(%arg0: i32) -> (i32, i32) {
    %c0_i32 = arith.constant 0 : i32
    %c0_i32_0 = arith.constant 0 : i32
    return %arg0, %c0_i32 : i32, i32
  }
  func.func @transform_1(%arg0: i32) -> (i32, i32) {
    %c0_i32 = arith.constant 0 : i32
    %c0_i32_0 = arith.constant 0 : i32
    %c0_i32_1 = arith.constant 0 : i32
    return %c0_i32, %c0_i32_0 : i32, i32
  }
  func.func @transform_2(%arg0: i32) -> (i32, i32) {
    %c0_i32 = arith.constant 0 : i32
    %c0_i32_0 = arith.constant 0 : i32
    %c0_i32_1 = arith.constant 0 : i32
    return %c0_i32, %c0_i32_0 : i32, i32
  }
  func.func @transform_3(%arg0: i32) -> (i32, i32) {
    %c0_i32 = arith.constant 0 : i32
    %c0_i32_0 = arith.constant 0 : i32
    return %arg0, %c0_i32 : i32, i32
  }
}

</mosaic_0001>

<llo_original>
// kernel: discriminator_forward.4
$region0: #{discriminator_forward.4}
  #allocation0 [shape = 'u32[]', space=smem, size = 0x4, offset = 0x4, fixed_abs, tag = 'smem constant byte address 0x4 - core index']
  #allocation1 [shape = 'u32[144,128]{1,0:T(1,128)}', space=vmem, size = 0x12000, scoped, tag = 'internal scratch']
  %s0 = inlined_call_operand.vmem [shape: bf16[512,64], index: 0, kind: input, shape index: {}]
  %s1 = inlined_call_operand.vmem [shape: bf16[64,128], index: 1, kind: input, shape index: {}]
  %s2 = inlined_call_operand.vmem [shape: f32[1,128], index: 2, kind: input, shape index: {}]
  %s3 = inlined_call_operand.vmem [shape: bf16[512,128], index: 3, kind: output, shape index: {}]
  %s4 = sld [smem:[#allocation0]]
  $region45: #{discriminator_forward.4} parent=0
    _
  %s6 = ssub.s32 1, %s4
  %s7 = scalar_select 0, %s6, %s4
  loop: start=0, step=1, limit=4
  $region2: #{discriminator_forward.4} parent=0 // loop_pre_header
    _
  $region3: #{discriminator_forward.4} parent=0 // loop_header
    %s9 = sphi 0, %s13
    %p10 = scmp.ge.s32.totalorder %s9, 4
    %s19 = sphi 0, %s21
    %s22 = sphi 0, %s19
    %s23 = sphi 0, %s22
    %s39 = sphi 0, %s23
    %s43 = sphi 0, %s43
    %s45 = sphi 0, %s43
    %s46 = sphi 0, %s45
    %s60 = sphi 0, %s46
    %s64 = sphi 0, %s64
    %s66 = sphi 0, %s64
    %s67 = sphi 0, %s66
    %s81 = sphi 0, %s67
    %s87 = sphi 0, %s89
    %s90 = sphi 0, %s87
    %s91 = sphi 0, %s90
    %s107 = sphi 0, %s91
  $region4: #{discriminator_forward.4} parent=0 // loop_header_branch
    %12 = sbr.rel (%p10) target = $region8
  $region5: #{discriminator_forward.4} parent=0 // loop_body
    %s14 = ssub.s32 %s9, 1
    %s15 = ssub.s32 %s9, 2
    %s16 = sadd.s32 %s9, 1
    %s17 = ssub.s32 %s9, %s16
    %p18 = scmp.eq.s32.totalorder %s17, 0
    %s20 = sadd.s32 %s19, 1
    %s21 = scalar_select %p18, %s19, %s20
    %p24 = pneg %p18
    %p25 = scmp.eq.s32.totalorder %s9, 1
    %p26 = por %p24, %p25
    %p27 = scmp.ne.s32.totalorder %s19, %s22
    %p28 = scmp.eq.s32.totalorder %s9, 0
    %p29 = por %p27, %p28
    %p30 = scmp.ne.s32.totalorder %s19, %s22
    %p31 = scmp.eq.s32.totalorder %s14, 1
    %p32 = por %p30, %p31
    %p33 = scmp.ne.s32.totalorder %s22, %s23
    %p34 = scmp.eq.s32.totalorder %s14, 0
    %p35 = por %p33, %p34
    %p36 = scmp.ne.s32.totalorder %s22, %s23
    %p37 = scmp.eq.s32.totalorder %s15, 1
    %p38 = por %p36, %p37
    %p40 = scmp.ne.s32.totalorder %s23, %s39
    %p41 = scmp.eq.s32.totalorder %s15, 0
    %p42 = por %p40, %p41
    %s44 = sadd.s32 %s43, 1
    %p47 = scmp.eq.s32.totalorder %s9, 1
    %p48 = scmp.ne.s32.totalorder %s43, %s45
    %p49 = scmp.eq.s32.totalorder %s9, 0
    %p50 = por %p48, %p49
    %p51 = scmp.ne.s32.totalorder %s43, %s45
    %p52 = scmp.eq.s32.totalorder %s14, 1
    %p53 = por %p51, %p52
    %p54 = scmp.ne.s32.totalorder %s45, %s46
    %p55 = scmp.eq.s32.totalorder %s14, 0
    %p56 = por %p54, %p55
    %p57 = scmp.ne.s32.totalorder %s45, %s46
    %p58 = scmp.eq.s32.totalorder %s15, 1
    %p59 = por %p57, %p58
    %p61 = scmp.ne.s32.totalorder %s46, %s60
    %p62 = scmp.eq.s32.totalorder %s15, 0
    %p63 = por %p61, %p62
    %s65 = sadd.s32 %s64, 1
    %p68 = scmp.eq.s32.totalorder %s9, 1
    %p69 = scmp.ne.s32.totalorder %s64, %s66
    %p70 = scmp.eq.s32.totalorder %s9, 0
    %p71 = por %p69, %p70
    %p72 = scmp.ne.s32.totalorder %s64, %s66
    %p73 = scmp.eq.s32.totalorder %s14, 1
    %p74 = por %p72, %p73
    %p75 = scmp.ne.s32.totalorder %s66, %s67
    %p76 = scmp.eq.s32.totalorder %s14, 0
    %p77 = por %p75, %p76
    %p78 = scmp.ne.s32.totalorder %s66, %s67
    %p79 = scmp.eq.s32.totalorder %s15, 1
    %p80 = por %p78, %p79
    %p82 = scmp.ne.s32.totalorder %s67, %s81
    %p83 = scmp.eq.s32.totalorder %s15, 0
    %p84 = por %p82, %p83
    %s85 = ssub.s32 %s9, %s16
    %p86 = scmp.eq.s32.totalorder %s85, 0
    %s88 = sadd.s32 %s87, 1
    %s89 = scalar_select %p86, %s87, %s88
    %p92 = pneg %p86
    %p93 = scmp.eq.s32.totalorder %s9, 1
    %p94 = por %p92, %p93
    %p95 = scmp.ne.s32.totalorder %s87, %s90
    %p96 = scmp.eq.s32.totalorder %s9, 0
    %p97 = por %p95, %p96
    %p98 = scmp.ne.s32.totalorder %s87, %s90
    %p99 = scmp.eq.s32.totalorder %s14, 1
    %p100 = por %p98, %p99
    %p101 = scmp.ne.s32.totalorder %s90, %s91
    %p102 = scmp.eq.s32.totalorder %s14, 0
    %p103 = por %p101, %p102
    %p104 = scmp.ne.s32.totalorder %s90, %s91
    %p105 = scmp.eq.s32.totalorder %s15, 1
    %p106 = por %p104, %p105
    %p108 = scmp.ne.s32.totalorder %s91, %s107
    %p109 = scmp.eq.s32.totalorder %s15, 0
    %p110 = por %p108, %p109
    %p111 = scmp.le.s32.totalorder 1, %s9
    %p112 = scmp.lt.s32.totalorder %s9, 3
    %p113 = pnand %p111, %p112
    %p114 = pneg %p113
    // Predicated region
    $region9: #{discriminator_forward.4} parent=5 // pred_check
      _
    $region10: #{discriminator_forward.4} parent=5 // pred_check_branch
      %116 = sbr.rel (%p113) target = $region12
    $region11: #{discriminator_forward.4} parent=5 // pred_region
      %s117 = ssub.s32 %s9, 1
      // Predicated region
      $region13: #{discriminator_forward.4} parent=11 // pred_check
        %p118 = pneg %p56
      $region14: #{discriminator_forward.4} parent=11 // pred_check_branch
        %120 = sbr.rel (%p118) target = $region16
      $region15: #{discriminator_forward.4} parent=11 // pred_region
        _
      $region16: #{discriminator_forward.4} parent=11 // pred_fallthru
        _
      // Predicated region
      $region17: #{discriminator_forward.4} parent=11 // pred_check
        %p121 = pneg %p77
      $region18: #{discriminator_forward.4} parent=11 // pred_check_branch
        %123 = sbr.rel (%p121) target = $region20
      $region19: #{discriminator_forward.4} parent=11 // pred_region
        _
      $region20: #{discriminator_forward.4} parent=11 // pred_fallthru
        _
    $region12: #{discriminator_forward.4} parent=5 // pred_fallthru
      _
    %p124 = scmp.lt.s32.totalorder %s9, 2
    // Predicated region
    $region21: #{discriminator_forward.4} parent=5 // pred_check
      %p125 = pneg %p124
    $region22: #{discriminator_forward.4} parent=5 // pred_check_branch
      %127 = sbr.rel (%p125) target = $region24
    $region23: #{discriminator_forward.4} parent=5 // pred_region
      // Predicated region
      $region25: #{discriminator_forward.4} parent=23 // pred_check
        %p128 = pneg %p29
      $region26: #{discriminator_forward.4} parent=23 // pred_check_branch
        %130 = sbr.rel (%p128) target = $region28
      $region27: #{discriminator_forward.4} parent=23 // pred_region
        %s131 = smul.u32 32, %s9
        %p132 = scmp.lt.s32.totalorder %s131, 63
        %s133 = scalar_select %p132, %s131, 63
        %s134 = smul.addr %s133, 4
        %s135 = scalar_lea.vmem %s0, %s134
        %s136 = smul.u32 32, %s9
      $region28: #{discriminator_forward.4} parent=23 // pred_fallthru
        _
    $region24: #{discriminator_forward.4} parent=5 // pred_fallthru
      _
    %p137 = scmp.le.s32.totalorder 1, %s9
    %p138 = scmp.lt.s32.totalorder %s9, 3
    %p139 = pnand %p137, %p138
    %p140 = pneg %p139
    // Predicated region
    $region29: #{discriminator_forward.4} parent=5 // pred_check
      _
    $region30: #{discriminator_forward.4} parent=5 // pred_check_branch
      %142 = sbr.rel (%p139) target = $region32
    $region31: #{discriminator_forward.4} parent=5 // pred_region
      %s143 = ssub.s32 %s9, 1
      %s144 = smul.u32 32, %s14
      %p145 = scmp.lt.s32.totalorder %s144, 63
      %s146 = scalar_select %p145, %s144, 63
      %s147 = smul.addr %s146, 4
      %s148 = scalar_lea.vmem %s0, %s147
      %p149 = pneg %p35
      %p150 = pneg %p32
      %p151 = pneg %p56
      %p152 = pneg %p53
      %p153 = pneg %p77
      %p154 = pneg %p74
      %p155 = pneg %p103
      %p156 = pneg %p100
      %s157 = smul.u32 32, %s14
      %p158 = scmp.lt.s32.totalorder %s157, 63
      %s159 = scalar_select %p158, %s157, 63
      %s160 = smul.addr %s159, 4
      %s161 = scalar_lea.vmem %s3, %s160
      %s162 = smul.u32 32, %s14
      %p163 = scmp.lt.s32.totalorder %s162, 63
      %s164 = scalar_select %p163, %s162, 63
      %s165 = smul.addr %s164, 4
      %s166 = scalar_lea.vmem %s0, %s165
      %s167 = smul.u32 32, %s14
      %s168 = smul.u32 32, %s14
      %p169 = scmp.lt.s32.totalorder %s168, 63
      %s170 = scalar_select %p169, %s168, 63
      %s171 = smul.addr %s170, 4
      %s172 = scalar_lea.vmem %s3, %s171
      %s173 = smul.u32 32, %s14
      %v175 = vld [vmem:[%s166] sm:$0xf]
      %v176 = vld [vmem:[%s166 + $0x4] sm:$0xf]
      %v177 = vld [vmem:[%s166 + $0x8] sm:$0xf]
      %v178 = vld [vmem:[%s166 + $0xc] sm:$0xf]
      %v179 = vld [vmem:[%s166 + $0x10] sm:$0xf]
      %v180 = vld [vmem:[%s166 + $0x14] sm:$0xf]
      %v181 = vld [vmem:[%s166 + $0x18] sm:$0xf]
      %v182 = vld [vmem:[%s166 + $0x1c] sm:$0xf]
      %v183 = vld [vmem:[%s166 + $0x20] sm:$0xf]
      %v184 = vld [vmem:[%s166 + $0x24] sm:$0xf]
      %v185 = vld [vmem:[%s166 + $0x28] sm:$0xf]
      %v186 = vld [vmem:[%s166 + $0x2c] sm:$0xf]
      %v187 = vld [vmem:[%s166 + $0x30] sm:$0xf]
      %v188 = vld [vmem:[%s166 + $0x34] sm:$0xf]
      %v189 = vld [vmem:[%s166 + $0x38] sm:$0xf]
      %v190 = vld [vmem:[%s166 + $0x3c] sm:$0xf]
      %v191 = vld [vmem:[%s166 + $0x40] sm:$0xf]
      %v192 = vld [vmem:[%s166 + $0x44] sm:$0xf]
      %v193 = vld [vmem:[%s166 + $0x48] sm:$0xf]
      %v194 = vld [vmem:[%s166 + $0x4c] sm:$0xf]
      %v195 = vld [vmem:[%s166 + $0x50] sm:$0xf]
      %v196 = vld [vmem:[%s166 + $0x54] sm:$0xf]
      %v197 = vld [vmem:[%s166 + $0x58] sm:$0xf]
      %v198 = vld [vmem:[%s166 + $0x5c] sm:$0xf]
      %v199 = vld [vmem:[%s166 + $0x60] sm:$0xf]
      %v200 = vld [vmem:[%s166 + $0x64] sm:$0xf]
      %v201 = vld [vmem:[%s166 + $0x68] sm:$0xf]
      %v202 = vld [vmem:[%s166 + $0x6c] sm:$0xf]
      %v203 = vld [vmem:[%s166 + $0x70] sm:$0xf]
      %v204 = vld [vmem:[%s166 + $0x74] sm:$0xf]
      %v205 = vld [vmem:[%s166 + $0x78] sm:$0xf]
      %v206 = vld [vmem:[%s166 + $0x7c] sm:$0xf]
      %v207 = vld [vmem:[%s1] sm:$0xf]
      %v208 = vld [vmem:[%s1 + $0x4] sm:$0xf]
      %v209 = vld [vmem:[%s1 + $0x8] sm:$0xf]
      %v210 = vld [vmem:[%s1 + $0xc] sm:$0xf]
      %v211 = vld [vmem:[%s1 + $0x10] sm:$0xf]
      %v212 = vld [vmem:[%s1 + $0x14] sm:$0xf]
      %v213 = vld [vmem:[%s1 + $0x18] sm:$0xf]
      %v214 = vld [vmem:[%s1 + $0x1c] sm:$0xf]
      %v215 = vld [vmem:[%s2] sm:$0x1]
      %v217 = vlaneseq
      %v218 = vshrl.u32 %v217, 7
      %v219 = vsub.s32 0, %v218
      %v220 = vrot.slane %v215, %v219
      %v254 = vunpack.c.l.b16 %v175
      %v255 = vunpack.c.l.b16 %v176
      %v256 = vunpack.c.l.b16 %v177
      %v257 = vunpack.c.l.b16 %v178
      %v258 = vunpack.c.l.b16 %v179
      %v259 = vunpack.c.l.b16 %v180
      %v260 = vunpack.c.l.b16 %v181
      %v261 = vunpack.c.l.b16 %v182
      %v262 = vunpack.c.l.b16 %v183
      %v263 = vunpack.c.l.b16 %v184
      %v264 = vunpack.c.l.b16 %v185
      %v265 = vunpack.c.l.b16 %v186
      %v266 = vunpack.c.l.b16 %v187
      %v267 = vunpack.c.l.b16 %v188
      %v268 = vunpack.c.l.b16 %v189
      %v269 = vunpack.c.l.b16 %v190
      %v270 = vunpack.c.l.b16 %v191
      %v271 = vunpack.c.l.b16 %v192
      %v272 = vunpack.c.l.b16 %v193
      %v273 = vunpack.c.l.b16 %v194
      %v274 = vunpack.c.l.b16 %v195
      %v275 = vunpack.c.l.b16 %v196
      %v276 = vunpack.c.l.b16 %v197
      %v277 = vunpack.c.l.b16 %v198
      %v278 = vunpack.c.l.b16 %v199
      %v279 = vunpack.c.l.b16 %v200
      %v280 = vunpack.c.l.b16 %v201
      %v281 = vunpack.c.l.b16 %v202
      %v282 = vunpack.c.l.b16 %v203
      %v283 = vunpack.c.l.b16 %v204
      %v284 = vunpack.c.l.b16 %v205
      %v285 = vunpack.c.l.b16 %v206
      %v286 = vpack.c.b16 %v255, %v254
      %v287 = vpack.c.b16 %v257, %v256
      %v288 = vpack.c.b16 %v259, %v258
      %v289 = vpack.c.b16 %v261, %v260
      %v290 = vpack.c.b16 %v263, %v262
      %v291 = vpack.c.b16 %v265, %v264
      %v292 = vpack.c.b16 %v267, %v266
      %v293 = vpack.c.b16 %v269, %v268
      %v294 = vpack.c.b16 %v271, %v270
      %v295 = vpack.c.b16 %v273, %v272
      %v296 = vpack.c.b16 %v275, %v274
      %v297 = vpack.c.b16 %v277, %v276
      %v298 = vpack.c.b16 %v279, %v278
      %v299 = vpack.c.b16 %v281, %v280
      %v300 = vpack.c.b16 %v283, %v282
      %v301 = vpack.c.b16 %v285, %v284
      %v310 = vunpack.c.l.b16 %v207
      %v311 = vunpack.c.l.b16 %v208
      %v312 = vunpack.c.l.b16 %v209
      %v313 = vunpack.c.l.b16 %v210
      %v314 = vunpack.c.l.b16 %v211
      %v315 = vunpack.c.l.b16 %v212
      %v316 = vunpack.c.l.b16 %v213
      %v317 = vunpack.c.l.b16 %v214
      %v318 = vpack.c.b16 %v311, %v310
      %v319 = vpack.c.b16 %v313, %v312
      %v320 = vpack.c.b16 %v315, %v314
      %v321 = vpack.c.b16 %v317, %v316
      %vm326 = vcmask 523264
      %v328 = vsel %vm326, %v286, 0
      %v331 = vsel %vm326, %v287, 0
      %v334 = vsel %vm326, %v288, 0
      %v337 = vsel %vm326, %v289, 0
      %v340 = vsel %vm326, %v290, 0
      %v343 = vsel %vm326, %v291, 0
      %v346 = vsel %vm326, %v292, 0
      %v349 = vsel %vm326, %v293, 0
      %v352 = vsel %vm326, %v294, 0
      %v355 = vsel %vm326, %v295, 0
      %v358 = vsel %vm326, %v296, 0
      %v361 = vsel %vm326, %v297, 0
      %v364 = vsel %vm326, %v298, 0
      %v367 = vsel %vm326, %v299, 0
      %v370 = vsel %vm326, %v300, 0
      %v373 = vsel %vm326, %v301, 0
      %375 = vmatprep.subr.bf16.mxu0 0
      %376 = vmatpush1.bf16.msra.mxu0 %v318
      %377 = vmatprep.subr.bf16.mxu0 0
      %378 = vmatpush1.bf16.msra.mxu0 %v319
      %379 = vmatprep.subr.bf16.mxu0 0
      %380 = vmatpush1.bf16.msra.mxu0 %v320
      %381 = vmatprep.subr.bf16.mxu0 0
      %382 = vmatpush1.bf16.msra.mxu0 %v321
      %383 = vmatprep.subr.bf16.mxu0 0
      %384 = vmatpush1.bf16.msra.mxu0 0
      %385 = vmatprep.subr.bf16.mxu0 0
      %386 = vmatpush1.bf16.msra.mxu0 0
      %387 = vmatprep.subr.bf16.mxu0 0
      %388 = vmatpush1.bf16.msra.mxu0 0
      %389 = vmatprep.subr.bf16.mxu0 0
      %390 = vmatpush1.bf16.msra.mxu0 0
      %391 = vmatprep.subr.bf16.mxu0 0
      %392 = vmatpush1.bf16.msra.mxu0 0
      %393 = vmatprep.subr.bf16.mxu0 0
      %394 = vmatpush1.bf16.msra.mxu0 0
      %395 = vmatprep.subr.bf16.mxu0 0
      %396 = vmatpush1.bf16.msra.mxu0 0
      %397 = vmatprep.subr.bf16.mxu0 0
      %398 = vmatpush1.bf16.msra.mxu0 0
      %399 = vmatprep.subr.bf16.mxu0 0
      %400 = vmatpush1.bf16.msra.mxu0 0
      %401 = vmatprep.subr.bf16.mxu0 0
      %402 = vmatpush1.bf16.msra.mxu0 0
      %403 = vmatprep.subr.bf16.mxu0 0
      %404 = vmatpush1.bf16.msra.mxu0 0
      %405 = vmatprep.subr.bf16.mxu0 0
      %406 = vmatpush1.bf16.msra.mxu0 0
      %407 = vmatprep.mubr.bf16.mxu0 0
      %408 = vmatmul.mubr.bf16.gmra.mrb[0].mxu0 %v328
      %v409 = vpop.f32.mrb[0].mxu0
      %v410 = vadd.f32 %v220, %v409
      %v411 = vpop.f32.mrb[0].mxu0
      %v412 = vpop.f32.mrb[0].mxu0
      %v413 = vadd.f32 %v220, %v412
      %v414 = vpop.f32.mrb[0].mxu0
      %415 = vmatprep.mubr.bf16.mxu0 0
      %416 = vmatmul.mubr.bf16.gmra.mrb[0].mxu0 %v331
      %v417 = vpop.f32.mrb[0].mxu0
      %v418 = vadd.f32 %v220, %v417
      %v419 = vpop.f32.mrb[0].mxu0
      %v420 = vpop.f32.mrb[0].mxu0
      %v421 = vadd.f32 %v220, %v420
      %v422 = vpop.f32.mrb[0].mxu0
      %423 = vmatprep.mubr.bf16.mxu0 0
      %424 = vmatmul.mubr.bf16.gmra.mrb[0].mxu0 %v334
      %v425 = vpop.f32.mrb[0].mxu0
      %v426 = vadd.f32 %v220, %v425
      %v427 = vpop.f32.mrb[0].mxu0
      %v428 = vpop.f32.mrb[0].mxu0
      %v429 = vadd.f32 %v220, %v428
      %v430 = vpop.f32.mrb[0].mxu0
      %431 = vmatprep.mubr.bf16.mxu0 0
      %432 = vmatmul.mubr.bf16.gmra.mrb[0].mxu0 %v337
      %v433 = vpop.f32.mrb[0].mxu0
      %v434 = vadd.f32 %v220, %v433
      %v435 = vpop.f32.mrb[0].mxu0
      %v436 = vpop.f32.mrb[0].mxu0
      %v437 = vadd.f32 %v220, %v436
      %v438 = vpop.f32.mrb[0].mxu0
      %439 = vmatprep.mubr.bf16.mxu0 0
      %440 = vmatmul.mubr.bf16.gmra.mrb[0].mxu0 %v340
      %v441 = vpop.f32.mrb[0].mxu0
      %v442 = vadd.f32 %v220, %v441
      %v443 = vpop.f32.mrb[0].mxu0
      %v444 = vpop.f32.mrb[0].mxu0
      %v445 = vadd.f32 %v220, %v444
      %v446 = vpop.f32.mrb[0].mxu0
      %447 = vmatprep.mubr.bf16.mxu0 0
      %448 = vmatmul.mubr.bf16.gmra.mrb[0].mxu0 %v343
      %v449 = vpop.f32.mrb[0].mxu0
      %v450 = vadd.f32 %v220, %v449
      %v451 = vpop.f32.mrb[0].mxu0
      %v452 = vpop.f32.mrb[0].mxu0
      %v453 = vadd.f32 %v220, %v452
      %v454 = vpop.f32.mrb[0].mxu0
      %455 = vmatprep.mubr.bf16.mxu0 0
      %456 = vmatmul.mubr.bf16.gmra.mrb[0].mxu0 %v346
      %v457 = vpop.f32.mrb[0].mxu0
      %v458 = vadd.f32 %v220, %v457
      %v459 = vpop.f32.mrb[0].mxu0
      %v460 = vpop.f32.mrb[0].mxu0
      %v461 = vadd.f32 %v220, %v460
      %v462 = vpop.f32.mrb[0].mxu0
      %463 = vmatprep.mubr.bf16.mxu0 0
      %464 = vmatmul.mubr.bf16.gmra.mrb[0].mxu0 %v349
      %v465 = vpop.f32.mrb[0].mxu0
      %v466 = vadd.f32 %v220, %v465
      %v467 = vpop.f32.mrb[0].mxu0
      %v468 = vpop.f32.mrb[0].mxu0
      %v469 = vadd.f32 %v220, %v468
      %v470 = vpop.f32.mrb[0].mxu0
      %471 = vmatprep.mubr.bf16.mxu0 0
      %472 = vmatmul.mubr.bf16.gmra.mrb[0].mxu0 %v352
      %v473 = vpop.f32.mrb[0].mxu0
      %v474 = vadd.f32 %v220, %v473
      %v475 = vpop.f32.mrb[0].mxu0
      %v476 = vpop.f32.mrb[0].mxu0
      %v477 = vadd.f32 %v220, %v476
      %v478 = vpop.f32.mrb[0].mxu0
      %479 = vmatprep.mubr.bf16.mxu0 0
      %480 = vmatmul.mubr.bf16.gmra.mrb[0].mxu0 %v355
      %v481 = vpop.f32.mrb[0].mxu0
      %v482 = vadd.f32 %v220, %v481
      %v483 = vpop.f32.mrb[0].mxu0
      %v484 = vpop.f32.mrb[0].mxu0
      %v485 = vadd.f32 %v220, %v484
      %v486 = vpop.f32.mrb[0].mxu0
      %487 = vmatprep.mubr.bf16.mxu0 0
      %488 = vmatmul.mubr.bf16.gmra.mrb[0].mxu0 %v358
      %v489 = vpop.f32.mrb[0].mxu0
      %v490 = vadd.f32 %v220, %v489
      %v491 = vpop.f32.mrb[0].mxu0
      %v492 = vpop.f32.mrb[0].mxu0
      %v493 = vadd.f32 %v220, %v492
      %v494 = vpop.f32.mrb[0].mxu0
      %495 = vmatprep.mubr.bf16.mxu0 0
      %496 = vmatmul.mubr.bf16.gmra.mrb[0].mxu0 %v361
      %v497 = vpop.f32.mrb[0].mxu0
      %v498 = vadd.f32 %v220, %v497
      %v499 = vpop.f32.mrb[0].mxu0
      %v500 = vpop.f32.mrb[0].mxu0
      %v501 = vadd.f32 %v220, %v500
      %v502 = vpop.f32.mrb[0].mxu0
      %503 = vmatprep.mubr.bf16.mxu0 0
      %504 = vmatmul.mubr.bf16.gmra.mrb[0].mxu0 %v364
      %v505 = vpop.f32.mrb[0].mxu0
      %v506 = vadd.f32 %v220, %v505
      %v507 = vpop.f32.mrb[0].mxu0
      %v508 = vpop.f32.mrb[0].mxu0
      %v509 = vadd.f32 %v220, %v508
      %v510 = vpop.f32.mrb[0].mxu0
      %511 = vmatprep.mubr.bf16.mxu0 0
      %512 = vmatmul.mubr.bf16.gmra.mrb[0].mxu0 %v367
      %v513 = vpop.f32.mrb[0].mxu0
      %v514 = vadd.f32 %v220, %v513
      %v515 = vpop.f32.mrb[0].mxu0
      %v516 = vpop.f32.mrb[0].mxu0
      %v517 = vadd.f32 %v220, %v516
      %v518 = vpop.f32.mrb[0].mxu0
      %519 = vmatprep.mubr.bf16.mxu0 0
      %520 = vmatmul.mubr.bf16.gmra.mrb[0].mxu0 %v370
      %v521 = vpop.f32.mrb[0].mxu0
      %v522 = vadd.f32 %v220, %v521
      %v523 = vpop.f32.mrb[0].mxu0
      %v524 = vpop.f32.mrb[0].mxu0
      %v525 = vadd.f32 %v220, %v524
      %v526 = vpop.f32.mrb[0].mxu0
      %527 = vmatprep.mubr.bf16.mxu0 0
      %528 = vmatmul.mubr.bf16.gmra.mrb[0].mxu0 %v373
      %v529 = vpop.f32.mrb[0].mxu0
      %v530 = vadd.f32 %v220, %v529
      %v531 = vpop.f32.mrb[0].mxu0
      %v532 = vpop.f32.mrb[0].mxu0
      %v533 = vadd.f32 %v220, %v532
      %v534 = vpop.f32.mrb[0].mxu0
      %535 = vdwg.mxu0
      %v536 = vmul.f32 %v410, 0.2
      %v537 = vmul.f32 %v413, 0.2
      %v538 = vmul.f32 %v418, 0.2
      %v539 = vmul.f32 %v421, 0.2
      %v540 = vmul.f32 %v426, 0.2
      %v541 = vmul.f32 %v429, 0.2
      %v542 = vmul.f32 %v434, 0.2
      %v543 = vmul.f32 %v437, 0.2
      %v544 = vmul.f32 %v442, 0.2
      %v545 = vmul.f32 %v445, 0.2
      %v546 = vmul.f32 %v450, 0.2
      %v547 = vmul.f32 %v453, 0.2
      %v548 = vmul.f32 %v458, 0.2
      %v549 = vmul.f32 %v461, 0.2
      %v550 = vmul.f32 %v466, 0.2
      %v551 = vmul.f32 %v469, 0.2
      %v552 = vmul.f32 %v474, 0.2
      %v553 = vmul.f32 %v477, 0.2
      %v554 = vmul.f32 %v482, 0.2
      %v555 = vmul.f32 %v485, 0.2
      %v556 = vmul.f32 %v490, 0.2
      %v557 = vmul.f32 %v493, 0.2
      %v558 = vmul.f32 %v498, 0.2
      %v559 = vmul.f32 %v501, 0.2
      %v560 = vmul.f32 %v506, 0.2
      %v561 = vmul.f32 %v509, 0.2
      %v562 = vmul.f32 %v514, 0.2
      %v563 = vmul.f32 %v517, 0.2
      %v564 = vmul.f32 %v522, 0.2
      %v565 = vmul.f32 %v525, 0.2
      %v566 = vmul.f32 %v530, 0.2
      %v567 = vmul.f32 %v533, 0.2
      %v568 = vmax.f32 %v410, %v536
      %v569 = vmax.f32 %v413, %v537
      %v570 = vmax.f32 %v418, %v538
      %v571 = vmax.f32 %v421, %v539
      %v572 = vmax.f32 %v426, %v540
      %v573 = vmax.f32 %v429, %v541
      %v574 = vmax.f32 %v434, %v542
      %v575 = vmax.f32 %v437, %v543
      %v576 = vmax.f32 %v442, %v544
      %v577 = vmax.f32 %v445, %v545
      %v578 = vmax.f32 %v450, %v546
      %v579 = vmax.f32 %v453, %v547
      %v580 = vmax.f32 %v458, %v548
      %v581 = vmax.f32 %v461, %v549
      %v582 = vmax.f32 %v466, %v550
      %v583 = vmax.f32 %v469, %v551
      %v584 = vmax.f32 %v474, %v552
      %v585 = vmax.f32 %v477, %v553
      %v586 = vmax.f32 %v482, %v554
      %v587 = vmax.f32 %v485, %v555
      %v588 = vmax.f32 %v490, %v556
      %v589 = vmax.f32 %v493, %v557
      %v590 = vmax.f32 %v498, %v558
      %v591 = vmax.f32 %v501, %v559
      %v592 = vmax.f32 %v506, %v560
      %v593 = vmax.f32 %v509, %v561
      %v594 = vmax.f32 %v514, %v562
      %v595 = vmax.f32 %v517, %v563
      %v596 = vmax.f32 %v522, %v564
      %v597 = vmax.f32 %v525, %v565
      %v598 = vmax.f32 %v530, %v566
      %v599 = vmax.f32 %v533, %v567
      %v600 = vpack.c.bf16 %v569, %v568
      %v601 = vpack.c.bf16 %v571, %v570
      %v602 = vpack.c.bf16 %v573, %v572
      %v603 = vpack.c.bf16 %v575, %v574
      %v604 = vpack.c.bf16 %v577, %v576
      %v605 = vpack.c.bf16 %v579, %v578
      %v606 = vpack.c.bf16 %v581, %v580
      %v607 = vpack.c.bf16 %v583, %v582
      %v608 = vpack.c.bf16 %v585, %v584
      %v609 = vpack.c.bf16 %v587, %v586
      %v610 = vpack.c.bf16 %v589, %v588
      %v611 = vpack.c.bf16 %v591, %v590
      %v612 = vpack.c.bf16 %v593, %v592
      %v613 = vpack.c.bf16 %v595, %v594
      %v614 = vpack.c.bf16 %v597, %v596
      %v615 = vpack.c.bf16 %v599, %v598
      %v632 = vunpack.c.l.b16 %v600
      %v633 = vunpack.c.h.b16 %v600
      %v634 = vunpack.c.l.b16 %v601
      %v635 = vunpack.c.h.b16 %v601
      %v636 = vunpack.c.l.b16 %v602
      %v637 = vunpack.c.h.b16 %v602
      %v638 = vunpack.c.l.b16 %v603
      %v639 = vunpack.c.h.b16 %v603
      %v640 = vunpack.c.l.b16 %v604
      %v641 = vunpack.c.h.b16 %v604
      %v642 = vunpack.c.l.b16 %v605
      %v643 = vunpack.c.h.b16 %v605
      %v644 = vunpack.c.l.b16 %v606
      %v645 = vunpack.c.h.b16 %v606
      %v646 = vunpack.c.l.b16 %v607
      %v647 = vunpack.c.h.b16 %v607
      %v648 = vunpack.c.l.b16 %v608
      %v649 = vunpack.c.h.b16 %v608
      %v650 = vunpack.c.l.b16 %v609
      %v651 = vunpack.c.h.b16 %v609
      %v652 = vunpack.c.l.b16 %v610
      %v653 = vunpack.c.h.b16 %v610
      %v654 = vunpack.c.l.b16 %v611
      %v655 = vunpack.c.h.b16 %v611
      %v656 = vunpack.c.l.b16 %v612
      %v657 = vunpack.c.h.b16 %v612
      %v658 = vunpack.c.l.b16 %v613
      %v659 = vunpack.c.h.b16 %v613
      %v660 = vunpack.c.l.b16 %v614
      %v661 = vunpack.c.h.b16 %v614
      %v662 = vunpack.c.l.b16 %v615
      %v663 = vunpack.c.h.b16 %v615
      %v664 = vpack.c.b16 %v632, %v632
      %v665 = vpack.c.b16 %v633, %v633
      %v666 = vpack.c.b16 %v634, %v634
      %v667 = vpack.c.b16 %v635, %v635
      %v668 = vpack.c.b16 %v636, %v636
      %v669 = vpack.c.b16 %v637, %v637
      %v670 = vpack.c.b16 %v638, %v638
      %v671 = vpack.c.b16 %v639, %v639
      %v672 = vpack.c.b16 %v640, %v640
      %v673 = vpack.c.b16 %v641, %v641
      %v674 = vpack.c.b16 %v642, %v642
      %v675 = vpack.c.b16 %v643, %v643
      %v676 = vpack.c.b16 %v644, %v644
      %v677 = vpack.c.b16 %v645, %v645
      %v678 = vpack.c.b16 %v646, %v646
      %v679 = vpack.c.b16 %v647, %v647
      %v680 = vpack.c.b16 %v648, %v648
      %v681 = vpack.c.b16 %v649, %v649
      %v682 = vpack.c.b16 %v650, %v650
      %v683 = vpack.c.b16 %v651, %v651
      %v684 = vpack.c.b16 %v652, %v652
      %v685 = vpack.c.b16 %v653, %v653
      %v686 = vpack.c.b16 %v654, %v654
      %v687 = vpack.c.b16 %v655, %v655
      %v688 = vpack.c.b16 %v656, %v656
      %v689 = vpack.c.b16 %v657, %v657
      %v690 = vpack.c.b16 %v658, %v658
      %v691 = vpack.c.b16 %v659, %v659
      %v692 = vpack.c.b16 %v660, %v660
      %v693 = vpack.c.b16 %v661, %v661
      %v694 = vpack.c.b16 %v662, %v662
      %v695 = vpack.c.b16 %v663, %v663
      %728 = vst [vmem:[%s172] sm:$0xf] %v664
      %729 = vst [vmem:[%s172 + $0x4] sm:$0xf] %v665
      %730 = vst [vmem:[%s172 + $0x8] sm:$0xf] %v666
      %731 = vst [vmem:[%s172 + $0xc] sm:$0xf] %v667
      %732 = vst [vmem:[%s172 + $0x10] sm:$0xf] %v668
      %733 = vst [vmem:[%s172 + $0x14] sm:$0xf] %v669
      %734 = vst [vmem:[%s172 + $0x18] sm:$0xf] %v670
      %735 = vst [vmem:[%s172 + $0x1c] sm:$0xf] %v671
      %736 = vst [vmem:[%s172 + $0x20] sm:$0xf] %v672
      %737 = vst [vmem:[%s172 + $0x24] sm:$0xf] %v673
      %738 = vst [vmem:[%s172 + $0x28] sm:$0xf] %v674
      %739 = vst [vmem:[%s172 + $0x2c] sm:$0xf] %v675
      %740 = vst [vmem:[%s172 + $0x30] sm:$0xf] %v676
      %741 = vst [vmem:[%s172 + $0x34] sm:$0xf] %v677
      %742 = vst [vmem:[%s172 + $0x38] sm:$0xf] %v678
      %743 = vst [vmem:[%s172 + $0x3c] sm:$0xf] %v679
      %744 = vst [vmem:[%s172 + $0x40] sm:$0xf] %v680
      %745 = vst [vmem:[%s172 + $0x44] sm:$0xf] %v681
      %746 = vst [vmem:[%s172 + $0x48] sm:$0xf] %v682
      %747 = vst [vmem:[%s172 + $0x4c] sm:$0xf] %v683
      %748 = vst [vmem:[%s172 + $0x50] sm:$0xf] %v684
      %749 = vst [vmem:[%s172 + $0x54] sm:$0xf] %v685
      %750 = vst [vmem:[%s172 + $0x58] sm:$0xf] %v686
      %751 = vst [vmem:[%s172 + $0x5c] sm:$0xf] %v687
      %752 = vst [vmem:[%s172 + $0x60] sm:$0xf] %v688
      %753 = vst [vmem:[%s172 + $0x64] sm:$0xf] %v689
      %754 = vst [vmem:[%s172 + $0x68] sm:$0xf] %v690
      %755 = vst [vmem:[%s172 + $0x6c] sm:$0xf] %v691
      %756 = vst [vmem:[%s172 + $0x70] sm:$0xf] %v692
      %757 = vst [vmem:[%s172 + $0x74] sm:$0xf] %v693
      %758 = vst [vmem:[%s172 + $0x78] sm:$0xf] %v694
      %759 = vst [vmem:[%s172 + $0x7c] sm:$0xf] %v695
      %s760 = smul.u32 32, %s14
      %p761 = scmp.lt.s32.totalorder %s760, 63
      %s762 = scalar_select %p761, %s760, 63
      %s763 = smul.addr %s762, 4
      %s764 = scalar_lea.vmem %s3, %s763
      // Predicated region
      $region33: #{discriminator_forward.4} parent=31 // pred_check
        %p765 = pneg %p100
      $region34: #{discriminator_forward.4} parent=31 // pred_check_branch
        %767 = sbr.rel (%p765) target = $region36
      $region35: #{discriminator_forward.4} parent=31 // pred_region
        %s768 = smul.u32 32, %s14
      $region36: #{discriminator_forward.4} parent=31 // pred_fallthru
        _
    $region32: #{discriminator_forward.4} parent=5 // pred_fallthru
      _
    %p769 = scmp.le.s32.totalorder 2, %s9
    // Predicated region
    $region37: #{discriminator_forward.4} parent=5 // pred_check
      %p770 = pneg %p769
    $region38: #{discriminator_forward.4} parent=5 // pred_check_branch
      %772 = sbr.rel (%p770) target = $region40
    $region39: #{discriminator_forward.4} parent=5 // pred_region
      %s773 = ssub.s32 %s9, 2
      // Predicated region
      $region41: #{discriminator_forward.4} parent=39 // pred_check
        %p774 = pneg %p106
      $region42: #{discriminator_forward.4} parent=39 // pred_check_branch
        %776 = sbr.rel (%p774) target = $region44
      $region43: #{discriminator_forward.4} parent=39 // pred_region
        %s777 = smul.u32 32, %s15
        %p778 = scmp.lt.s32.totalorder %s777, 63
        %s779 = scalar_select %p778, %s777, 63
        %s780 = smul.addr %s779, 4
        %s781 = scalar_lea.vmem %s3, %s780
      $region44: #{discriminator_forward.4} parent=39 // pred_fallthru
        _
    $region40: #{discriminator_forward.4} parent=5 // pred_fallthru
      _
  $region6: #{discriminator_forward.4} parent=0 // loop_footer
    %s13 = sadd.s32 1, %s9
  $region7: #{discriminator_forward.4} parent=0 // loop_footer_branch
    %8 = sbr.rel target = $region3
  $region8: #{discriminator_forward.4} parent=0 // loop_exit
    _

// kernel: discriminator_forward.5
$region0: #{discriminator_forward.5}
  #allocation0 [shape = 'u32[]', space=smem, size = 0x4, offset = 0x4, fixed_abs, tag = 'smem constant byte address 0x4 - core index']
  #allocation1 [shape = 'u32[144,128]{1,0:T(1,128)}', space=vmem, size = 0x12000, scoped, tag = 'internal scratch']
  %s0 = inlined_call_operand.vmem [shape: bf16[128,1024], index: 0, kind: input, shape index: {}]
  %s1 = inlined_call_operand.vmem [shape: bf16[1024,128], index: 1, kind: input, shape index: {}]
  %s2 = inlined_call_operand.vmem [shape: f32[1,128], index: 2, kind: input, shape index: {}]
  %s3 = inlined_call_operand.vmem [shape: bf16[128,128], index: 3, kind: output, shape index: {}]
  %s4 = sld [smem:[#allocation0]]
  $region45: #{discriminator_forward.5} parent=0
    _
  %s6 = ssub.s32 1, %s4
  %s7 = scalar_select 0, %s6, %s4
  loop: start=0, step=1, limit=4
  $region2: #{discriminator_forward.5} parent=0 // loop_pre_header
    _
  $region3: #{discriminator_forward.5} parent=0 // loop_header
    %s9 = sphi 0, %s13
    %p10 = scmp.ge.s32.totalorder %s9, 4
    %s19 = sphi 0, %s21
    %s22 = sphi 0, %s19
    %s23 = sphi 0, %s22
    %s39 = sphi 0, %s23
    %s43 = sphi 0, %s43
    %s45 = sphi 0, %s43
    %s46 = sphi 0, %s45
    %s60 = sphi 0, %s46
    %s64 = sphi 0, %s64
    %s66 = sphi 0, %s64
    %s67 = sphi 0, %s66
    %s81 = sphi 0, %s67
    %s87 = sphi 0, %s89
    %s90 = sphi 0, %s87
    %s91 = sphi 0, %s90
    %s107 = sphi 0, %s91
  $region4: #{discriminator_forward.5} parent=0 // loop_header_branch
    %12 = sbr.rel (%p10) target = $region8
  $region5: #{discriminator_forward.5} parent=0 // loop_body
    %s14 = ssub.s32 %s9, 1
    %s15 = ssub.s32 %s9, 2
    %s16 = sadd.s32 %s9, 1
    %s17 = ssub.s32 %s9, %s16
    %p18 = scmp.eq.s32.totalorder %s17, 0
    %s20 = sadd.s32 %s19, 1
    %s21 = scalar_select %p18, %s19, %s20
    %p24 = pneg %p18
    %p25 = scmp.eq.s32.totalorder %s9, 1
    %p26 = por %p24, %p25
    %p27 = scmp.ne.s32.totalorder %s19, %s22
    %p28 = scmp.eq.s32.totalorder %s9, 0
    %p29 = por %p27, %p28
    %p30 = scmp.ne.s32.totalorder %s19, %s22
    %p31 = scmp.eq.s32.totalorder %s14, 1
    %p32 = por %p30, %p31
    %p33 = scmp.ne.s32.totalorder %s22, %s23
    %p34 = scmp.eq.s32.totalorder %s14, 0
    %p35 = por %p33, %p34
    %p36 = scmp.ne.s32.totalorder %s22, %s23
    %p37 = scmp.eq.s32.totalorder %s15, 1
    %p38 = por %p36, %p37
    %p40 = scmp.ne.s32.totalorder %s23, %s39
    %p41 = scmp.eq.s32.totalorder %s15, 0
    %p42 = por %p40, %p41
    %s44 = sadd.s32 %s43, 1
    %p47 = scmp.eq.s32.totalorder %s9, 1
    %p48 = scmp.ne.s32.totalorder %s43, %s45
    %p49 = scmp.eq.s32.totalorder %s9, 0
    %p50 = por %p48, %p49
    %p51 = scmp.ne.s32.totalorder %s43, %s45
    %p52 = scmp.eq.s32.totalorder %s14, 1
    %p53 = por %p51, %p52
    %p54 = scmp.ne.s32.totalorder %s45, %s46
    %p55 = scmp.eq.s32.totalorder %s14, 0
    %p56 = por %p54, %p55
    %p57 = scmp.ne.s32.totalorder %s45, %s46
    %p58 = scmp.eq.s32.totalorder %s15, 1
    %p59 = por %p57, %p58
    %p61 = scmp.ne.s32.totalorder %s46, %s60
    %p62 = scmp.eq.s32.totalorder %s15, 0
    %p63 = por %p61, %p62
    %s65 = sadd.s32 %s64, 1
    %p68 = scmp.eq.s32.totalorder %s9, 1
    %p69 = scmp.ne.s32.totalorder %s64, %s66
    %p70 = scmp.eq.s32.totalorder %s9, 0
    %p71 = por %p69, %p70
    %p72 = scmp.ne.s32.totalorder %s64, %s66
    %p73 = scmp.eq.s32.totalorder %s14, 1
    %p74 = por %p72, %p73
    %p75 = scmp.ne.s32.totalorder %s66, %s67
    %p76 = scmp.eq.s32.totalorder %s14, 0
    %p77 = por %p75, %p76
    %p78 = scmp.ne.s32.totalorder %s66, %s67
    %p79 = scmp.eq.s32.totalorder %s15, 1
    %p80 = por %p78, %p79
    %p82 = scmp.ne.s32.totalorder %s67, %s81
    %p83 = scmp.eq.s32.totalorder %s15, 0
    %p84 = por %p82, %p83
    %s85 = ssub.s32 %s9, %s16
    %p86 = scmp.eq.s32.totalorder %s85, 0
    %s88 = sadd.s32 %s87, 1
    %s89 = scalar_select %p86, %s87, %s88
    %p92 = pneg %p86
    %p93 = scmp.eq.s32.totalorder %s9, 1
    %p94 = por %p92, %p93
    %p95 = scmp.ne.s32.totalorder %s87, %s90
    %p96 = scmp.eq.s32.totalorder %s9, 0
    %p97 = por %p95, %p96
    %p98 = scmp.ne.s32.totalorder %s87, %s90
    %p99 = scmp.eq.s32.totalorder %s14, 1
    %p100 = por %p98, %p99
    %p101 = scmp.ne.s32.totalorder %s90, %s91
    %p102 = scmp.eq.s32.totalorder %s14, 0
    %p103 = por %p101, %p102
    %p104 = scmp.ne.s32.totalorder %s90, %s91
    %p105 = scmp.eq.s32.totalorder %s15, 1
    %p106 = por %p104, %p105
    %p108 = scmp.ne.s32.totalorder %s91, %s107
    %p109 = scmp.eq.s32.totalorder %s15, 0
    %p110 = por %p108, %p109
    %p111 = scmp.le.s32.totalorder 1, %s9
    %p112 = scmp.lt.s32.totalorder %s9, 3
    %p113 = pnand %p111, %p112
    %p114 = pneg %p113
    // Predicated region
    $region9: #{discriminator_forward.5} parent=5 // pred_check
      _
    $region10: #{discriminator_forward.5} parent=5 // pred_check_branch
      %116 = sbr.rel (%p113) target = $region12
    $region11: #{discriminator_forward.5} parent=5 // pred_region
      %s117 = ssub.s32 %s9, 1
      // Predicated region
      $region13: #{discriminator_forward.5} parent=11 // pred_check
        %p118 = pneg %p56
      $region14: #{discriminator_forward.5} parent=11 // pred_check_branch
        %120 = sbr.rel (%p118) target = $region16
      $region15: #{discriminator_forward.5} parent=11 // pred_region
        _
      $region16: #{discriminator_forward.5} parent=11 // pred_fallthru
        _
      // Predicated region
      $region17: #{discriminator_forward.5} parent=11 // pred_check
        %p121 = pneg %p77
      $region18: #{discriminator_forward.5} parent=11 // pred_check_branch
        %123 = sbr.rel (%p121) target = $region20
      $region19: #{discriminator_forward.5} parent=11 // pred_region
        _
      $region20: #{discriminator_forward.5} parent=11 // pred_fallthru
        _
    $region12: #{discriminator_forward.5} parent=5 // pred_fallthru
      _
    %p124 = scmp.lt.s32.totalorder %s9, 2
    // Predicated region
    $region21: #{discriminator_forward.5} parent=5 // pred_check
      %p125 = pneg %p124
    $region22: #{discriminator_forward.5} parent=5 // pred_check_branch
      %127 = sbr.rel (%p125) target = $region24
    $region23: #{discriminator_forward.5} parent=5 // pred_region
      // Predicated region
      $region25: #{discriminator_forward.5} parent=23 // pred_check
        %p128 = pneg %p29
      $region26: #{discriminator_forward.5} parent=23 // pred_check_branch
        %130 = sbr.rel (%p128) target = $region28
      $region27: #{discriminator_forward.5} parent=23 // pred_region
        %s131 = smul.u32 8, %s9
        %p132 = scmp.lt.s32.totalorder %s131, 15
        %s133 = scalar_select %p132, %s131, 15
        %s134 = smul.addr %s133, 8
        %s135 = smul.addr %s134, 4
        %s136 = scalar_lea.vmem %s0, %s135
        %s137 = smul.u32 8, %s9
      $region28: #{discriminator_forward.5} parent=23 // pred_fallthru
        _
    $region24: #{discriminator_forward.5} parent=5 // pred_fallthru
      _
    %p138 = scmp.le.s32.totalorder 1, %s9
    %p139 = scmp.lt.s32.totalorder %s9, 3
    %p140 = pnand %p138, %p139
    %p141 = pneg %p140
    // Predicated region
    $region29: #{discriminator_forward.5} parent=5 // pred_check
      _
    $region30: #{discriminator_forward.5} parent=5 // pred_check_branch
      %143 = sbr.rel (%p140) target = $region32
    $region31: #{discriminator_forward.5} parent=5 // pred_region
      %s144 = ssub.s32 %s9, 1
      %s145 = smul.u32 8, %s14
      %p146 = scmp.lt.s32.totalorder %s145, 15
      %s147 = scalar_select %p146, %s145, 15
      %s148 = smul.addr %s147, 8
      %s149 = smul.addr %s148, 4
      %s150 = scalar_lea.vmem %s0, %s149
      %p151 = pneg %p35
      %p152 = pneg %p32
      %p153 = pneg %p56
      %p154 = pneg %p53
      %p155 = pneg %p77
      %p156 = pneg %p74
      %p157 = pneg %p103
      %p158 = pneg %p100
      %s159 = smul.u32 8, %s14
      %p160 = scmp.lt.s32.totalorder %s159, 15
      %s161 = scalar_select %p160, %s159, 15
      %s162 = smul.addr %s161, 4
      %s163 = scalar_lea.vmem %s3, %s162
      %s164 = smul.u32 8, %s14
      %p165 = scmp.lt.s32.totalorder %s164, 15
      %s166 = scalar_select %p165, %s164, 15
      %s167 = smul.addr %s166, 8
      %s168 = smul.addr %s167, 4
      %s169 = scalar_lea.vmem %s0, %s168
      %s170 = smul.u32 8, %s14
      %s171 = smul.u32 8, %s14
      %p172 = scmp.lt.s32.totalorder %s171, 15
      %s173 = scalar_select %p172, %s171, 15
      %s174 = smul.addr %s173, 4
      %s175 = scalar_lea.vmem %s3, %s174
      %s176 = smul.u32 8, %s14
      %v178 = vld [vmem:[%s169] sm:$0xff]
      %v179 = vld [vmem:[%s169 + $0x8] sm:$0xff]
      %v180 = vld [vmem:[%s169 + $0x10] sm:$0xff]
      %v181 = vld [vmem:[%s169 + $0x18] sm:$0xff]
      %v182 = vld [vmem:[%s169 + $0x20] sm:$0xff]
      %v183 = vld [vmem:[%s169 + $0x28] sm:$0xff]
      %v184 = vld [vmem:[%s169 + $0x30] sm:$0xff]
      %v185 = vld [vmem:[%s169 + $0x38] sm:$0xff]
      %v186 = vld [vmem:[%s169 + $0x40] sm:$0xff]
      %v187 = vld [vmem:[%s169 + $0x48] sm:$0xff]
      %v188 = vld [vmem:[%s169 + $0x50] sm:$0xff]
      %v189 = vld [vmem:[%s169 + $0x58] sm:$0xff]
      %v190 = vld [vmem:[%s169 + $0x60] sm:$0xff]
      %v191 = vld [vmem:[%s169 + $0x68] sm:$0xff]
      %v192 = vld [vmem:[%s169 + $0x70] sm:$0xff]
      %v193 = vld [vmem:[%s169 + $0x78] sm:$0xff]
      %v194 = vld [vmem:[%s169 + $0x80] sm:$0xff]
      %v195 = vld [vmem:[%s169 + $0x88] sm:$0xff]
      %v196 = vld [vmem:[%s169 + $0x90] sm:$0xff]
      %v197 = vld [vmem:[%s169 + $0x98] sm:$0xff]
      %v198 = vld [vmem:[%s169 + $0xa0] sm:$0xff]
      %v199 = vld [vmem:[%s169 + $0xa8] sm:$0xff]
      %v200 = vld [vmem:[%s169 + $0xb0] sm:$0xff]
      %v201 = vld [vmem:[%s169 + $0xb8] sm:$0xff]
      %v202 = vld [vmem:[%s169 + $0xc0] sm:$0xff]
      %v203 = vld [vmem:[%s169 + $0xc8] sm:$0xff]
      %v204 = vld [vmem:[%s169 + $0xd0] sm:$0xff]
      %v205 = vld [vmem:[%s169 + $0xd8] sm:$0xff]
      %v206 = vld [vmem:[%s169 + $0xe0] sm:$0xff]
      %v207 = vld [vmem:[%s169 + $0xe8] sm:$0xff]
      %v208 = vld [vmem:[%s169 + $0xf0] sm:$0xff]
      %v209 = vld [vmem:[%s169 + $0xf8] sm:$0xff]
      %v210 = vld [vmem:[%s1] sm:$0xf]
      %v211 = vld [vmem:[%s1 + $0x4] sm:$0xf]
      %v212 = vld [vmem:[%s1 + $0x8] sm:$0xf]
      %v213 = vld [vmem:[%s1 + $0xc] sm:$0xf]
      %v214 = vld [vmem:[%s1 + $0x10] sm:$0xf]
      %v215 = vld [vmem:[%s1 + $0x14] sm:$0xf]
      %v216 = vld [vmem:[%s1 + $0x18] sm:$0xf]
      %v217 = vld [vmem:[%s1 + $0x1c] sm:$0xf]
      %v218 = vld [vmem:[%s1 + $0x20] sm:$0xf]
      %v219 = vld [vmem:[%s1 + $0x24] sm:$0xf]
      %v220 = vld [vmem:[%s1 + $0x28] sm:$0xf]
      %v221 = vld [vmem:[%s1 + $0x2c] sm:$0xf]
      %v222 = vld [vmem:[%s1 + $0x30] sm:$0xf]
      %v223 = vld [vmem:[%s1 + $0x34] sm:$0xf]
      %v224 = vld [vmem:[%s1 + $0x38] sm:$0xf]
      %v225 = vld [vmem:[%s1 + $0x3c] sm:$0xf]
      %v226 = vld [vmem:[%s1 + $0x40] sm:$0xf]
      %v227 = vld [vmem:[%s1 + $0x44] sm:$0xf]
      %v228 = vld [vmem:[%s1 + $0x48] sm:$0xf]
      %v229 = vld [vmem:[%s1 + $0x4c] sm:$0xf]
      %v230 = vld [vmem:[%s1 + $0x50] sm:$0xf]
      %v231 = vld [vmem:[%s1 + $0x54] sm:$0xf]
      %v232 = vld [vmem:[%s1 + $0x58] sm:$0xf]
      %v233 = vld [vmem:[%s1 + $0x5c] sm:$0xf]
      %v234 = vld [vmem:[%s1 + $0x60] sm:$0xf]
      %v235 = vld [vmem:[%s1 + $0x64] sm:$0xf]
      %v236 = vld [vmem:[%s1 + $0x68] sm:$0xf]
      %v237 = vld [vmem:[%s1 + $0x6c] sm:$0xf]
      %v238 = vld [vmem:[%s1 + $0x70] sm:$0xf]
      %v239 = vld [vmem:[%s1 + $0x74] sm:$0xf]
      %v240 = vld [vmem:[%s1 + $0x78] sm:$0xf]
      %v241 = vld [vmem:[%s1 + $0x7c] sm:$0xf]
      %v242 = vld [vmem:[%s1 + $0x80] sm:$0xf]
      %v243 = vld [vmem:[%s1 + $0x84] sm:$0xf]
      %v244 = vld [vmem:[%s1 + $0x88] sm:$0xf]
      %v245 = vld [vmem:[%s1 + $0x8c] sm:$0xf]
      %v246 = vld [vmem:[%s1 + $0x90] sm:$0xf]
      %v247 = vld [vmem:[%s1 + $0x94] sm:$0xf]
      %v248 = vld [vmem:[%s1 + $0x98] sm:$0xf]
      %v249 = vld [vmem:[%s1 + $0x9c] sm:$0xf]
      %v250 = vld [vmem:[%s1 + $0xa0] sm:$0xf]
      %v251 = vld [vmem:[%s1 + $0xa4] sm:$0xf]
      %v252 = vld [vmem:[%s1 + $0xa8] sm:$0xf]
      %v253 = vld [vmem:[%s1 + $0xac] sm:$0xf]
      %v254 = vld [vmem:[%s1 + $0xb0] sm:$0xf]
      %v255 = vld [vmem:[%s1 + $0xb4] sm:$0xf]
      %v256 = vld [vmem:[%s1 + $0xb8] sm:$0xf]
      %v257 = vld [vmem:[%s1 + $0xbc] sm:$0xf]
      %v258 = vld [vmem:[%s1 + $0xc0] sm:$0xf]
      %v259 = vld [vmem:[%s1 + $0xc4] sm:$0xf]
      %v260 = vld [vmem:[%s1 + $0xc8] sm:$0xf]
      %v261 = vld [vmem:[%s1 + $0xcc] sm:$0xf]
      %v262 = vld [vmem:[%s1 + $0xd0] sm:$0xf]
      %v263 = vld [vmem:[%s1 + $0xd4] sm:$0xf]
      %v264 = vld [vmem:[%s1 + $0xd8] sm:$0xf]
      %v265 = vld [vmem:[%s1 + $0xdc] sm:$0xf]
      %v266 = vld [vmem:[%s1 + $0xe0] sm:$0xf]
      %v267 = vld [vmem:[%s1 + $0xe4] sm:$0xf]
      %v268 = vld [vmem:[%s1 + $0xe8] sm:$0xf]
      %v269 = vld [vmem:[%s1 + $0xec] sm:$0xf]
      %v270 = vld [vmem:[%s1 + $0xf0] sm:$0xf]
      %v271 = vld [vmem:[%s1 + $0xf4] sm:$0xf]
      %v272 = vld [vmem:[%s1 + $0xf8] sm:$0xf]
      %v273 = vld [vmem:[%s1 + $0xfc] sm:$0xf]
      %v274 = vld [vmem:[%s1 + $0x100] sm:$0xf]
      %v275 = vld [vmem:[%s1 + $0x104] sm:$0xf]
      %v276 = vld [vmem:[%s1 + $0x108] sm:$0xf]
      %v277 = vld [vmem:[%s1 + $0x10c] sm:$0xf]
      %v278 = vld [vmem:[%s1 + $0x110] sm:$0xf]
      %v279 = vld [vmem:[%s1 + $0x114] sm:$0xf]
      %v280 = vld [vmem:[%s1 + $0x118] sm:$0xf]
      %v281 = vld [vmem:[%s1 + $0x11c] sm:$0xf]
      %v282 = vld [vmem:[%s1 + $0x120] sm:$0xf]
      %v283 = vld [vmem:[%s1 + $0x124] sm:$0xf]
      %v284 = vld [vmem:[%s1 + $0x128] sm:$0xf]
      %v285 = vld [vmem:[%s1 + $0x12c] sm:$0xf]
      %v286 = vld [vmem:[%s1 + $0x130] sm:$0xf]
      %v287 = vld [vmem:[%s1 + $0x134] sm:$0xf]
      %v288 = vld [vmem:[%s1 + $0x138] sm:$0xf]
      %v289 = vld [vmem:[%s1 + $0x13c] sm:$0xf]
      %v290 = vld [vmem:[%s1 + $0x140] sm:$0xf]
      %v291 = vld [vmem:[%s1 + $0x144] sm:$0xf]
      %v292 = vld [vmem:[%s1 + $0x148] sm:$0xf]
      %v293 = vld [vmem:[%s1 + $0x14c] sm:$0xf]
      %v294 = vld [vmem:[%s1 + $0x150] sm:$0xf]
      %v295 = vld [vmem:[%s1 + $0x154] sm:$0xf]
      %v296 = vld [vmem:[%s1 + $0x158] sm:$0xf]
      %v297 = vld [vmem:[%s1 + $0x15c] sm:$0xf]
      %v298 = vld [vmem:[%s1 + $0x160] sm:$0xf]
      %v299 = vld [vmem:[%s1 + $0x164] sm:$0xf]
      %v300 = vld [vmem:[%s1 + $0x168] sm:$0xf]
      %v301 = vld [vmem:[%s1 + $0x16c] sm:$0xf]
      %v302 = vld [vmem:[%s1 + $0x170] sm:$0xf]
      %v303 = vld [vmem:[%s1 + $0x174] sm:$0xf]
      %v304 = vld [vmem:[%s1 + $0x178] sm:$0xf]
      %v305 = vld [vmem:[%s1 + $0x17c] sm:$0xf]
      %v306 = vld [vmem:[%s1 + $0x180] sm:$0xf]
      %v307 = vld [vmem:[%s1 + $0x184] sm:$0xf]
      %v308 = vld [vmem:[%s1 + $0x188] sm:$0xf]
      %v309 = vld [vmem:[%s1 + $0x18c] sm:$0xf]
      %v310 = vld [vmem:[%s1 + $0x190] sm:$0xf]
      %v311 = vld [vmem:[%s1 + $0x194] sm:$0xf]
      %v312 = vld [vmem:[%s1 + $0x198] sm:$0xf]
      %v313 = vld [vmem:[%s1 + $0x19c] sm:$0xf]
      %v314 = vld [vmem:[%s1 + $0x1a0] sm:$0xf]
      %v315 = vld [vmem:[%s1 + $0x1a4] sm:$0xf]
      %v316 = vld [vmem:[%s1 + $0x1a8] sm:$0xf]
      %v317 = vld [vmem:[%s1 + $0x1ac] sm:$0xf]
      %v318 = vld [vmem:[%s1 + $0x1b0] sm:$0xf]
      %v319 = vld [vmem:[%s1 + $0x1b4] sm:$0xf]
      %v320 = vld [vmem:[%s1 + $0x1b8] sm:$0xf]
      %v321 = vld [vmem:[%s1 + $0x1bc] sm:$0xf]
      %v322 = vld [vmem:[%s1 + $0x1c0] sm:$0xf]
      %v323 = vld [vmem:[%s1 + $0x1c4] sm:$0xf]
      %v324 = vld [vmem:[%s1 + $0x1c8] sm:$0xf]
      %v325 = vld [vmem:[%s1 + $0x1cc] sm:$0xf]
      %v326 = vld [vmem:[%s1 + $0x1d0] sm:$0xf]
      %v327 = vld [vmem:[%s1 + $0x1d4] sm:$0xf]
      %v328 = vld [vmem:[%s1 + $0x1d8] sm:$0xf]
      %v329 = vld [vmem:[%s1 + $0x1dc] sm:$0xf]
      %v330 = vld [vmem:[%s1 + $0x1e0] sm:$0xf]
      %v331 = vld [vmem:[%s1 + $0x1e4] sm:$0xf]
      %v332 = vld [vmem:[%s1 + $0x1e8] sm:$0xf]
      %v333 = vld [vmem:[%s1 + $0x1ec] sm:$0xf]
      %v334 = vld [vmem:[%s1 + $0x1f0] sm:$0xf]
      %v335 = vld [vmem:[%s1 + $0x1f4] sm:$0xf]
      %v336 = vld [vmem:[%s1 + $0x1f8] sm:$0xf]
      %v337 = vld [vmem:[%s1 + $0x1fc] sm:$0xf]
      %v338 = vld [vmem:[%s2] sm:$0x1]
      %v340 = vlaneseq
      %v341 = vshrl.u32 %v340, 7
      %v342 = vsub.s32 0, %v341
      %v343 = vrot.slane %v338, %v342
      %v377 = vunpack.c.l.b16 %v178
      %v378 = vunpack.c.h.b16 %v178
      %v379 = vunpack.c.l.b16 %v179
      %v380 = vunpack.c.h.b16 %v179
      %v381 = vunpack.c.l.b16 %v180
      %v382 = vunpack.c.h.b16 %v180
      %v383 = vunpack.c.l.b16 %v181
      %v384 = vunpack.c.h.b16 %v181
      %v385 = vunpack.c.l.b16 %v182
      %v386 = vunpack.c.h.b16 %v182
      %v387 = vunpack.c.l.b16 %v183
      %v388 = vunpack.c.h.b16 %v183
      %v389 = vunpack.c.l.b16 %v184
      %v390 = vunpack.c.h.b16 %v184
      %v391 = vunpack.c.l.b16 %v185
      %v392 = vunpack.c.h.b16 %v185
      %v393 = vunpack.c.l.b16 %v186
      %v394 = vunpack.c.h.b16 %v186
      %v395 = vunpack.c.l.b16 %v187
      %v396 = vunpack.c.h.b16 %v187
      %v397 = vunpack.c.l.b16 %v188
      %v398 = vunpack.c.h.b16 %v188
      %v399 = vunpack.c.l.b16 %v189
      %v400 = vunpack.c.h.b16 %v189
      %v401 = vunpack.c.l.b16 %v190
      %v402 = vunpack.c.h.b16 %v190
      %v403 = vunpack.c.l.b16 %v191
      %v404 = vunpack.c.h.b16 %v191
      %v405 = vunpack.c.l.b16 %v192
      %v406 = vunpack.c.h.b16 %v192
      %v407 = vunpack.c.l.b16 %v193
      %v408 = vunpack.c.h.b16 %v193
      %v409 = vunpack.c.l.b16 %v194
      %v410 = vunpack.c.h.b16 %v194
      %v411 = vunpack.c.l.b16 %v195
      %v412 = vunpack.c.h.b16 %v195
      %v413 = vunpack.c.l.b16 %v196
      %v414 = vunpack.c.h.b16 %v196
      %v415 = vunpack.c.l.b16 %v197
      %v416 = vunpack.c.h.b16 %v197
      %v417 = vunpack.c.l.b16 %v198
      %v418 = vunpack.c.h.b16 %v198
      %v419 = vunpack.c.l.b16 %v199
      %v420 = vunpack.c.h.b16 %v199
      %v421 = vunpack.c.l.b16 %v200
      %v422 = vunpack.c.h.b16 %v200
      %v423 = vunpack.c.l.b16 %v201
      %v424 = vunpack.c.h.b16 %v201
      %v425 = vunpack.c.l.b16 %v202
      %v426 = vunpack.c.h.b16 %v202
      %v427 = vunpack.c.l.b16 %v203
      %v428 = vunpack.c.h.b16 %v203
      %v429 = vunpack.c.l.b16 %v204
      %v430 = vunpack.c.h.b16 %v204
      %v431 = vunpack.c.l.b16 %v205
      %v432 = vunpack.c.h.b16 %v205
      %v433 = vunpack.c.l.b16 %v206
      %v434 = vunpack.c.h.b16 %v206
      %v435 = vunpack.c.l.b16 %v207
      %v436 = vunpack.c.h.b16 %v207
      %v437 = vunpack.c.l.b16 %v208
      %v438 = vunpack.c.h.b16 %v208
      %v439 = vunpack.c.l.b16 %v209
      %v440 = vunpack.c.h.b16 %v209
      %v441 = vpack.c.b16 %v385, %v377
      %v442 = vpack.c.b16 %v386, %v378
      %v443 = vpack.c.b16 %v387, %v379
      %v444 = vpack.c.b16 %v388, %v380
      %v445 = vpack.c.b16 %v389, %v381
      %v446 = vpack.c.b16 %v390, %v382
      %v447 = vpack.c.b16 %v391, %v383
      %v448 = vpack.c.b16 %v392, %v384
      %v449 = vpack.c.b16 %v401, %v393
      %v450 = vpack.c.b16 %v402, %v394
      %v451 = vpack.c.b16 %v403, %v395
      %v452 = vpack.c.b16 %v404, %v396
      %v453 = vpack.c.b16 %v405, %v397
      %v454 = vpack.c.b16 %v406, %v398
      %v455 = vpack.c.b16 %v407, %v399
      %v456 = vpack.c.b16 %v408, %v400
      %v457 = vpack.c.b16 %v417, %v409
      %v458 = vpack.c.b16 %v418, %v410
      %v459 = vpack.c.b16 %v419, %v411
      %v460 = vpack.c.b16 %v420, %v412
      %v461 = vpack.c.b16 %v421, %v413
      %v462 = vpack.c.b16 %v422, %v414
      %v463 = vpack.c.b16 %v423, %v415
      %v464 = vpack.c.b16 %v424, %v416
      %v465 = vpack.c.b16 %v433, %v425
      %v466 = vpack.c.b16 %v434, %v426
      %v467 = vpack.c.b16 %v435, %v427
      %v468 = vpack.c.b16 %v436, %v428
      %v469 = vpack.c.b16 %v437, %v429
      %v470 = vpack.c.b16 %v438, %v430
      %v471 = vpack.c.b16 %v439, %v431
      %v472 = vpack.c.b16 %v440, %v432
      %v633 = vunpack.c.l.b16 %v210
      %v634 = vunpack.c.l.b16 %v211
      %v635 = vunpack.c.l.b16 %v212
      %v636 = vunpack.c.l.b16 %v213
      %v637 = vunpack.c.l.b16 %v214
      %v638 = vunpack.c.l.b16 %v215
      %v639 = vunpack.c.l.b16 %v216
      %v640 = vunpack.c.l.b16 %v217
      %v641 = vunpack.c.l.b16 %v218
      %v642 = vunpack.c.l.b16 %v219
      %v643 = vunpack.c.l.b16 %v220
      %v644 = vunpack.c.l.b16 %v221
      %v645 = vunpack.c.l.b16 %v222
      %v646 = vunpack.c.l.b16 %v223
      %v647 = vunpack.c.l.b16 %v224
      %v648 = vunpack.c.l.b16 %v225
      %v649 = vunpack.c.l.b16 %v226
      %v650 = vunpack.c.l.b16 %v227
      %v651 = vunpack.c.l.b16 %v228
      %v652 = vunpack.c.l.b16 %v229
      %v653 = vunpack.c.l.b16 %v230
      %v654 = vunpack.c.l.b16 %v231
      %v655 = vunpack.c.l.b16 %v232
      %v656 = vunpack.c.l.b16 %v233
      %v657 = vunpack.c.l.b16 %v234
      %v658 = vunpack.c.l.b16 %v235
      %v659 = vunpack.c.l.b16 %v236
      %v660 = vunpack.c.l.b16 %v237
      %v661 = vunpack.c.l.b16 %v238
      %v662 = vunpack.c.l.b16 %v239
      %v663 = vunpack.c.l.b16 %v240
      %v664 = vunpack.c.l.b16 %v241
      %v665 = vunpack.c.l.b16 %v242
      %v666 = vunpack.c.l.b16 %v243
      %v667 = vunpack.c.l.b16 %v244
      %v668 = vunpack.c.l.b16 %v245
      %v669 = vunpack.c.l.b16 %v246
      %v670 = vunpack.c.l.b16 %v247
      %v671 = vunpack.c.l.b16 %v248
      %v672 = vunpack.c.l.b16 %v249
      %v673 = vunpack.c.l.b16 %v250
      %v674 = vunpack.c.l.b16 %v251
      %v675 = vunpack.c.l.b16 %v252
      %v676 = vunpack.c.l.b16 %v253
      %v677 = vunpack.c.l.b16 %v254
      %v678 = vunpack.c.l.b16 %v255
      %v679 = vunpack.c.l.b16 %v256
      %v680 = vunpack.c.l.b16 %v257
      %v681 = vunpack.c.l.b16 %v258
      %v682 = vunpack.c.l.b16 %v259
      %v683 = vunpack.c.l.b16 %v260
      %v684 = vunpack.c.l.b16 %v261
      %v685 = vunpack.c.l.b16 %v262
      %v686 = vunpack.c.l.b16 %v263
      %v687 = vunpack.c.l.b16 %v264
      %v688 = vunpack.c.l.b16 %v265
      %v689 = vunpack.c.l.b16 %v266
      %v690 = vunpack.c.l.b16 %v267
      %v691 = vunpack.c.l.b16 %v268
      %v692 = vunpack.c.l.b16 %v269
      %v693 = vunpack.c.l.b16 %v270
      %v694 = vunpack.c.l.b16 %v271
      %v695 = vunpack.c.l.b16 %v272
      %v696 = vunpack.c.l.b16 %v273
      %v697 = vunpack.c.l.b16 %v274
      %v698 = vunpack.c.l.b16 %v275
      %v699 = vunpack.c.l.b16 %v276
      %v700 = vunpack.c.l.b16 %v277
      %v701 = vunpack.c.l.b16 %v278
      %v702 = vunpack.c.l.b16 %v279
      %v703 = vunpack.c.l.b16 %v280
      %v704 = vunpack.c.l.b16 %v281
      %v705 = vunpack.c.l.b16 %v282
      %v706 = vunpack.c.l.b16 %v283
      %v707 = vunpack.c.l.b16 %v284
      %v708 = vunpack.c.l.b16 %v285
      %v709 = vunpack.c.l.b16 %v286
      %v710 = vunpack.c.l.b16 %v287
      %v711 = vunpack.c.l.b16 %v288
      %v712 = vunpack.c.l.b16 %v289
      %v713 = vunpack.c.l.b16 %v290
      %v714 = vunpack.c.l.b16 %v291
      %v715 = vunpack.c.l.b16 %v292
      %v716 = vunpack.c.l.b16 %v293
      %v717 = vunpack.c.l.b16 %v294
      %v718 = vunpack.c.l.b16 %v295
      %v719 = vunpack.c.l.b16 %v296
      %v720 = vunpack.c.l.b16 %v297
      %v721 = vunpack.c.l.b16 %v298
      %v722 = vunpack.c.l.b16 %v299
      %v723 = vunpack.c.l.b16 %v300
      %v724 = vunpack.c.l.b16 %v301
      %v725 = vunpack.c.l.b16 %v302
      %v726 = vunpack.c.l.b16 %v303
      %v727 = vunpack.c.l.b16 %v304
      %v728 = vunpack.c.l.b16 %v305
      %v729 = vunpack.c.l.b16 %v306
      %v730 = vunpack.c.l.b16 %v307
      %v731 = vunpack.c.l.b16 %v308
      %v732 = vunpack.c.l.b16 %v309
      %v733 = vunpack.c.l.b16 %v310
      %v734 = vunpack.c.l.b16 %v311
      %v735 = vunpack.c.l.b16 %v312
      %v736 = vunpack.c.l.b16 %v313
      %v737 = vunpack.c.l.b16 %v314
      %v738 = vunpack.c.l.b16 %v315
      %v739 = vunpack.c.l.b16 %v316
      %v740 = vunpack.c.l.b16 %v317
      %v741 = vunpack.c.l.b16 %v318
      %v742 = vunpack.c.l.b16 %v319
      %v743 = vunpack.c.l.b16 %v320
      %v744 = vunpack.c.l.b16 %v321
      %v745 = vunpack.c.l.b16 %v322
      %v746 = vunpack.c.l.b16 %v323
      %v747 = vunpack.c.l.b16 %v324
      %v748 = vunpack.c.l.b16 %v325
      %v749 = vunpack.c.l.b16 %v326
      %v750 = vunpack.c.l.b16 %v327
      %v751 = vunpack.c.l.b16 %v328
      %v752 = vunpack.c.l.b16 %v329
      %v753 = vunpack.c.l.b16 %v330
      %v754 = vunpack.c.l.b16 %v331
      %v755 = vunpack.c.l.b16 %v332
      %v756 = vunpack.c.l.b16 %v333
      %v757 = vunpack.c.l.b16 %v334
      %v758 = vunpack.c.l.b16 %v335
      %v759 = vunpack.c.l.b16 %v336
      %v760 = vunpack.c.l.b16 %v337
      %v761 = vpack.c.b16 %v634, %v633
      %v762 = vpack.c.b16 %v636, %v635
      %v763 = vpack.c.b16 %v638, %v637
      %v764 = vpack.c.b16 %v640, %v639
      %v765 = vpack.c.b16 %v642, %v641
      %v766 = vpack.c.b16 %v644, %v643
      %v767 = vpack.c.b16 %v646, %v645
      %v768 = vpack.c.b16 %v648, %v647
      %v769 = vpack.c.b16 %v650, %v649
      %v770 = vpack.c.b16 %v652, %v651
      %v771 = vpack.c.b16 %v654, %v653
      %v772 = vpack.c.b16 %v656, %v655
      %v773 = vpack.c.b16 %v658, %v657
      %v774 = vpack.c.b16 %v660, %v659
      %v775 = vpack.c.b16 %v662, %v661
      %v776 = vpack.c.b16 %v664, %v663
      %v777 = vpack.c.b16 %v666, %v665
      %v778 = vpack.c.b16 %v668, %v667
      %v779 = vpack.c.b16 %v670, %v669
      %v780 = vpack.c.b16 %v672, %v671
      %v781 = vpack.c.b16 %v674, %v673
      %v782 = vpack.c.b16 %v676, %v675
      %v783 = vpack.c.b16 %v678, %v677
      %v784 = vpack.c.b16 %v680, %v679
      %v785 = vpack.c.b16 %v682, %v681
      %v786 = vpack.c.b16 %v684, %v683
      %v787 = vpack.c.b16 %v686, %v685
      %v788 = vpack.c.b16 %v688, %v687
      %v789 = vpack.c.b16 %v690, %v689
      %v790 = vpack.c.b16 %v692, %v691
      %v791 = vpack.c.b16 %v694, %v693
      %v792 = vpack.c.b16 %v696, %v695
      %v793 = vpack.c.b16 %v698, %v697
      %v794 = vpack.c.b16 %v700, %v699
      %v795 = vpack.c.b16 %v702, %v701
      %v796 = vpack.c.b16 %v704, %v703
      %v797 = vpack.c.b16 %v706, %v705
      %v798 = vpack.c.b16 %v708, %v707
      %v799 = vpack.c.b16 %v710, %v709
      %v800 = vpack.c.b16 %v712, %v711
      %v801 = vpack.c.b16 %v714, %v713
      %v802 = vpack.c.b16 %v716, %v715
      %v803 = vpack.c.b16 %v718, %v717
      %v804 = vpack.c.b16 %v720, %v719
      %v805 = vpack.c.b16 %v722, %v721
      %v806 = vpack.c.b16 %v724, %v723
      %v807 = vpack.c.b16 %v726, %v725
      %v808 = vpack.c.b16 %v728, %v727
      %v809 = vpack.c.b16 %v730, %v729
      %v810 = vpack.c.b16 %v732, %v731
      %v811 = vpack.c.b16 %v734, %v733
      %v812 = vpack.c.b16 %v736, %v735
      %v813 = vpack.c.b16 %v738, %v737
      %v814 = vpack.c.b16 %v740, %v739
      %v815 = vpack.c.b16 %v742, %v741
      %v816 = vpack.c.b16 %v744, %v743
      %v817 = vpack.c.b16 %v746, %v745
      %v818 = vpack.c.b16 %v748, %v747
      %v819 = vpack.c.b16 %v750, %v749
      %v820 = vpack.c.b16 %v752, %v751
      %v821 = vpack.c.b16 %v754, %v753
      %v822 = vpack.c.b16 %v756, %v755
      %v823 = vpack.c.b16 %v758, %v757
      %v824 = vpack.c.b16 %v760, %v759
      %889 = vmatprep.subr.bf16.mxu0 0
      %890 = vmatpush1.bf16.msra.mxu0 %v761
      %891 = vmatprep.subr.bf16.mxu0 0
      %892 = vmatpush1.bf16.msra.mxu0 %v762
      %893 = vmatprep.subr.bf16.mxu0 0
      %894 = vmatpush1.bf16.msra.mxu0 %v763
      %895 = vmatprep.subr.bf16.mxu0 0
      %896 = vmatpush1.bf16.msra.mxu0 %v764
      %897 = vmatprep.subr.bf16.mxu0 0
      %898 = vmatpush1.bf16.msra.mxu0 %v765
      %899 = vmatprep.subr.bf16.mxu0 0
      %900 = vmatpush1.bf16.msra.mxu0 %v766
      %901 = vmatprep.subr.bf16.mxu0 0
      %902 = vmatpush1.bf16.msra.mxu0 %v767
      %903 = vmatprep.subr.bf16.mxu0 0
      %904 = vmatpush1.bf16.msra.mxu0 %v768
      %905 = vmatprep.subr.bf16.mxu0 0
      %906 = vmatpush1.bf16.msra.mxu0 %v769
      %907 = vmatprep.subr.bf16.mxu0 0
      %908 = vmatpush1.bf16.msra.mxu0 %v770
      %909 = vmatprep.subr.bf16.mxu0 0
      %910 = vmatpush1.bf16.msra.mxu0 %v771
      %911 = vmatprep.subr.bf16.mxu0 0
      %912 = vmatpush1.bf16.msra.mxu0 %v772
      %913 = vmatprep.subr.bf16.mxu0 0
      %914 = vmatpush1.bf16.msra.mxu0 %v773
      %915 = vmatprep.subr.bf16.mxu0 0
      %916 = vmatpush1.bf16.msra.mxu0 %v774
      %917 = vmatprep.subr.bf16.mxu0 0
      %918 = vmatpush1.bf16.msra.mxu0 %v775
      %919 = vmatprep.subr.bf16.mxu0 0
      %920 = vmatpush1.bf16.msra.mxu0 %v776
      %921 = vmatprep.mubr.bf16.mxu0 %v442
      %922 = vmatmul.mubr.bf16.gmra.mrb[0].mxu0 %v441
      %v923 = vpop.f32.mrb[0].mxu0
      %v924 = vadd.f32 %v343, %v923
      %v925 = vpop.f32.mrb[0].mxu0
      %v926 = vpop.f32.mrb[0].mxu0
      %v927 = vadd.f32 %v343, %v926
      %v928 = vpop.f32.mrb[0].mxu0
      %929 = vmatprep.mubr.bf16.mxu0 %v450
      %930 = vmatmul.mubr.bf16.gmra.mrb[0].mxu0 %v449
      %v931 = vpop.f32.mrb[0].mxu0
      %v932 = vadd.f32 %v343, %v931
      %v933 = vpop.f32.mrb[0].mxu0
      %v934 = vpop.f32.mrb[0].mxu0
      %v935 = vadd.f32 %v343, %v934
      %v936 = vpop.f32.mrb[0].mxu0
      %937 = vmatprep.mubr.bf16.mxu0 %v458
      %938 = vmatmul.mubr.bf16.gmra.mrb[0].mxu0 %v457
      %v939 = vpop.f32.mrb[0].mxu0
      %v940 = vadd.f32 %v343, %v939
      %v941 = vpop.f32.mrb[0].mxu0
      %v942 = vpop.f32.mrb[0].mxu0
      %v943 = vadd.f32 %v343, %v942
      %v944 = vpop.f32.mrb[0].mxu0
      %945 = vmatprep.mubr.bf16.mxu0 %v466
      %946 = vmatmul.mubr.bf16.gmra.mrb[0].mxu0 %v465
      %v947 = vpop.f32.mrb[0].mxu0
      %v948 = vadd.f32 %v343, %v947
      %v949 = vpop.f32.mrb[0].mxu0
      %v950 = vpop.f32.mrb[0].mxu0
      %v951 = vadd.f32 %v343, %v950
      %v952 = vpop.f32.mrb[0].mxu0
      %953 = vdwg.mxu0
      %954 = vmatprep.subr.bf16.mxu0 0
      %955 = vmatpush1.bf16.msra.mxu0 %v777
      %956 = vmatprep.subr.bf16.mxu0 0
      %957 = vmatpush1.bf16.msra.mxu0 %v778
      %958 = vmatprep.subr.bf16.mxu0 0
      %959 = vmatpush1.bf16.msra.mxu0 %v779
      %960 = vmatprep.subr.bf16.mxu0 0
      %961 = vmatpush1.bf16.msra.mxu0 %v780
      %962 = vmatprep.subr.bf16.mxu0 0
      %963 = vmatpush1.bf16.msra.mxu0 %v781
      %964 = vmatprep.subr.bf16.mxu0 0
      %965 = vmatpush1.bf16.msra.mxu0 %v782
      %966 = vmatprep.subr.bf16.mxu0 0
      %967 = vmatpush1.bf16.msra.mxu0 %v783
      %968 = vmatprep.subr.bf16.mxu0 0
      %969 = vmatpush1.bf16.msra.mxu0 %v784
      %970 = vmatprep.subr.bf16.mxu0 0
      %971 = vmatpush1.bf16.msra.mxu0 %v785
      %972 = vmatprep.subr.bf16.mxu0 0
      %973 = vmatpush1.bf16.msra.mxu0 %v786
      %974 = vmatprep.subr.bf16.mxu0 0
      %975 = vmatpush1.bf16.msra.mxu0 %v787
      %976 = vmatprep.subr.bf16.mxu0 0
      %977 = vmatpush1.bf16.msra.mxu0 %v788
      %978 = vmatprep.subr.bf16.mxu0 0
      %979 = vmatpush1.bf16.msra.mxu0 %v789
      %980 = vmatprep.subr.bf16.mxu0 0
      %981 = vmatpush1.bf16.msra.mxu0 %v790
      %982 = vmatprep.subr.bf16.mxu0 0
      %983 = vmatpush1.bf16.msra.mxu0 %v791
      %984 = vmatprep.subr.bf16.mxu0 0
      %985 = vmatpush1.bf16.msra.mxu0 %v792
      %986 = vmatprep.mubr.bf16.mxu0 %v444
      %987 = vmatmul.mubr.bf16.gmra.mrb[0].mxu0 %v443
      %v988 = vpop.f32.mrb[0].mxu0
      %v989 = vadd.f32 %v924, %v988
      %v990 = vpop.f32.mrb[0].mxu0
      %v991 = vpop.f32.mrb[0].mxu0
      %v992 = vadd.f32 %v927, %v991
      %v993 = vpop.f32.mrb[0].mxu0
      %994 = vmatprep.mubr.bf16.mxu0 %v452
      %995 = vmatmul.mubr.bf16.gmra.mrb[0].mxu0 %v451
      %v996 = vpop.f32.mrb[0].mxu0
      %v997 = vadd.f32 %v932, %v996
      %v998 = vpop.f32.mrb[0].mxu0
      %v999 = vpop.f32.mrb[0].mxu0
      %v1000 = vadd.f32 %v935, %v999
      %v1001 = vpop.f32.mrb[0].mxu0
      %1002 = vmatprep.mubr.bf16.mxu0 %v460
      %1003 = vmatmul.mubr.bf16.gmra.mrb[0].mxu0 %v459
      %v1004 = vpop.f32.mrb[0].mxu0
      %v1005 = vadd.f32 %v940, %v1004
      %v1006 = vpop.f32.mrb[0].mxu0
      %v1007 = vpop.f32.mrb[0].mxu0
      %v1008 = vadd.f32 %v943, %v1007
      %v1009 = vpop.f32.mrb[0].mxu0
      %1010 = vmatprep.mubr.bf16.mxu0 %v468
      %1011 = vmatmul.mubr.bf16.gmra.mrb[0].mxu0 %v467
      %v1012 = vpop.f32.mrb[0].mxu0
      %v1013 = vadd.f32 %v948, %v1012
      %v1014 = vpop.f32.mrb[0].mxu0
      %v1015 = vpop.f32.mrb[0].mxu0
      %v1016 = vadd.f32 %v951, %v1015
      %v1017 = vpop.f32.mrb[0].mxu0
      %1018 = vdwg.mxu0
      %1019 = vmatprep.subr.bf16.mxu0 0
      %1020 = vmatpush1.bf16.msra.mxu0 %v793
      %1021 = vmatprep.subr.bf16.mxu0 0
      %1022 = vmatpush1.bf16.msra.mxu0 %v794
      %1023 = vmatprep.subr.bf16.mxu0 0
      %1024 = vmatpush1.bf16.msra.mxu0 %v795
      %1025 = vmatprep.subr.bf16.mxu0 0
      %1026 = vmatpush1.bf16.msra.mxu0 %v796
      %1027 = vmatprep.subr.bf16.mxu0 0
      %1028 = vmatpush1.bf16.msra.mxu0 %v797
      %1029 = vmatprep.subr.bf16.mxu0 0
      %1030 = vmatpush1.bf16.msra.mxu0 %v798
      %1031 = vmatprep.subr.bf16.mxu0 0
      %1032 = vmatpush1.bf16.msra.mxu0 %v799
      %1033 = vmatprep.subr.bf16.mxu0 0
      %1034 = vmatpush1.bf16.msra.mxu0 %v800
      %1035 = vmatprep.subr.bf16.mxu0 0
      %1036 = vmatpush1.bf16.msra.mxu0 %v801
      %1037 = vmatprep.subr.bf16.mxu0 0
      %1038 = vmatpush1.bf16.msra.mxu0 %v802
      %1039 = vmatprep.subr.bf16.mxu0 0
      %1040 = vmatpush1.bf16.msra.mxu0 %v803
      %1041 = vmatprep.subr.bf16.mxu0 0
      %1042 = vmatpush1.bf16.msra.mxu0 %v804
      %1043 = vmatprep.subr.bf16.mxu0 0
      %1044 = vmatpush1.bf16.msra.mxu0 %v805
      %1045 = vmatprep.subr.bf16.mxu0 0
      %1046 = vmatpush1.bf16.msra.mxu0 %v806
      %1047 = vmatprep.subr.bf16.mxu0 0
      %1048 = vmatpush1.bf16.msra.mxu0 %v807
      %1049 = vmatprep.subr.bf16.mxu0 0
      %1050 = vmatpush1.bf16.msra.mxu0 %v808
      %1051 = vmatprep.mubr.bf16.mxu0 %v446
      %1052 = vmatmul.mubr.bf16.gmra.mrb[0].mxu0 %v445
      %v1053 = vpop.f32.mrb[0].mxu0
      %v1054 = vadd.f32 %v989, %v1053
      %v1055 = vpop.f32.mrb[0].mxu0
      %v1056 = vpop.f32.mrb[0].mxu0
      %v1057 = vadd.f32 %v992, %v1056
      %v1058 = vpop.f32.mrb[0].mxu0
      %1059 = vmatprep.mubr.bf16.mxu0 %v454
      %1060 = vmatmul.mubr.bf16.gmra.mrb[0].mxu0 %v453
      %v1061 = vpop.f32.mrb[0].mxu0
      %v1062 = vadd.f32 %v997, %v1061
      %v1063 = vpop.f32.mrb[0].mxu0
      %v1064 = vpop.f32.mrb[0].mxu0
      %v1065 = vadd.f32 %v1000, %v1064
      %v1066 = vpop.f32.mrb[0].mxu0
      %1067 = vmatprep.mubr.bf16.mxu0 %v462
      %1068 = vmatmul.mubr.bf16.gmra.mrb[0].mxu0 %v461
      %v1069 = vpop.f32.mrb[0].mxu0
      %v1070 = vadd.f32 %v1005, %v1069
      %v1071 = vpop.f32.mrb[0].mxu0
      %v1072 = vpop.f32.mrb[0].mxu0
      %v1073 = vadd.f32 %v1008, %v1072
      %v1074 = vpop.f32.mrb[0].mxu0
      %1075 = vmatprep.mubr.bf16.mxu0 %v470
      %1076 = vmatmul.mubr.bf16.gmra.mrb[0].mxu0 %v469
      %v1077 = vpop.f32.mrb[0].mxu0
      %v1078 = vadd.f32 %v1013, %v1077
      %v1079 = vpop.f32.mrb[0].mxu0
      %v1080 = vpop.f32.mrb[0].mxu0
      %v1081 = vadd.f32 %v1016, %v1080
      %v1082 = vpop.f32.mrb[0].mxu0
      %1083 = vdwg.mxu0
      %1084 = vmatprep.subr.bf16.mxu0 0
      %1085 = vmatpush1.bf16.msra.mxu0 %v809
      %1086 = vmatprep.subr.bf16.mxu0 0
      %1087 = vmatpush1.bf16.msra.mxu0 %v810
      %1088 = vmatprep.subr.bf16.mxu0 0
      %1089 = vmatpush1.bf16.msra.mxu0 %v811
      %1090 = vmatprep.subr.bf16.mxu0 0
      %1091 = vmatpush1.bf16.msra.mxu0 %v812
      %1092 = vmatprep.subr.bf16.mxu0 0
      %1093 = vmatpush1.bf16.msra.mxu0 %v813
      %1094 = vmatprep.subr.bf16.mxu0 0
      %1095 = vmatpush1.bf16.msra.mxu0 %v814
      %1096 = vmatprep.subr.bf16.mxu0 0
      %1097 = vmatpush1.bf16.msra.mxu0 %v815
      %1098 = vmatprep.subr.bf16.mxu0 0
      %1099 = vmatpush1.bf16.msra.mxu0 %v816
      %1100 = vmatprep.subr.bf16.mxu0 0
      %1101 = vmatpush1.bf16.msra.mxu0 %v817
      %1102 = vmatprep.subr.bf16.mxu0 0
      %1103 = vmatpush1.bf16.msra.mxu0 %v818
      %1104 = vmatprep.subr.bf16.mxu0 0
      %1105 = vmatpush1.bf16.msra.mxu0 %v819
      %1106 = vmatprep.subr.bf16.mxu0 0
      %1107 = vmatpush1.bf16.msra.mxu0 %v820
      %1108 = vmatprep.subr.bf16.mxu0 0
      %1109 = vmatpush1.bf16.msra.mxu0 %v821
      %1110 = vmatprep.subr.bf16.mxu0 0
      %1111 = vmatpush1.bf16.msra.mxu0 %v822
      %1112 = vmatprep.subr.bf16.mxu0 0
      %1113 = vmatpush1.bf16.msra.mxu0 %v823
      %1114 = vmatprep.subr.bf16.mxu0 0
      %1115 = vmatpush1.bf16.msra.mxu0 %v824
      %1116 = vmatprep.mubr.bf16.mxu0 %v448
      %1117 = vmatmul.mubr.bf16.gmra.mrb[0].mxu0 %v447
      %v1118 = vpop.f32.mrb[0].mxu0
      %v1119 = vadd.f32 %v1054, %v1118
      %v1120 = vpop.f32.mrb[0].mxu0
      %v1121 = vpop.f32.mrb[0].mxu0
      %v1122 = vadd.f32 %v1057, %v1121
      %v1123 = vpop.f32.mrb[0].mxu0
      %1124 = vmatprep.mubr.bf16.mxu0 %v456
      %1125 = vmatmul.mubr.bf16.gmra.mrb[0].mxu0 %v455
      %v1126 = vpop.f32.mrb[0].mxu0
      %v1127 = vadd.f32 %v1062, %v1126
      %v1128 = vpop.f32.mrb[0].mxu0
      %v1129 = vpop.f32.mrb[0].mxu0
      %v1130 = vadd.f32 %v1065, %v1129
      %v1131 = vpop.f32.mrb[0].mxu0
      %1132 = vmatprep.mubr.bf16.mxu0 %v464
      %1133 = vmatmul.mubr.bf16.gmra.mrb[0].mxu0 %v463
      %v1134 = vpop.f32.mrb[0].mxu0
      %v1135 = vadd.f32 %v1070, %v1134
      %v1136 = vpop.f32.mrb[0].mxu0
      %v1137 = vpop.f32.mrb[0].mxu0
      %v1138 = vadd.f32 %v1073, %v1137
      %v1139 = vpop.f32.mrb[0].mxu0
      %1140 = vmatprep.mubr.bf16.mxu0 %v472
      %1141 = vmatmul.mubr.bf16.gmra.mrb[0].mxu0 %v471
      %v1142 = vpop.f32.mrb[0].mxu0
      %v1143 = vadd.f32 %v1078, %v1142
      %v1144 = vpop.f32.mrb[0].mxu0
      %v1145 = vpop.f32.mrb[0].mxu0
      %v1146 = vadd.f32 %v1081, %v1145
      %v1147 = vpop.f32.mrb[0].mxu0
      %1148 = vdwg.mxu0
      %v1149 = vmul.f32 %v1119, 0.2
      %v1150 = vmul.f32 %v1122, 0.2
      %v1151 = vmul.f32 %v1127, 0.2
      %v1152 = vmul.f32 %v1130, 0.2
      %v1153 = vmul.f32 %v1135, 0.2
      %v1154 = vmul.f32 %v1138, 0.2
      %v1155 = vmul.f32 %v1143, 0.2
      %v1156 = vmul.f32 %v1146, 0.2
      %v1157 = vmax.f32 %v1119, %v1149
      %v1158 = vmax.f32 %v1122, %v1150
      %v1159 = vmax.f32 %v1127, %v1151
      %v1160 = vmax.f32 %v1130, %v1152
      %v1161 = vmax.f32 %v1135, %v1153
      %v1162 = vmax.f32 %v1138, %v1154
      %v1163 = vmax.f32 %v1143, %v1155
      %v1164 = vmax.f32 %v1146, %v1156
      %v1165 = vpack.c.bf16 %v1158, %v1157
      %v1166 = vpack.c.bf16 %v1160, %v1159
      %v1167 = vpack.c.bf16 %v1162, %v1161
      %v1168 = vpack.c.bf16 %v1164, %v1163
      %v1173 = vunpack.c.l.b16 %v1165
      %v1174 = vunpack.c.h.b16 %v1165
      %v1175 = vunpack.c.l.b16 %v1166
      %v1176 = vunpack.c.h.b16 %v1166
      %v1177 = vunpack.c.l.b16 %v1167
      %v1178 = vunpack.c.h.b16 %v1167
      %v1179 = vunpack.c.l.b16 %v1168
      %v1180 = vunpack.c.h.b16 %v1168
      %v1181 = vpack.c.b16 %v1173, %v1173
      %v1182 = vpack.c.b16 %v1174, %v1174
      %v1183 = vpack.c.b16 %v1175, %v1175
      %v1184 = vpack.c.b16 %v1176, %v1176
      %v1185 = vpack.c.b16 %v1177, %v1177
      %v1186 = vpack.c.b16 %v1178, %v1178
      %v1187 = vpack.c.b16 %v1179, %v1179
      %v1188 = vpack.c.b16 %v1180, %v1180
      %1197 = vst [vmem:[%s175] sm:$0xf] %v1181
      %1198 = vst [vmem:[%s175 + $0x4] sm:$0xf] %v1182
      %1199 = vst [vmem:[%s175 + $0x8] sm:$0xf] %v1183
      %1200 = vst [vmem:[%s175 + $0xc] sm:$0xf] %v1184
      %1201 = vst [vmem:[%s175 + $0x10] sm:$0xf] %v1185
      %1202 = vst [vmem:[%s175 + $0x14] sm:$0xf] %v1186
      %1203 = vst [vmem:[%s175 + $0x18] sm:$0xf] %v1187
      %1204 = vst [vmem:[%s175 + $0x1c] sm:$0xf] %v1188
      %s1205 = smul.u32 8, %s14
      %p1206 = scmp.lt.s32.totalorder %s1205, 15
      %s1207 = scalar_select %p1206, %s1205, 15
      %s1208 = smul.addr %s1207, 4
      %s1209 = scalar_lea.vmem %s3, %s1208
      // Predicated region
      $region33: #{discriminator_forward.5} parent=31 // pred_check
        %p1210 = pneg %p100
      $region34: #{discriminator_forward.5} parent=31 // pred_check_branch
        %1212 = sbr.rel (%p1210) target = $region36
      $region35: #{discriminator_forward.5} parent=31 // pred_region
        %s1213 = smul.u32 8, %s14
      $region36: #{discriminator_forward.5} parent=31 // pred_fallthru
        _
    $region32: #{discriminator_forward.5} parent=5 // pred_fallthru
      _
    %p1214 = scmp.le.s32.totalorder 2, %s9
    // Predicated region
    $region37: #{discriminator_forward.5} parent=5 // pred_check
      %p1215 = pneg %p1214
    $region38: #{discriminator_forward.5} parent=5 // pred_check_branch
      %1217 = sbr.rel (%p1215) target = $region40
    $region39: #{discriminator_forward.5} parent=5 // pred_region
      %s1218 = ssub.s32 %s9, 2
      // Predicated region
      $region41: #{discriminator_forward.5} parent=39 // pred_check
        %p1219 = pneg %p106
      $region42: #{discriminator_forward.5} parent=39 // pred_check_branch
        %1221 = sbr.rel (%p1219) target = $region44
      $region43: #{discriminator_forward.5} parent=39 // pred_region
        %s1222 = smul.u32 8, %s15
        %p1223 = scmp.lt.s32.totalorder %s1222, 15
        %s1224 = scalar_select %p1223, %s1222, 15
        %s1225 = smul.addr %s1224, 4
        %s1226 = scalar_lea.vmem %s3, %s1225
      $region44: #{discriminator_forward.5} parent=39 // pred_fallthru
        _
    $region40: #{discriminator_forward.5} parent=5 // pred_fallthru
      _
  $region6: #{discriminator_forward.5} parent=0 // loop_footer
    %s13 = sadd.s32 1, %s9
  $region7: #{discriminator_forward.5} parent=0 // loop_footer_branch
    %8 = sbr.rel target = $region3
  $region8: #{discriminator_forward.5} parent=0 // loop_exit
    _

// kernel: discriminator_forward.7
$region0: #{discriminator_forward.7}
  #allocation0 [shape = 'u32[]', space=smem, size = 0x4, offset = 0x4, fixed_abs, tag = 'smem constant byte address 0x4 - core index']
  #allocation1 [shape = 'u32[144,128]{1,0:T(1,128)}', space=vmem, size = 0x12000, scoped, tag = 'internal scratch']
  #allocation2 [shape = 'f32[1,1]{1,0:T(1,128)S(1)}', space=vmem, size = 0x200, scoped, tag = 'scoped memory for discriminator_forward.7']
  %s0 = inlined_call_operand.vmem [shape: bf16[16,4096], index: 0, kind: input, shape index: {}]
  %s1 = inlined_call_operand.vmem [shape: bf16[1,4096], index: 1, kind: input, shape index: {}]
  %s2 = inlined_call_operand.<no memory space> [shape: f32[1,1], index: 2, kind: input, shape index: {}]
  %s3 = inlined_call_operand.vmem [shape: f32[16,1], index: 3, kind: output, shape index: {}]
  %s4 = sld [smem:[#allocation0]]
  $region22: #{discriminator_forward.7} parent=0
    _
  %s6 = ssub.s32 1, %s4
  %s7 = scalar_select 0, %s6, %s4
  %v8 = vstv %s2
  %9 = vst [vmem:[#allocation2] sm:$0x1] %v8
  // Predicated region
  $region2: #{discriminator_forward.7} parent=0 // pred_check
    _
  $region3: #{discriminator_forward.7} parent=0 // pred_check_branch
    %11 = sbr.rel (0) target = $region5
  $region4: #{discriminator_forward.7} parent=0 // pred_region
    _
  $region5: #{discriminator_forward.7} parent=0 // pred_fallthru
    _
  // Predicated region
  $region6: #{discriminator_forward.7} parent=0 // pred_check
    _
  $region7: #{discriminator_forward.7} parent=0 // pred_check_branch
    %13 = sbr.rel (0) target = $region9
  $region8: #{discriminator_forward.7} parent=0 // pred_region
    _
  $region9: #{discriminator_forward.7} parent=0 // pred_fallthru
    _
  // Predicated region
  $region10: #{discriminator_forward.7} parent=0 // pred_check
    _
  $region11: #{discriminator_forward.7} parent=0 // pred_check_branch
    %15 = sbr.rel (0) target = $region13
  $region12: #{discriminator_forward.7} parent=0 // pred_region
    _
  $region13: #{discriminator_forward.7} parent=0 // pred_fallthru
    _
  %v16 = vld [vmem:[%s0] sm:$0xff]
  %v17 = vld [vmem:[%s0 + $0x8] sm:$0xff]
  %v18 = vld [vmem:[%s0 + $0x10] sm:$0xff]
  %v19 = vld [vmem:[%s0 + $0x18] sm:$0xff]
  %v20 = vld [vmem:[%s0 + $0x20] sm:$0xff]
  %v21 = vld [vmem:[%s0 + $0x28] sm:$0xff]
  %v22 = vld [vmem:[%s0 + $0x30] sm:$0xff]
  %v23 = vld [vmem:[%s0 + $0x38] sm:$0xff]
  %v24 = vld [vmem:[%s0 + $0x40] sm:$0xff]
  %v25 = vld [vmem:[%s0 + $0x48] sm:$0xff]
  %v26 = vld [vmem:[%s0 + $0x50] sm:$0xff]
  %v27 = vld [vmem:[%s0 + $0x58] sm:$0xff]
  %v28 = vld [vmem:[%s0 + $0x60] sm:$0xff]
  %v29 = vld [vmem:[%s0 + $0x68] sm:$0xff]
  %v30 = vld [vmem:[%s0 + $0x70] sm:$0xff]
  %v31 = vld [vmem:[%s0 + $0x78] sm:$0xff]
  %v32 = vld [vmem:[%s0 + $0x80] sm:$0xff]
  %v33 = vld [vmem:[%s0 + $0x88] sm:$0xff]
  %v34 = vld [vmem:[%s0 + $0x90] sm:$0xff]
  %v35 = vld [vmem:[%s0 + $0x98] sm:$0xff]
  %v36 = vld [vmem:[%s0 + $0xa0] sm:$0xff]
  %v37 = vld [vmem:[%s0 + $0xa8] sm:$0xff]
  %v38 = vld [vmem:[%s0 + $0xb0] sm:$0xff]
  %v39 = vld [vmem:[%s0 + $0xb8] sm:$0xff]
  %v40 = vld [vmem:[%s0 + $0xc0] sm:$0xff]
  %v41 = vld [vmem:[%s0 + $0xc8] sm:$0xff]
  %v42 = vld [vmem:[%s0 + $0xd0] sm:$0xff]
  %v43 = vld [vmem:[%s0 + $0xd8] sm:$0xff]
  %v44 = vld [vmem:[%s0 + $0xe0] sm:$0xff]
  %v45 = vld [vmem:[%s0 + $0xe8] sm:$0xff]
  %v46 = vld [vmem:[%s0 + $0xf0] sm:$0xff]
  %v47 = vld [vmem:[%s0 + $0xf8] sm:$0xff]
  %v48 = vld [vmem:[%s1] sm:$0xff]
  %v49 = vld [vmem:[%s1 + $0x8] sm:$0xff]
  %v50 = vld [vmem:[%s1 + $0x10] sm:$0xff]
  %v51 = vld [vmem:[%s1 + $0x18] sm:$0xff]
  %v56 = vcombine.high %v48, %v48
  %v58 = vunpack.c.l.s4 1966171168
  %v59 = vunpack.c.0.s8 %v58
  %v60 = vlaneseq
  %v61 = vshrl.u32 %v60, 7
  %v62 = vsub.s32 %v59, %v61
  %v63 = vrot.slane %v48, %v62
  %v65 = vunpack.c.l.s4 1966171168
  %v66 = vunpack.c.0.s8 %v65
  %v67 = vlaneseq
  %v68 = vshrl.u32 %v67, 7
  %v69 = vsub.s32 %v66, %v68
  %v70 = vrot.slane %v56, %v69
  %v71 = vcombine.high %v63, %v63
  %v72 = vcombine.high %v70, %v70
  %v74 = vunpack.c.l.s4 1966171168
  %v75 = vunpack.c.0.s8 %v74
  %v76 = vlaneseq
  %v77 = vshrl.u32 %v76, 7
  %v78 = vsub.s32 %v75, %v77
  %v79 = vrot.slane %v63, %v78
  %v81 = vunpack.c.l.s4 1966171168
  %v82 = vunpack.c.0.s8 %v81
  %v83 = vlaneseq
  %v84 = vshrl.u32 %v83, 7
  %v85 = vsub.s32 %v82, %v84
  %v86 = vrot.slane %v70, %v85
  %v88 = vunpack.c.l.s4 1966171168
  %v89 = vunpack.c.0.s8 %v88
  %v90 = vlaneseq
  %v91 = vshrl.u32 %v90, 7
  %v92 = vsub.s32 %v89, %v91
  %v93 = vrot.slane %v71, %v92
  %v95 = vunpack.c.l.s4 1966171168
  %v96 = vunpack.c.0.s8 %v95
  %v97 = vlaneseq
  %v98 = vshrl.u32 %v97, 7
  %v99 = vsub.s32 %v96, %v98
  %v100 = vrot.slane %v72, %v99
  %v101 = vcombine.high %v79, %v79
  %v102 = vcombine.high %v86, %v86
  %v103 = vcombine.high %v93, %v93
  %v104 = vcombine.high %v100, %v100
  %v105 = vcombine.high %v49, %v49
  %v107 = vunpack.c.l.s4 1966171168
  %v108 = vunpack.c.0.s8 %v107
  %v109 = vlaneseq
  %v110 = vshrl.u32 %v109, 7
  %v111 = vsub.s32 %v108, %v110
  %v112 = vrot.slane %v49, %v111
  %v114 = vunpack.c.l.s4 1966171168
  %v115 = vunpack.c.0.s8 %v114
  %v116 = vlaneseq
  %v117 = vshrl.u32 %v116, 7
  %v118 = vsub.s32 %v115, %v117
  %v119 = vrot.slane %v105, %v118
  %v120 = vcombine.high %v112, %v112
  %v121 = vcombine.high %v119, %v119
  %v123 = vunpack.c.l.s4 1966171168
  %v124 = vunpack.c.0.s8 %v123
  %v125 = vlaneseq
  %v126 = vshrl.u32 %v125, 7
  %v127 = vsub.s32 %v124, %v126
  %v128 = vrot.slane %v112, %v127
  %v130 = vunpack.c.l.s4 1966171168
  %v131 = vunpack.c.0.s8 %v130
  %v132 = vlaneseq
  %v133 = vshrl.u32 %v132, 7
  %v134 = vsub.s32 %v131, %v133
  %v135 = vrot.slane %v119, %v134
  %v137 = vunpack.c.l.s4 1966171168
  %v138 = vunpack.c.0.s8 %v137
  %v139 = vlaneseq
  %v140 = vshrl.u32 %v139, 7
  %v141 = vsub.s32 %v138, %v140
  %v142 = vrot.slane %v120, %v141
  %v144 = vunpack.c.l.s4 1966171168
  %v145 = vunpack.c.0.s8 %v144
  %v146 = vlaneseq
  %v147 = vshrl.u32 %v146, 7
  %v148 = vsub.s32 %v145, %v147
  %v149 = vrot.slane %v121, %v148
  %v150 = vcombine.high %v128, %v128
  %v151 = vcombine.high %v135, %v135
  %v152 = vcombine.high %v142, %v142
  %v153 = vcombine.high %v149, %v149
  %v154 = vcombine.high %v50, %v50
  %v156 = vunpack.c.l.s4 1966171168
  %v157 = vunpack.c.0.s8 %v156
  %v158 = vlaneseq
  %v159 = vshrl.u32 %v158, 7
  %v160 = vsub.s32 %v157, %v159
  %v161 = vrot.slane %v50, %v160
  %v163 = vunpack.c.l.s4 1966171168
  %v164 = vunpack.c.0.s8 %v163
  %v165 = vlaneseq
  %v166 = vshrl.u32 %v165, 7
  %v167 = vsub.s32 %v164, %v166
  %v168 = vrot.slane %v154, %v167
  %v169 = vcombine.high %v161, %v161
  %v170 = vcombine.high %v168, %v168
  %v172 = vunpack.c.l.s4 1966171168
  %v173 = vunpack.c.0.s8 %v172
  %v174 = vlaneseq
  %v175 = vshrl.u32 %v174, 7
  %v176 = vsub.s32 %v173, %v175
  %v177 = vrot.slane %v161, %v176
  %v179 = vunpack.c.l.s4 1966171168
  %v180 = vunpack.c.0.s8 %v179
  %v181 = vlaneseq
  %v182 = vshrl.u32 %v181, 7
  %v183 = vsub.s32 %v180, %v182
  %v184 = vrot.slane %v168, %v183
  %v186 = vunpack.c.l.s4 1966171168
  %v187 = vunpack.c.0.s8 %v186
  %v188 = vlaneseq
  %v189 = vshrl.u32 %v188, 7
  %v190 = vsub.s32 %v187, %v189
  %v191 = vrot.slane %v169, %v190
  %v193 = vunpack.c.l.s4 1966171168
  %v194 = vunpack.c.0.s8 %v193
  %v195 = vlaneseq
  %v196 = vshrl.u32 %v195, 7
  %v197 = vsub.s32 %v194, %v196
  %v198 = vrot.slane %v170, %v197
  %v199 = vcombine.high %v177, %v177
  %v200 = vcombine.high %v184, %v184
  %v201 = vcombine.high %v191, %v191
  %v202 = vcombine.high %v198, %v198
  %v203 = vcombine.high %v51, %v51
  %v205 = vunpack.c.l.s4 1966171168
  %v206 = vunpack.c.0.s8 %v205
  %v207 = vlaneseq
  %v208 = vshrl.u32 %v207, 7
  %v209 = vsub.s32 %v206, %v208
  %v210 = vrot.slane %v51, %v209
  %v212 = vunpack.c.l.s4 1966171168
  %v213 = vunpack.c.0.s8 %v212
  %v214 = vlaneseq
  %v215 = vshrl.u32 %v214, 7
  %v216 = vsub.s32 %v213, %v215
  %v217 = vrot.slane %v203, %v216
  %v218 = vcombine.high %v210, %v210
  %v219 = vcombine.high %v217, %v217
  %v221 = vunpack.c.l.s4 1966171168
  %v222 = vunpack.c.0.s8 %v221
  %v223 = vlaneseq
  %v224 = vshrl.u32 %v223, 7
  %v225 = vsub.s32 %v222, %v224
  %v226 = vrot.slane %v210, %v225
  %v228 = vunpack.c.l.s4 1966171168
  %v229 = vunpack.c.0.s8 %v228
  %v230 = vlaneseq
  %v231 = vshrl.u32 %v230, 7
  %v232 = vsub.s32 %v229, %v231
  %v233 = vrot.slane %v217, %v232
  %v235 = vunpack.c.l.s4 1966171168
  %v236 = vunpack.c.0.s8 %v235
  %v237 = vlaneseq
  %v238 = vshrl.u32 %v237, 7
  %v239 = vsub.s32 %v236, %v238
  %v240 = vrot.slane %v218, %v239
  %v242 = vunpack.c.l.s4 1966171168
  %v243 = vunpack.c.0.s8 %v242
  %v244 = vlaneseq
  %v245 = vshrl.u32 %v244, 7
  %v246 = vsub.s32 %v243, %v245
  %v247 = vrot.slane %v219, %v246
  %v248 = vcombine.high %v226, %v226
  %v249 = vcombine.high %v233, %v233
  %v250 = vcombine.high %v240, %v240
  %v251 = vcombine.high %v247, %v247
  %v253 = vpack.i.b16 %v79, %v79
  %v255 = vlaneseq
  %v256 = vshrl.u32 %v255, 7
  %v257 = vsub.s32 0, %v256
  %v258 = vrot.slane %v253, %v257
  %v260 = vpack.i.b16 %v93, %v93
  %v262 = vlaneseq
  %v263 = vshrl.u32 %v262, 7
  %v264 = vsub.s32 0, %v263
  %v265 = vrot.slane %v260, %v264
  %v267 = vpack.i.b16 %v101, %v101
  %v269 = vlaneseq
  %v270 = vshrl.u32 %v269, 7
  %v271 = vsub.s32 0, %v270
  %v272 = vrot.slane %v267, %v271
  %v274 = vpack.i.b16 %v103, %v103
  %v276 = vlaneseq
  %v277 = vshrl.u32 %v276, 7
  %v278 = vsub.s32 0, %v277
  %v279 = vrot.slane %v274, %v278
  %v281 = vpack.i.b16 %v86, %v86
  %v283 = vlaneseq
  %v284 = vshrl.u32 %v283, 7
  %v285 = vsub.s32 0, %v284
  %v286 = vrot.slane %v281, %v285
  %v288 = vpack.i.b16 %v100, %v100
  %v290 = vlaneseq
  %v291 = vshrl.u32 %v290, 7
  %v292 = vsub.s32 0, %v291
  %v293 = vrot.slane %v288, %v292
  %v295 = vpack.i.b16 %v102, %v102
  %v297 = vlaneseq
  %v298 = vshrl.u32 %v297, 7
  %v299 = vsub.s32 0, %v298
  %v300 = vrot.slane %v295, %v299
  %v302 = vpack.i.b16 %v104, %v104
  %v304 = vlaneseq
  %v305 = vshrl.u32 %v304, 7
  %v306 = vsub.s32 0, %v305
  %v307 = vrot.slane %v302, %v306
  %v309 = vpack.i.b16 %v128, %v128
  %v311 = vlaneseq
  %v312 = vshrl.u32 %v311, 7
  %v313 = vsub.s32 0, %v312
  %v314 = vrot.slane %v309, %v313
  %v316 = vpack.i.b16 %v142, %v142
  %v318 = vlaneseq
  %v319 = vshrl.u32 %v318, 7
  %v320 = vsub.s32 0, %v319
  %v321 = vrot.slane %v316, %v320
  %v323 = vpack.i.b16 %v150, %v150
  %v325 = vlaneseq
  %v326 = vshrl.u32 %v325, 7
  %v327 = vsub.s32 0, %v326
  %v328 = vrot.slane %v323, %v327
  %v330 = vpack.i.b16 %v152, %v152
  %v332 = vlaneseq
  %v333 = vshrl.u32 %v332, 7
  %v334 = vsub.s32 0, %v333
  %v335 = vrot.slane %v330, %v334
  %v337 = vpack.i.b16 %v135, %v135
  %v339 = vlaneseq
  %v340 = vshrl.u32 %v339, 7
  %v341 = vsub.s32 0, %v340
  %v342 = vrot.slane %v337, %v341
  %v344 = vpack.i.b16 %v149, %v149
  %v346 = vlaneseq
  %v347 = vshrl.u32 %v346, 7
  %v348 = vsub.s32 0, %v347
  %v349 = vrot.slane %v344, %v348
  %v351 = vpack.i.b16 %v151, %v151
  %v353 = vlaneseq
  %v354 = vshrl.u32 %v353, 7
  %v355 = vsub.s32 0, %v354
  %v356 = vrot.slane %v351, %v355
  %v358 = vpack.i.b16 %v153, %v153
  %v360 = vlaneseq
  %v361 = vshrl.u32 %v360, 7
  %v362 = vsub.s32 0, %v361
  %v363 = vrot.slane %v358, %v362
  %v365 = vpack.i.b16 %v177, %v177
  %v367 = vlaneseq
  %v368 = vshrl.u32 %v367, 7
  %v369 = vsub.s32 0, %v368
  %v370 = vrot.slane %v365, %v369
  %v372 = vpack.i.b16 %v191, %v191
  %v374 = vlaneseq
  %v375 = vshrl.u32 %v374, 7
  %v376 = vsub.s32 0, %v375
  %v377 = vrot.slane %v372, %v376
  %v379 = vpack.i.b16 %v199, %v199
  %v381 = vlaneseq
  %v382 = vshrl.u32 %v381, 7
  %v383 = vsub.s32 0, %v382
  %v384 = vrot.slane %v379, %v383
  %v386 = vpack.i.b16 %v201, %v201
  %v388 = vlaneseq
  %v389 = vshrl.u32 %v388, 7
  %v390 = vsub.s32 0, %v389
  %v391 = vrot.slane %v386, %v390
  %v393 = vpack.i.b16 %v184, %v184
  %v395 = vlaneseq
  %v396 = vshrl.u32 %v395, 7
  %v397 = vsub.s32 0, %v396
  %v398 = vrot.slane %v393, %v397
  %v400 = vpack.i.b16 %v198, %v198
  %v402 = vlaneseq
  %v403 = vshrl.u32 %v402, 7
  %v404 = vsub.s32 0, %v403
  %v405 = vrot.slane %v400, %v404
  %v407 = vpack.i.b16 %v200, %v200
  %v409 = vlaneseq
  %v410 = vshrl.u32 %v409, 7
  %v411 = vsub.s32 0, %v410
  %v412 = vrot.slane %v407, %v411
  %v414 = vpack.i.b16 %v202, %v202
  %v416 = vlaneseq
  %v417 = vshrl.u32 %v416, 7
  %v418 = vsub.s32 0, %v417
  %v419 = vrot.slane %v414, %v418
  %v421 = vpack.i.b16 %v226, %v226
  %v423 = vlaneseq
  %v424 = vshrl.u32 %v423, 7
  %v425 = vsub.s32 0, %v424
  %v426 = vrot.slane %v421, %v425
  %v428 = vpack.i.b16 %v240, %v240
  %v430 = vlaneseq
  %v431 = vshrl.u32 %v430, 7
  %v432 = vsub.s32 0, %v431
  %v433 = vrot.slane %v428, %v432
  %v435 = vpack.i.b16 %v248, %v248
  %v437 = vlaneseq
  %v438 = vshrl.u32 %v437, 7
  %v439 = vsub.s32 0, %v438
  %v440 = vrot.slane %v435, %v439
  %v442 = vpack.i.b16 %v250, %v250
  %v444 = vlaneseq
  %v445 = vshrl.u32 %v444, 7
  %v446 = vsub.s32 0, %v445
  %v447 = vrot.slane %v442, %v446
  %v449 = vpack.i.b16 %v233, %v233
  %v451 = vlaneseq
  %v452 = vshrl.u32 %v451, 7
  %v453 = vsub.s32 0, %v452
  %v454 = vrot.slane %v449, %v453
  %v456 = vpack.i.b16 %v247, %v247
  %v458 = vlaneseq
  %v459 = vshrl.u32 %v458, 7
  %v460 = vsub.s32 0, %v459
  %v461 = vrot.slane %v456, %v460
  %v463 = vpack.i.b16 %v249, %v249
  %v465 = vlaneseq
  %v466 = vshrl.u32 %v465, 7
  %v467 = vsub.s32 0, %v466
  %v468 = vrot.slane %v463, %v467
  %v470 = vpack.i.b16 %v251, %v251
  %v472 = vlaneseq
  %v473 = vshrl.u32 %v472, 7
  %v474 = vsub.s32 0, %v473
  %v475 = vrot.slane %v470, %v474
  %v508 = vunpack.c.l.b16 %v258
  %v509 = vunpack.c.l.b16 %v265
  %v510 = vunpack.c.l.b16 %v272
  %v511 = vunpack.c.l.b16 %v279
  %v512 = vunpack.c.l.b16 %v286
  %v513 = vunpack.c.l.b16 %v293
  %v514 = vunpack.c.l.b16 %v300
  %v515 = vunpack.c.l.b16 %v307
  %v516 = vunpack.c.l.b16 %v314
  %v517 = vunpack.c.l.b16 %v321
  %v518 = vunpack.c.l.b16 %v328
  %v519 = vunpack.c.l.b16 %v335
  %v520 = vunpack.c.l.b16 %v342
  %v521 = vunpack.c.l.b16 %v349
  %v522 = vunpack.c.l.b16 %v356
  %v523 = vunpack.c.l.b16 %v363
  %v524 = vunpack.c.l.b16 %v370
  %v525 = vunpack.c.l.b16 %v377
  %v526 = vunpack.c.l.b16 %v384
  %v527 = vunpack.c.l.b16 %v391
  %v528 = vunpack.c.l.b16 %v398
  %v529 = vunpack.c.l.b16 %v405
  %v530 = vunpack.c.l.b16 %v412
  %v531 = vunpack.c.l.b16 %v419
  %v532 = vunpack.c.l.b16 %v426
  %v533 = vunpack.c.l.b16 %v433
  %v534 = vunpack.c.l.b16 %v440
  %v535 = vunpack.c.l.b16 %v447
  %v536 = vunpack.c.l.b16 %v454
  %v537 = vunpack.c.l.b16 %v461
  %v538 = vunpack.c.l.b16 %v468
  %v539 = vunpack.c.l.b16 %v475
  %v540 = vpack.c.b16 %v509, %v508
  %v541 = vpack.c.b16 %v511, %v510
  %v542 = vpack.c.b16 %v513, %v512
  %v543 = vpack.c.b16 %v515, %v514
  %v544 = vpack.c.b16 %v517, %v516
  %v545 = vpack.c.b16 %v519, %v518
  %v546 = vpack.c.b16 %v521, %v520
  %v547 = vpack.c.b16 %v523, %v522
  %v548 = vpack.c.b16 %v525, %v524
  %v549 = vpack.c.b16 %v527, %v526
  %v550 = vpack.c.b16 %v529, %v528
  %v551 = vpack.c.b16 %v531, %v530
  %v552 = vpack.c.b16 %v533, %v532
  %v553 = vpack.c.b16 %v535, %v534
  %v554 = vpack.c.b16 %v537, %v536
  %v555 = vpack.c.b16 %v539, %v538
  %v572 = vmul.bf16 %v16, %v540
  %v573 = vmul.bf16 %v17, %v541
  %v574 = vmul.bf16 %v18, %v542
  %v575 = vmul.bf16 %v19, %v543
  %v576 = vmul.bf16 %v20, %v544
  %v577 = vmul.bf16 %v21, %v545
  %v578 = vmul.bf16 %v22, %v546
  %v579 = vmul.bf16 %v23, %v547
  %v580 = vmul.bf16 %v24, %v548
  %v581 = vmul.bf16 %v25, %v549
  %v582 = vmul.bf16 %v26, %v550
  %v583 = vmul.bf16 %v27, %v551
  %v584 = vmul.bf16 %v28, %v552
  %v585 = vmul.bf16 %v29, %v553
  %v586 = vmul.bf16 %v30, %v554
  %v587 = vmul.bf16 %v31, %v555
  %v588 = vmul.bf16 %v32, %v540
  %v589 = vmul.bf16 %v33, %v541
  %v590 = vmul.bf16 %v34, %v542
  %v591 = vmul.bf16 %v35, %v543
  %v592 = vmul.bf16 %v36, %v544
  %v593 = vmul.bf16 %v37, %v545
  %v594 = vmul.bf16 %v38, %v546
  %v595 = vmul.bf16 %v39, %v547
  %v596 = vmul.bf16 %v40, %v548
  %v597 = vmul.bf16 %v41, %v549
  %v598 = vmul.bf16 %v42, %v550
  %v599 = vmul.bf16 %v43, %v551
  %v600 = vmul.bf16 %v44, %v552
  %v601 = vmul.bf16 %v45, %v553
  %v602 = vmul.bf16 %v46, %v554
  %v603 = vmul.bf16 %v47, %v555
  %v604 = vunpack.c.l.bf16 %v572
  %v605 = vunpack.c.h.bf16 %v572
  %v606 = vunpack.c.l.bf16 %v573
  %v607 = vunpack.c.h.bf16 %v573
  %v608 = vunpack.c.l.bf16 %v574
  %v609 = vunpack.c.h.bf16 %v574
  %v610 = vunpack.c.l.bf16 %v575
  %v611 = vunpack.c.h.bf16 %v575
  %v612 = vunpack.c.l.bf16 %v576
  %v613 = vunpack.c.h.bf16 %v576
  %v614 = vunpack.c.l.bf16 %v577
  %v615 = vunpack.c.h.bf16 %v577
  %v616 = vunpack.c.l.bf16 %v578
  %v617 = vunpack.c.h.bf16 %v578
  %v618 = vunpack.c.l.bf16 %v579
  %v619 = vunpack.c.h.bf16 %v579
  %v620 = vunpack.c.l.bf16 %v580
  %v621 = vunpack.c.h.bf16 %v580
  %v622 = vunpack.c.l.bf16 %v581
  %v623 = vunpack.c.h.bf16 %v581
  %v624 = vunpack.c.l.bf16 %v582
  %v625 = vunpack.c.h.bf16 %v582
  %v626 = vunpack.c.l.bf16 %v583
  %v627 = vunpack.c.h.bf16 %v583
  %v628 = vunpack.c.l.bf16 %v584
  %v629 = vunpack.c.h.bf16 %v584
  %v630 = vunpack.c.l.bf16 %v585
  %v631 = vunpack.c.h.bf16 %v585
  %v632 = vunpack.c.l.bf16 %v586
  %v633 = vunpack.c.h.bf16 %v586
  %v634 = vunpack.c.l.bf16 %v587
  %v635 = vunpack.c.h.bf16 %v587
  %v636 = vunpack.c.l.bf16 %v588
  %v637 = vunpack.c.h.bf16 %v588
  %v638 = vunpack.c.l.bf16 %v589
  %v639 = vunpack.c.h.bf16 %v589
  %v640 = vunpack.c.l.bf16 %v590
  %v641 = vunpack.c.h.bf16 %v590
  %v642 = vunpack.c.l.bf16 %v591
  %v643 = vunpack.c.h.bf16 %v591
  %v644 = vunpack.c.l.bf16 %v592
  %v645 = vunpack.c.h.bf16 %v592
  %v646 = vunpack.c.l.bf16 %v593
  %v647 = vunpack.c.h.bf16 %v593
  %v648 = vunpack.c.l.bf16 %v594
  %v649 = vunpack.c.h.bf16 %v594
  %v650 = vunpack.c.l.bf16 %v595
  %v651 = vunpack.c.h.bf16 %v595
  %v652 = vunpack.c.l.bf16 %v596
  %v653 = vunpack.c.h.bf16 %v596
  %v654 = vunpack.c.l.bf16 %v597
  %v655 = vunpack.c.h.bf16 %v597
  %v656 = vunpack.c.l.bf16 %v598
  %v657 = vunpack.c.h.bf16 %v598
  %v658 = vunpack.c.l.bf16 %v599
  %v659 = vunpack.c.h.bf16 %v599
  %v660 = vunpack.c.l.bf16 %v600
  %v661 = vunpack.c.h.bf16 %v600
  %v662 = vunpack.c.l.bf16 %v601
  %v663 = vunpack.c.h.bf16 %v601
  %v664 = vunpack.c.l.bf16 %v602
  %v665 = vunpack.c.h.bf16 %v602
  %v666 = vunpack.c.l.bf16 %v603
  %v667 = vunpack.c.h.bf16 %v603
  %v668 = vadd.f32 %v604, %v605
  %v669 = vadd.f32 %v668, %v606
  %v670 = vadd.f32 %v669, %v607
  %v671 = vadd.f32 %v670, %v608
  %v672 = vadd.f32 %v671, %v609
  %v673 = vadd.f32 %v672, %v610
  %v674 = vadd.f32 %v673, %v611
  %v675 = vadd.f32 %v674, %v612
  %v676 = vadd.f32 %v675, %v613
  %v677 = vadd.f32 %v676, %v614
  %v678 = vadd.f32 %v677, %v615
  %v679 = vadd.f32 %v678, %v616
  %v680 = vadd.f32 %v679, %v617
  %v681 = vadd.f32 %v680, %v618
  %v682 = vadd.f32 %v681, %v619
  %v683 = vadd.f32 %v682, %v620
  %v684 = vadd.f32 %v683, %v621
  %v685 = vadd.f32 %v684, %v622
  %v686 = vadd.f32 %v685, %v623
  %v687 = vadd.f32 %v686, %v624
  %v688 = vadd.f32 %v687, %v625
  %v689 = vadd.f32 %v688, %v626
  %v690 = vadd.f32 %v689, %v627
  %v691 = vadd.f32 %v690, %v628
  %v692 = vadd.f32 %v691, %v629
  %v693 = vadd.f32 %v692, %v630
  %v694 = vadd.f32 %v693, %v631
  %v695 = vadd.f32 %v694, %v632
  %v696 = vadd.f32 %v695, %v633
  %v697 = vadd.f32 %v696, %v634
  %v698 = vadd.f32 %v697, %v635
  %699 = vadd.xlane.f32.xlu0 %v698
  %v700 = vpop.xlane.xlu0 %699
  %v701 = vadd.f32 %v636, %v637
  %v702 = vadd.f32 %v701, %v638
  %v703 = vadd.f32 %v702, %v639
  %v704 = vadd.f32 %v703, %v640
  %v705 = vadd.f32 %v704, %v641
  %v706 = vadd.f32 %v705, %v642
  %v707 = vadd.f32 %v706, %v643
  %v708 = vadd.f32 %v707, %v644
  %v709 = vadd.f32 %v708, %v645
  %v710 = vadd.f32 %v709, %v646
  %v711 = vadd.f32 %v710, %v647
  %v712 = vadd.f32 %v711, %v648
  %v713 = vadd.f32 %v712, %v649
  %v714 = vadd.f32 %v713, %v650
  %v715 = vadd.f32 %v714, %v651
  %v716 = vadd.f32 %v715, %v652
  %v717 = vadd.f32 %v716, %v653
  %v718 = vadd.f32 %v717, %v654
  %v719 = vadd.f32 %v718, %v655
  %v720 = vadd.f32 %v719, %v656
  %v721 = vadd.f32 %v720, %v657
  %v722 = vadd.f32 %v721, %v658
  %v723 = vadd.f32 %v722, %v659
  %v724 = vadd.f32 %v723, %v660
  %v725 = vadd.f32 %v724, %v661
  %v726 = vadd.f32 %v725, %v662
  %v727 = vadd.f32 %v726, %v663
  %v728 = vadd.f32 %v727, %v664
  %v729 = vadd.f32 %v728, %v665
  %v730 = vadd.f32 %v729, %v666
  %v731 = vadd.f32 %v730, %v667
  %732 = vadd.xlane.f32.xlu0 %v731
  %v733 = vpop.xlane.xlu0 %732
  %v734 = vld [vmem:[#allocation2] sm:$0x1]
  %s735 = vtos %v734
  %v736 = vstv %s735
  %v737 = vadd.f32 %v700, %v736
  %v738 = vadd.f32 %v733, %v736
  %v739 = vxor.u32 %v737, 2147483648
  %v740 = vxor.u32 %v738, 2147483648
  %v741 = vmul.f32 %v739, 1.442695
  %v742 = vpow.pop %v741
  %v743 = vmul.f32 %v740, 1.442695
  %v744 = vpow.pop %v743
  %v745 = vadd.f32 %v742, 1.0
  %v746 = vadd.f32 %v744, 1.0
  %v747 = vrcp.pop %v745
  %v748 = vmul.f32 1.0, %v747
  %v749 = vrcp.pop %v746
  %v750 = vmul.f32 1.0, %v749
  %vm751 = vcmask 7168
  %752 = vst.msk [vmem:[%s3] sm:$0xff] %vm751, %v748
  %753 = vst.msk [vmem:[%s3 + $0x8] sm:$0xff] %vm751, %v750
  // Predicated region
  $region14: #{discriminator_forward.7} parent=0 // pred_check
    _
  $region15: #{discriminator_forward.7} parent=0 // pred_check_branch
    %755 = sbr.rel (0) target = $region17
  $region16: #{discriminator_forward.7} parent=0 // pred_region
    _
  $region17: #{discriminator_forward.7} parent=0 // pred_fallthru
    _
  // Predicated region
  $region18: #{discriminator_forward.7} parent=0 // pred_check
    _
  $region19: #{discriminator_forward.7} parent=0 // pred_check_branch
    %757 = sbr.rel (0) target = $region21
  $region20: #{discriminator_forward.7} parent=0 // pred_region
    _
  $region21: #{discriminator_forward.7} parent=0 // pred_fallthru
    _

// kernel: discriminator_forward.6
$region0: #{discriminator_forward.6}
  #allocation0 [shape = 'u32[]', space=smem, size = 0x4, offset = 0x4, fixed_abs, tag = 'smem constant byte address 0x4 - core index']
  #allocation1 [shape = 'u32[144,128]{1,0:T(1,128)}', space=vmem, size = 0x12000, scoped, tag = 'internal scratch']
  %s0 = inlined_call_operand.vmem [shape: bf16[32,2048], index: 0, kind: input, shape index: {}]
  %s1 = inlined_call_operand.vmem [shape: bf16[2048,256], index: 1, kind: input, shape index: {}]
  %s2 = inlined_call_operand.vmem [shape: f32[1,256], index: 2, kind: input, shape index: {}]
  %s3 = inlined_call_operand.vmem [shape: bf16[32,256], index: 3, kind: output, shape index: {}]
  %s4 = sld [smem:[#allocation0]]
  $region45: #{discriminator_forward.6} parent=0
    _
  %s6 = ssub.s32 1, %s4
  %s7 = scalar_select 0, %s6, %s4
  loop: start=0, step=1, limit=4
  $region2: #{discriminator_forward.6} parent=0 // loop_pre_header
    _
  $region3: #{discriminator_forward.6} parent=0 // loop_header
    %s9 = sphi 0, %s13
    %p10 = scmp.ge.s32.totalorder %s9, 4
    %s19 = sphi 0, %s21
    %s22 = sphi 0, %s19
    %s23 = sphi 0, %s22
    %s39 = sphi 0, %s23
    %s43 = sphi 0, %s43
    %s45 = sphi 0, %s43
    %s46 = sphi 0, %s45
    %s60 = sphi 0, %s46
    %s64 = sphi 0, %s64
    %s66 = sphi 0, %s64
    %s67 = sphi 0, %s66
    %s81 = sphi 0, %s67
    %s87 = sphi 0, %s89
    %s90 = sphi 0, %s87
    %s91 = sphi 0, %s90
    %s107 = sphi 0, %s91
  $region4: #{discriminator_forward.6} parent=0 // loop_header_branch
    %12 = sbr.rel (%p10) target = $region8
  $region5: #{discriminator_forward.6} parent=0 // loop_body
    %s14 = ssub.s32 %s9, 1
    %s15 = ssub.s32 %s9, 2
    %s16 = sadd.s32 %s9, 1
    %s17 = ssub.s32 %s9, %s16
    %p18 = scmp.eq.s32.totalorder %s17, 0
    %s20 = sadd.s32 %s19, 1
    %s21 = scalar_select %p18, %s19, %s20
    %p24 = pneg %p18
    %p25 = scmp.eq.s32.totalorder %s9, 1
    %p26 = por %p24, %p25
    %p27 = scmp.ne.s32.totalorder %s19, %s22
    %p28 = scmp.eq.s32.totalorder %s9, 0
    %p29 = por %p27, %p28
    %p30 = scmp.ne.s32.totalorder %s19, %s22
    %p31 = scmp.eq.s32.totalorder %s14, 1
    %p32 = por %p30, %p31
    %p33 = scmp.ne.s32.totalorder %s22, %s23
    %p34 = scmp.eq.s32.totalorder %s14, 0
    %p35 = por %p33, %p34
    %p36 = scmp.ne.s32.totalorder %s22, %s23
    %p37 = scmp.eq.s32.totalorder %s15, 1
    %p38 = por %p36, %p37
    %p40 = scmp.ne.s32.totalorder %s23, %s39
    %p41 = scmp.eq.s32.totalorder %s15, 0
    %p42 = por %p40, %p41
    %s44 = sadd.s32 %s43, 1
    %p47 = scmp.eq.s32.totalorder %s9, 1
    %p48 = scmp.ne.s32.totalorder %s43, %s45
    %p49 = scmp.eq.s32.totalorder %s9, 0
    %p50 = por %p48, %p49
    %p51 = scmp.ne.s32.totalorder %s43, %s45
    %p52 = scmp.eq.s32.totalorder %s14, 1
    %p53 = por %p51, %p52
    %p54 = scmp.ne.s32.totalorder %s45, %s46
    %p55 = scmp.eq.s32.totalorder %s14, 0
    %p56 = por %p54, %p55
    %p57 = scmp.ne.s32.totalorder %s45, %s46
    %p58 = scmp.eq.s32.totalorder %s15, 1
    %p59 = por %p57, %p58
    %p61 = scmp.ne.s32.totalorder %s46, %s60
    %p62 = scmp.eq.s32.totalorder %s15, 0
    %p63 = por %p61, %p62
    %s65 = sadd.s32 %s64, 1
    %p68 = scmp.eq.s32.totalorder %s9, 1
    %p69 = scmp.ne.s32.totalorder %s64, %s66
    %p70 = scmp.eq.s32.totalorder %s9, 0
    %p71 = por %p69, %p70
    %p72 = scmp.ne.s32.totalorder %s64, %s66
    %p73 = scmp.eq.s32.totalorder %s14, 1
    %p74 = por %p72, %p73
    %p75 = scmp.ne.s32.totalorder %s66, %s67
    %p76 = scmp.eq.s32.totalorder %s14, 0
    %p77 = por %p75, %p76
    %p78 = scmp.ne.s32.totalorder %s66, %s67
    %p79 = scmp.eq.s32.totalorder %s15, 1
    %p80 = por %p78, %p79
    %p82 = scmp.ne.s32.totalorder %s67, %s81
    %p83 = scmp.eq.s32.totalorder %s15, 0
    %p84 = por %p82, %p83
    %s85 = ssub.s32 %s9, %s16
    %p86 = scmp.eq.s32.totalorder %s85, 0
    %s88 = sadd.s32 %s87, 1
    %s89 = scalar_select %p86, %s87, %s88
    %p92 = pneg %p86
    %p93 = scmp.eq.s32.totalorder %s9, 1
    %p94 = por %p92, %p93
    %p95 = scmp.ne.s32.totalorder %s87, %s90
    %p96 = scmp.eq.s32.totalorder %s9, 0
    %p97 = por %p95, %p96
    %p98 = scmp.ne.s32.totalorder %s87, %s90
    %p99 = scmp.eq.s32.totalorder %s14, 1
    %p100 = por %p98, %p99
    %p101 = scmp.ne.s32.totalorder %s90, %s91
    %p102 = scmp.eq.s32.totalorder %s14, 0
    %p103 = por %p101, %p102
    %p104 = scmp.ne.s32.totalorder %s90, %s91
    %p105 = scmp.eq.s32.totalorder %s15, 1
    %p106 = por %p104, %p105
    %p108 = scmp.ne.s32.totalorder %s91, %s107
    %p109 = scmp.eq.s32.totalorder %s15, 0
    %p110 = por %p108, %p109
    %p111 = scmp.le.s32.totalorder 1, %s9
    %p112 = scmp.lt.s32.totalorder %s9, 3
    %p113 = pnand %p111, %p112
    %p114 = pneg %p113
    // Predicated region
    $region9: #{discriminator_forward.6} parent=5 // pred_check
      _
    $region10: #{discriminator_forward.6} parent=5 // pred_check_branch
      %116 = sbr.rel (%p113) target = $region12
    $region11: #{discriminator_forward.6} parent=5 // pred_region
      %s117 = ssub.s32 %s9, 1
      // Predicated region
      $region13: #{discriminator_forward.6} parent=11 // pred_check
        %p118 = pneg %p56
      $region14: #{discriminator_forward.6} parent=11 // pred_check_branch
        %120 = sbr.rel (%p118) target = $region16
      $region15: #{discriminator_forward.6} parent=11 // pred_region
        _
      $region16: #{discriminator_forward.6} parent=11 // pred_fallthru
        _
      // Predicated region
      $region17: #{discriminator_forward.6} parent=11 // pred_check
        %p121 = pneg %p77
      $region18: #{discriminator_forward.6} parent=11 // pred_check_branch
        %123 = sbr.rel (%p121) target = $region20
      $region19: #{discriminator_forward.6} parent=11 // pred_region
        _
      $region20: #{discriminator_forward.6} parent=11 // pred_fallthru
        _
    $region12: #{discriminator_forward.6} parent=5 // pred_fallthru
      _
    %p124 = scmp.lt.s32.totalorder %s9, 2
    // Predicated region
    $region21: #{discriminator_forward.6} parent=5 // pred_check
      %p125 = pneg %p124
    $region22: #{discriminator_forward.6} parent=5 // pred_check_branch
      %127 = sbr.rel (%p125) target = $region24
    $region23: #{discriminator_forward.6} parent=5 // pred_region
      // Predicated region
      $region25: #{discriminator_forward.6} parent=23 // pred_check
        %p128 = pneg %p29
      $region26: #{discriminator_forward.6} parent=23 // pred_check_branch
        %130 = sbr.rel (%p128) target = $region28
      $region27: #{discriminator_forward.6} parent=23 // pred_region
        %s131 = smul.u32 2, %s9
        %p132 = scmp.lt.s32.totalorder %s131, 3
        %s133 = scalar_select %p132, %s131, 3
        %s134 = smul.addr %s133, 16
        %s135 = smul.addr %s134, 4
        %s136 = scalar_lea.vmem %s0, %s135
        %s137 = smul.u32 2, %s9
      $region28: #{discriminator_forward.6} parent=23 // pred_fallthru
        _
    $region24: #{discriminator_forward.6} parent=5 // pred_fallthru
      _
    %p138 = scmp.le.s32.totalorder 1, %s9
    %p139 = scmp.lt.s32.totalorder %s9, 3
    %p140 = pnand %p138, %p139
    %p141 = pneg %p140
    // Predicated region
    $region29: #{discriminator_forward.6} parent=5 // pred_check
      _
    $region30: #{discriminator_forward.6} parent=5 // pred_check_branch
      %143 = sbr.rel (%p140) target = $region32
    $region31: #{discriminator_forward.6} parent=5 // pred_region
      %s144 = ssub.s32 %s9, 1
      %s145 = smul.u32 2, %s14
      %p146 = scmp.lt.s32.totalorder %s145, 3
      %s147 = scalar_select %p146, %s145, 3
      %s148 = smul.addr %s147, 16
      %s149 = smul.addr %s148, 4
      %s150 = scalar_lea.vmem %s0, %s149
      %p151 = pneg %p35
      %p152 = pneg %p32
      %p153 = pneg %p56
      %p154 = pneg %p53
      %p155 = pneg %p77
      %p156 = pneg %p74
      %p157 = pneg %p103
      %p158 = pneg %p100
      %s159 = smul.u32 2, %s14
      %p160 = scmp.lt.s32.totalorder %s159, 3
      %s161 = scalar_select %p160, %s159, 3
      %s162 = smul.addr %s161, 2
      %s163 = smul.addr %s162, 4
      %s164 = scalar_lea.vmem %s3, %s163
      %s165 = smul.u32 2, %s14
      %p166 = scmp.lt.s32.totalorder %s165, 3
      %s167 = scalar_select %p166, %s165, 3
      %s168 = smul.addr %s167, 16
      %s169 = smul.addr %s168, 4
      %s170 = scalar_lea.vmem %s0, %s169
      %s171 = smul.u32 2, %s14
      %s172 = smul.u32 2, %s14
      %p173 = scmp.lt.s32.totalorder %s172, 3
      %s174 = scalar_select %p173, %s172, 3
      %s175 = smul.addr %s174, 2
      %s176 = smul.addr %s175, 4
      %s177 = scalar_lea.vmem %s3, %s176
      %s178 = smul.u32 2, %s14
      %v179 = vld [vmem:[%s170] sm:$0xff]
      %v180 = vld [vmem:[%s170 + $0x8] sm:$0xff]
      %v181 = vld [vmem:[%s170 + $0x10] sm:$0xff]
      %v182 = vld [vmem:[%s170 + $0x18] sm:$0xff]
      %v183 = vld [vmem:[%s170 + $0x20] sm:$0xff]
      %v184 = vld [vmem:[%s170 + $0x28] sm:$0xff]
      %v185 = vld [vmem:[%s170 + $0x30] sm:$0xff]
      %v186 = vld [vmem:[%s170 + $0x38] sm:$0xff]
      %v187 = vld [vmem:[%s170 + $0x40] sm:$0xff]
      %v188 = vld [vmem:[%s170 + $0x48] sm:$0xff]
      %v189 = vld [vmem:[%s170 + $0x50] sm:$0xff]
      %v190 = vld [vmem:[%s170 + $0x58] sm:$0xff]
      %v191 = vld [vmem:[%s170 + $0x60] sm:$0xff]
      %v192 = vld [vmem:[%s170 + $0x68] sm:$0xff]
      %v193 = vld [vmem:[%s170 + $0x70] sm:$0xff]
      %v194 = vld [vmem:[%s170 + $0x78] sm:$0xff]
      %v195 = vld [vmem:[%s1] sm:$0xff]
      %v196 = vld [vmem:[%s1 + $0x8] sm:$0xff]
      %v197 = vld [vmem:[%s1 + $0x10] sm:$0xff]
      %v198 = vld [vmem:[%s1 + $0x18] sm:$0xff]
      %v199 = vld [vmem:[%s1 + $0x20] sm:$0xff]
      %v200 = vld [vmem:[%s1 + $0x28] sm:$0xff]
      %v201 = vld [vmem:[%s1 + $0x30] sm:$0xff]
      %v202 = vld [vmem:[%s1 + $0x38] sm:$0xff]
      %v203 = vld [vmem:[%s1 + $0x40] sm:$0xff]
      %v204 = vld [vmem:[%s1 + $0x48] sm:$0xff]
      %v205 = vld [vmem:[%s1 + $0x50] sm:$0xff]
      %v206 = vld [vmem:[%s1 + $0x58] sm:$0xff]
      %v207 = vld [vmem:[%s1 + $0x60] sm:$0xff]
      %v208 = vld [vmem:[%s1 + $0x68] sm:$0xff]
      %v209 = vld [vmem:[%s1 + $0x70] sm:$0xff]
      %v210 = vld [vmem:[%s1 + $0x78] sm:$0xff]
      %v211 = vld [vmem:[%s1 + $0x80] sm:$0xff]
      %v212 = vld [vmem:[%s1 + $0x88] sm:$0xff]
      %v213 = vld [vmem:[%s1 + $0x90] sm:$0xff]
      %v214 = vld [vmem:[%s1 + $0x98] sm:$0xff]
      %v215 = vld [vmem:[%s1 + $0xa0] sm:$0xff]
      %v216 = vld [vmem:[%s1 + $0xa8] sm:$0xff]
      %v217 = vld [vmem:[%s1 + $0xb0] sm:$0xff]
      %v218 = vld [vmem:[%s1 + $0xb8] sm:$0xff]
      %v219 = vld [vmem:[%s1 + $0xc0] sm:$0xff]
      %v220 = vld [vmem:[%s1 + $0xc8] sm:$0xff]
      %v221 = vld [vmem:[%s1 + $0xd0] sm:$0xff]
      %v222 = vld [vmem:[%s1 + $0xd8] sm:$0xff]
      %v223 = vld [vmem:[%s1 + $0xe0] sm:$0xff]
      %v224 = vld [vmem:[%s1 + $0xe8] sm:$0xff]
      %v225 = vld [vmem:[%s1 + $0xf0] sm:$0xff]
      %v226 = vld [vmem:[%s1 + $0xf8] sm:$0xff]
      %v227 = vld [vmem:[%s1 + $0x100] sm:$0xff]
      %v228 = vld [vmem:[%s1 + $0x108] sm:$0xff]
      %v229 = vld [vmem:[%s1 + $0x110] sm:$0xff]
      %v230 = vld [vmem:[%s1 + $0x118] sm:$0xff]
      %v231 = vld [vmem:[%s1 + $0x120] sm:$0xff]
      %v232 = vld [vmem:[%s1 + $0x128] sm:$0xff]
      %v233 = vld [vmem:[%s1 + $0x130] sm:$0xff]
      %v234 = vld [vmem:[%s1 + $0x138] sm:$0xff]
      %v235 = vld [vmem:[%s1 + $0x140] sm:$0xff]
      %v236 = vld [vmem:[%s1 + $0x148] sm:$0xff]
      %v237 = vld [vmem:[%s1 + $0x150] sm:$0xff]
      %v238 = vld [vmem:[%s1 + $0x158] sm:$0xff]
      %v239 = vld [vmem:[%s1 + $0x160] sm:$0xff]
      %v240 = vld [vmem:[%s1 + $0x168] sm:$0xff]
      %v241 = vld [vmem:[%s1 + $0x170] sm:$0xff]
      %v242 = vld [vmem:[%s1 + $0x178] sm:$0xff]
      %v243 = vld [vmem:[%s1 + $0x180] sm:$0xff]
      %v244 = vld [vmem:[%s1 + $0x188] sm:$0xff]
      %v245 = vld [vmem:[%s1 + $0x190] sm:$0xff]
      %v246 = vld [vmem:[%s1 + $0x198] sm:$0xff]
      %v247 = vld [vmem:[%s1 + $0x1a0] sm:$0xff]
      %v248 = vld [vmem:[%s1 + $0x1a8] sm:$0xff]
      %v249 = vld [vmem:[%s1 + $0x1b0] sm:$0xff]
      %v250 = vld [vmem:[%s1 + $0x1b8] sm:$0xff]
      %v251 = vld [vmem:[%s1 + $0x1c0] sm:$0xff]
      %v252 = vld [vmem:[%s1 + $0x1c8] sm:$0xff]
      %v253 = vld [vmem:[%s1 + $0x1d0] sm:$0xff]
      %v254 = vld [vmem:[%s1 + $0x1d8] sm:$0xff]
      %v255 = vld [vmem:[%s1 + $0x1e0] sm:$0xff]
      %v256 = vld [vmem:[%s1 + $0x1e8] sm:$0xff]
      %v257 = vld [vmem:[%s1 + $0x1f0] sm:$0xff]
      %v258 = vld [vmem:[%s1 + $0x1f8] sm:$0xff]
      %v259 = vld [vmem:[%s1 + $0x200] sm:$0xff]
      %v260 = vld [vmem:[%s1 + $0x208] sm:$0xff]
      %v261 = vld [vmem:[%s1 + $0x210] sm:$0xff]
      %v262 = vld [vmem:[%s1 + $0x218] sm:$0xff]
      %v263 = vld [vmem:[%s1 + $0x220] sm:$0xff]
      %v264 = vld [vmem:[%s1 + $0x228] sm:$0xff]
      %v265 = vld [vmem:[%s1 + $0x230] sm:$0xff]
      %v266 = vld [vmem:[%s1 + $0x238] sm:$0xff]
      %v267 = vld [vmem:[%s1 + $0x240] sm:$0xff]
      %v268 = vld [vmem:[%s1 + $0x248] sm:$0xff]
      %v269 = vld [vmem:[%s1 + $0x250] sm:$0xff]
      %v270 = vld [vmem:[%s1 + $0x258] sm:$0xff]
      %v271 = vld [vmem:[%s1 + $0x260] sm:$0xff]
      %v272 = vld [vmem:[%s1 + $0x268] sm:$0xff]
      %v273 = vld [vmem:[%s1 + $0x270] sm:$0xff]
      %v274 = vld [vmem:[%s1 + $0x278] sm:$0xff]
      %v275 = vld [vmem:[%s1 + $0x280] sm:$0xff]
      %v276 = vld [vmem:[%s1 + $0x288] sm:$0xff]
      %v277 = vld [vmem:[%s1 + $0x290] sm:$0xff]
      %v278 = vld [vmem:[%s1 + $0x298] sm:$0xff]
      %v279 = vld [vmem:[%s1 + $0x2a0] sm:$0xff]
      %v280 = vld [vmem:[%s1 + $0x2a8] sm:$0xff]
      %v281 = vld [vmem:[%s1 + $0x2b0] sm:$0xff]
      %v282 = vld [vmem:[%s1 + $0x2b8] sm:$0xff]
      %v283 = vld [vmem:[%s1 + $0x2c0] sm:$0xff]
      %v284 = vld [vmem:[%s1 + $0x2c8] sm:$0xff]
      %v285 = vld [vmem:[%s1 + $0x2d0] sm:$0xff]
      %v286 = vld [vmem:[%s1 + $0x2d8] sm:$0xff]
      %v287 = vld [vmem:[%s1 + $0x2e0] sm:$0xff]
      %v288 = vld [vmem:[%s1 + $0x2e8] sm:$0xff]
      %v289 = vld [vmem:[%s1 + $0x2f0] sm:$0xff]
      %v290 = vld [vmem:[%s1 + $0x2f8] sm:$0xff]
      %v291 = vld [vmem:[%s1 + $0x300] sm:$0xff]
      %v292 = vld [vmem:[%s1 + $0x308] sm:$0xff]
      %v293 = vld [vmem:[%s1 + $0x310] sm:$0xff]
      %v294 = vld [vmem:[%s1 + $0x318] sm:$0xff]
      %v295 = vld [vmem:[%s1 + $0x320] sm:$0xff]
      %v296 = vld [vmem:[%s1 + $0x328] sm:$0xff]
      %v297 = vld [vmem:[%s1 + $0x330] sm:$0xff]
      %v298 = vld [vmem:[%s1 + $0x338] sm:$0xff]
      %v299 = vld [vmem:[%s1 + $0x340] sm:$0xff]
      %v300 = vld [vmem:[%s1 + $0x348] sm:$0xff]
      %v301 = vld [vmem:[%s1 + $0x350] sm:$0xff]
      %v302 = vld [vmem:[%s1 + $0x358] sm:$0xff]
      %v303 = vld [vmem:[%s1 + $0x360] sm:$0xff]
      %v304 = vld [vmem:[%s1 + $0x368] sm:$0xff]
      %v305 = vld [vmem:[%s1 + $0x370] sm:$0xff]
      %v306 = vld [vmem:[%s1 + $0x378] sm:$0xff]
      %v307 = vld [vmem:[%s1 + $0x380] sm:$0xff]
      %v308 = vld [vmem:[%s1 + $0x388] sm:$0xff]
      %v309 = vld [vmem:[%s1 + $0x390] sm:$0xff]
      %v310 = vld [vmem:[%s1 + $0x398] sm:$0xff]
      %v311 = vld [vmem:[%s1 + $0x3a0] sm:$0xff]
      %v312 = vld [vmem:[%s1 + $0x3a8] sm:$0xff]
      %v313 = vld [vmem:[%s1 + $0x3b0] sm:$0xff]
      %v314 = vld [vmem:[%s1 + $0x3b8] sm:$0xff]
      %v315 = vld [vmem:[%s1 + $0x3c0] sm:$0xff]
      %v316 = vld [vmem:[%s1 + $0x3c8] sm:$0xff]
      %v317 = vld [vmem:[%s1 + $0x3d0] sm:$0xff]
      %v318 = vld [vmem:[%s1 + $0x3d8] sm:$0xff]
      %v319 = vld [vmem:[%s1 + $0x3e0] sm:$0xff]
      %v320 = vld [vmem:[%s1 + $0x3e8] sm:$0xff]
      %v321 = vld [vmem:[%s1 + $0x3f0] sm:$0xff]
      %v322 = vld [vmem:[%s1 + $0x3f8] sm:$0xff]
      %v323 = vld [vmem:[%s1 + $0x400] sm:$0xff]
      %v324 = vld [vmem:[%s1 + $0x408] sm:$0xff]
      %v325 = vld [vmem:[%s1 + $0x410] sm:$0xff]
      %v326 = vld [vmem:[%s1 + $0x418] sm:$0xff]
      %v327 = vld [vmem:[%s1 + $0x420] sm:$0xff]
      %v328 = vld [vmem:[%s1 + $0x428] sm:$0xff]
      %v329 = vld [vmem:[%s1 + $0x430] sm:$0xff]
      %v330 = vld [vmem:[%s1 + $0x438] sm:$0xff]
      %v331 = vld [vmem:[%s1 + $0x440] sm:$0xff]
      %v332 = vld [vmem:[%s1 + $0x448] sm:$0xff]
      %v333 = vld [vmem:[%s1 + $0x450] sm:$0xff]
      %v334 = vld [vmem:[%s1 + $0x458] sm:$0xff]
      %v335 = vld [vmem:[%s1 + $0x460] sm:$0xff]
      %v336 = vld [vmem:[%s1 + $0x468] sm:$0xff]
      %v337 = vld [vmem:[%s1 + $0x470] sm:$0xff]
      %v338 = vld [vmem:[%s1 + $0x478] sm:$0xff]
      %v339 = vld [vmem:[%s1 + $0x480] sm:$0xff]
      %v340 = vld [vmem:[%s1 + $0x488] sm:$0xff]
      %v341 = vld [vmem:[%s1 + $0x490] sm:$0xff]
      %v342 = vld [vmem:[%s1 + $0x498] sm:$0xff]
      %v343 = vld [vmem:[%s1 + $0x4a0] sm:$0xff]
      %v344 = vld [vmem:[%s1 + $0x4a8] sm:$0xff]
      %v345 = vld [vmem:[%s1 + $0x4b0] sm:$0xff]
      %v346 = vld [vmem:[%s1 + $0x4b8] sm:$0xff]
      %v347 = vld [vmem:[%s1 + $0x4c0] sm:$0xff]
      %v348 = vld [vmem:[%s1 + $0x4c8] sm:$0xff]
      %v349 = vld [vmem:[%s1 + $0x4d0] sm:$0xff]
      %v350 = vld [vmem:[%s1 + $0x4d8] sm:$0xff]
      %v351 = vld [vmem:[%s1 + $0x4e0] sm:$0xff]
      %v352 = vld [vmem:[%s1 + $0x4e8] sm:$0xff]
      %v353 = vld [vmem:[%s1 + $0x4f0] sm:$0xff]
      %v354 = vld [vmem:[%s1 + $0x4f8] sm:$0xff]
      %v355 = vld [vmem:[%s1 + $0x500] sm:$0xff]
      %v356 = vld [vmem:[%s1 + $0x508] sm:$0xff]
      %v357 = vld [vmem:[%s1 + $0x510] sm:$0xff]
      %v358 = vld [vmem:[%s1 + $0x518] sm:$0xff]
      %v359 = vld [vmem:[%s1 + $0x520] sm:$0xff]
      %v360 = vld [vmem:[%s1 + $0x528] sm:$0xff]
      %v361 = vld [vmem:[%s1 + $0x530] sm:$0xff]
      %v362 = vld [vmem:[%s1 + $0x538] sm:$0xff]
      %v363 = vld [vmem:[%s1 + $0x540] sm:$0xff]
      %v364 = vld [vmem:[%s1 + $0x548] sm:$0xff]
      %v365 = vld [vmem:[%s1 + $0x550] sm:$0xff]
      %v366 = vld [vmem:[%s1 + $0x558] sm:$0xff]
      %v367 = vld [vmem:[%s1 + $0x560] sm:$0xff]
      %v368 = vld [vmem:[%s1 + $0x568] sm:$0xff]
      %v369 = vld [vmem:[%s1 + $0x570] sm:$0xff]
      %v370 = vld [vmem:[%s1 + $0x578] sm:$0xff]
      %v371 = vld [vmem:[%s1 + $0x580] sm:$0xff]
      %v372 = vld [vmem:[%s1 + $0x588] sm:$0xff]
      %v373 = vld [vmem:[%s1 + $0x590] sm:$0xff]
      %v374 = vld [vmem:[%s1 + $0x598] sm:$0xff]
      %v375 = vld [vmem:[%s1 + $0x5a0] sm:$0xff]
      %v376 = vld [vmem:[%s1 + $0x5a8] sm:$0xff]
      %v377 = vld [vmem:[%s1 + $0x5b0] sm:$0xff]
      %v378 = vld [vmem:[%s1 + $0x5b8] sm:$0xff]
      %v379 = vld [vmem:[%s1 + $0x5c0] sm:$0xff]
      %v380 = vld [vmem:[%s1 + $0x5c8] sm:$0xff]
      %v381 = vld [vmem:[%s1 + $0x5d0] sm:$0xff]
      %v382 = vld [vmem:[%s1 + $0x5d8] sm:$0xff]
      %v383 = vld [vmem:[%s1 + $0x5e0] sm:$0xff]
      %v384 = vld [vmem:[%s1 + $0x5e8] sm:$0xff]
      %v385 = vld [vmem:[%s1 + $0x5f0] sm:$0xff]
      %v386 = vld [vmem:[%s1 + $0x5f8] sm:$0xff]
      %v387 = vld [vmem:[%s1 + $0x600] sm:$0xff]
      %v388 = vld [vmem:[%s1 + $0x608] sm:$0xff]
      %v389 = vld [vmem:[%s1 + $0x610] sm:$0xff]
      %v390 = vld [vmem:[%s1 + $0x618] sm:$0xff]
      %v391 = vld [vmem:[%s1 + $0x620] sm:$0xff]
      %v392 = vld [vmem:[%s1 + $0x628] sm:$0xff]
      %v393 = vld [vmem:[%s1 + $0x630] sm:$0xff]
      %v394 = vld [vmem:[%s1 + $0x638] sm:$0xff]
      %v395 = vld [vmem:[%s1 + $0x640] sm:$0xff]
      %v396 = vld [vmem:[%s1 + $0x648] sm:$0xff]
      %v397 = vld [vmem:[%s1 + $0x650] sm:$0xff]
      %v398 = vld [vmem:[%s1 + $0x658] sm:$0xff]
      %v399 = vld [vmem:[%s1 + $0x660] sm:$0xff]
      %v400 = vld [vmem:[%s1 + $0x668] sm:$0xff]
      %v401 = vld [vmem:[%s1 + $0x670] sm:$0xff]
      %v402 = vld [vmem:[%s1 + $0x678] sm:$0xff]
      %v403 = vld [vmem:[%s1 + $0x680] sm:$0xff]
      %v404 = vld [vmem:[%s1 + $0x688] sm:$0xff]
      %v405 = vld [vmem:[%s1 + $0x690] sm:$0xff]
      %v406 = vld [vmem:[%s1 + $0x698] sm:$0xff]
      %v407 = vld [vmem:[%s1 + $0x6a0] sm:$0xff]
      %v408 = vld [vmem:[%s1 + $0x6a8] sm:$0xff]
      %v409 = vld [vmem:[%s1 + $0x6b0] sm:$0xff]
      %v410 = vld [vmem:[%s1 + $0x6b8] sm:$0xff]
      %v411 = vld [vmem:[%s1 + $0x6c0] sm:$0xff]
      %v412 = vld [vmem:[%s1 + $0x6c8] sm:$0xff]
      %v413 = vld [vmem:[%s1 + $0x6d0] sm:$0xff]
      %v414 = vld [vmem:[%s1 + $0x6d8] sm:$0xff]
      %v415 = vld [vmem:[%s1 + $0x6e0] sm:$0xff]
      %v416 = vld [vmem:[%s1 + $0x6e8] sm:$0xff]
      %v417 = vld [vmem:[%s1 + $0x6f0] sm:$0xff]
      %v418 = vld [vmem:[%s1 + $0x6f8] sm:$0xff]
      %v419 = vld [vmem:[%s1 + $0x700] sm:$0xff]
      %v420 = vld [vmem:[%s1 + $0x708] sm:$0xff]
      %v421 = vld [vmem:[%s1 + $0x710] sm:$0xff]
      %v422 = vld [vmem:[%s1 + $0x718] sm:$0xff]
      %v423 = vld [vmem:[%s1 + $0x720] sm:$0xff]
      %v424 = vld [vmem:[%s1 + $0x728] sm:$0xff]
      %v425 = vld [vmem:[%s1 + $0x730] sm:$0xff]
      %v426 = vld [vmem:[%s1 + $0x738] sm:$0xff]
      %v427 = vld [vmem:[%s1 + $0x740] sm:$0xff]
      %v428 = vld [vmem:[%s1 + $0x748] sm:$0xff]
      %v429 = vld [vmem:[%s1 + $0x750] sm:$0xff]
      %v430 = vld [vmem:[%s1 + $0x758] sm:$0xff]
      %v431 = vld [vmem:[%s1 + $0x760] sm:$0xff]
      %v432 = vld [vmem:[%s1 + $0x768] sm:$0xff]
      %v433 = vld [vmem:[%s1 + $0x770] sm:$0xff]
      %v434 = vld [vmem:[%s1 + $0x778] sm:$0xff]
      %v435 = vld [vmem:[%s1 + $0x780] sm:$0xff]
      %v436 = vld [vmem:[%s1 + $0x788] sm:$0xff]
      %v437 = vld [vmem:[%s1 + $0x790] sm:$0xff]
      %v438 = vld [vmem:[%s1 + $0x798] sm:$0xff]
      %v439 = vld [vmem:[%s1 + $0x7a0] sm:$0xff]
      %v440 = vld [vmem:[%s1 + $0x7a8] sm:$0xff]
      %v441 = vld [vmem:[%s1 + $0x7b0] sm:$0xff]
      %v442 = vld [vmem:[%s1 + $0x7b8] sm:$0xff]
      %v443 = vld [vmem:[%s1 + $0x7c0] sm:$0xff]
      %v444 = vld [vmem:[%s1 + $0x7c8] sm:$0xff]
      %v445 = vld [vmem:[%s1 + $0x7d0] sm:$0xff]
      %v446 = vld [vmem:[%s1 + $0x7d8] sm:$0xff]
      %v447 = vld [vmem:[%s1 + $0x7e0] sm:$0xff]
      %v448 = vld [vmem:[%s1 + $0x7e8] sm:$0xff]
      %v449 = vld [vmem:[%s1 + $0x7f0] sm:$0xff]
      %v450 = vld [vmem:[%s1 + $0x7f8] sm:$0xff]
      %v451 = vld [vmem:[%s2] sm:$0x3]
      %v453 = vlaneseq
      %v454 = vshrl.u32 %v453, 7
      %v455 = vsub.s32 0, %v454
      %v456 = vrot.slane %v451, %v455
      %v457 = vlaneseq
      %v458 = vshrl.u32 %v457, 7
      %v459 = vsub.s32 1, %v458
      %v460 = vrot.slane %v451, %v459
      %v479 = vunpack.c.l.b16 %v179
      %v480 = vunpack.c.h.b16 %v179
      %v481 = vunpack.c.l.b16 %v180
      %v482 = vunpack.c.h.b16 %v180
      %v483 = vunpack.c.l.b16 %v181
      %v484 = vunpack.c.h.b16 %v181
      %v485 = vunpack.c.l.b16 %v182
      %v486 = vunpack.c.h.b16 %v182
      %v487 = vunpack.c.l.b16 %v183
      %v488 = vunpack.c.h.b16 %v183
      %v489 = vunpack.c.l.b16 %v184
      %v490 = vunpack.c.h.b16 %v184
      %v491 = vunpack.c.l.b16 %v185
      %v492 = vunpack.c.h.b16 %v185
      %v493 = vunpack.c.l.b16 %v186
      %v494 = vunpack.c.h.b16 %v186
      %v495 = vunpack.c.l.b16 %v187
      %v496 = vunpack.c.h.b16 %v187
      %v497 = vunpack.c.l.b16 %v188
      %v498 = vunpack.c.h.b16 %v188
      %v499 = vunpack.c.l.b16 %v189
      %v500 = vunpack.c.h.b16 %v189
      %v501 = vunpack.c.l.b16 %v190
      %v502 = vunpack.c.h.b16 %v190
      %v503 = vunpack.c.l.b16 %v191
      %v504 = vunpack.c.h.b16 %v191
      %v505 = vunpack.c.l.b16 %v192
      %v506 = vunpack.c.h.b16 %v192
      %v507 = vunpack.c.l.b16 %v193
      %v508 = vunpack.c.h.b16 %v193
      %v509 = vunpack.c.l.b16 %v194
      %v510 = vunpack.c.h.b16 %v194
      %v511 = vpack.c.b16 %v495, %v479
      %v512 = vpack.c.b16 %v496, %v480
      %v513 = vpack.c.b16 %v497, %v481
      %v514 = vpack.c.b16 %v498, %v482
      %v515 = vpack.c.b16 %v499, %v483
      %v516 = vpack.c.b16 %v500, %v484
      %v517 = vpack.c.b16 %v501, %v485
      %v518 = vpack.c.b16 %v502, %v486
      %v519 = vpack.c.b16 %v503, %v487
      %v520 = vpack.c.b16 %v504, %v488
      %v521 = vpack.c.b16 %v505, %v489
      %v522 = vpack.c.b16 %v506, %v490
      %v523 = vpack.c.b16 %v507, %v491
      %v524 = vpack.c.b16 %v508, %v492
      %v525 = vpack.c.b16 %v509, %v493
      %v526 = vpack.c.b16 %v510, %v494
      %v799 = vunpack.c.l.b16 %v195
      %v800 = vunpack.c.h.b16 %v195
      %v801 = vunpack.c.l.b16 %v196
      %v802 = vunpack.c.h.b16 %v196
      %v803 = vunpack.c.l.b16 %v197
      %v804 = vunpack.c.h.b16 %v197
      %v805 = vunpack.c.l.b16 %v198
      %v806 = vunpack.c.h.b16 %v198
      %v807 = vunpack.c.l.b16 %v199
      %v808 = vunpack.c.h.b16 %v199
      %v809 = vunpack.c.l.b16 %v200
      %v810 = vunpack.c.h.b16 %v200
      %v811 = vunpack.c.l.b16 %v201
      %v812 = vunpack.c.h.b16 %v201
      %v813 = vunpack.c.l.b16 %v202
      %v814 = vunpack.c.h.b16 %v202
      %v815 = vunpack.c.l.b16 %v203
      %v816 = vunpack.c.h.b16 %v203
      %v817 = vunpack.c.l.b16 %v204
      %v818 = vunpack.c.h.b16 %v204
      %v819 = vunpack.c.l.b16 %v205
      %v820 = vunpack.c.h.b16 %v205
      %v821 = vunpack.c.l.b16 %v206
      %v822 = vunpack.c.h.b16 %v206
      %v823 = vunpack.c.l.b16 %v207
      %v824 = vunpack.c.h.b16 %v207
      %v825 = vunpack.c.l.b16 %v208
      %v826 = vunpack.c.h.b16 %v208
      %v827 = vunpack.c.l.b16 %v209
      %v828 = vunpack.c.h.b16 %v209
      %v829 = vunpack.c.l.b16 %v210
      %v830 = vunpack.c.h.b16 %v210
      %v831 = vunpack.c.l.b16 %v211
      %v832 = vunpack.c.h.b16 %v211
      %v833 = vunpack.c.l.b16 %v212
      %v834 = vunpack.c.h.b16 %v212
      %v835 = vunpack.c.l.b16 %v213
      %v836 = vunpack.c.h.b16 %v213
      %v837 = vunpack.c.l.b16 %v214
      %v838 = vunpack.c.h.b16 %v214
      %v839 = vunpack.c.l.b16 %v215
      %v840 = vunpack.c.h.b16 %v215
      %v841 = vunpack.c.l.b16 %v216
      %v842 = vunpack.c.h.b16 %v216
      %v843 = vunpack.c.l.b16 %v217
      %v844 = vunpack.c.h.b16 %v217
      %v845 = vunpack.c.l.b16 %v218
      %v846 = vunpack.c.h.b16 %v218
      %v847 = vunpack.c.l.b16 %v219
      %v848 = vunpack.c.h.b16 %v219
      %v849 = vunpack.c.l.b16 %v220
      %v850 = vunpack.c.h.b16 %v220
      %v851 = vunpack.c.l.b16 %v221
      %v852 = vunpack.c.h.b16 %v221
      %v853 = vunpack.c.l.b16 %v222
      %v854 = vunpack.c.h.b16 %v222
      %v855 = vunpack.c.l.b16 %v223
      %v856 = vunpack.c.h.b16 %v223
      %v857 = vunpack.c.l.b16 %v224
      %v858 = vunpack.c.h.b16 %v224
      %v859 = vunpack.c.l.b16 %v225
      %v860 = vunpack.c.h.b16 %v225
      %v861 = vunpack.c.l.b16 %v226
      %v862 = vunpack.c.h.b16 %v226
      %v863 = vunpack.c.l.b16 %v227
      %v864 = vunpack.c.h.b16 %v227
      %v865 = vunpack.c.l.b16 %v228
      %v866 = vunpack.c.h.b16 %v228
      %v867 = vunpack.c.l.b16 %v229
      %v868 = vunpack.c.h.b16 %v229
      %v869 = vunpack.c.l.b16 %v230
      %v870 = vunpack.c.h.b16 %v230
      %v871 = vunpack.c.l.b16 %v231
      %v872 = vunpack.c.h.b16 %v231
      %v873 = vunpack.c.l.b16 %v232
      %v874 = vunpack.c.h.b16 %v232
      %v875 = vunpack.c.l.b16 %v233
      %v876 = vunpack.c.h.b16 %v233
      %v877 = vunpack.c.l.b16 %v234
      %v878 = vunpack.c.h.b16 %v234
      %v879 = vunpack.c.l.b16 %v235
      %v880 = vunpack.c.h.b16 %v235
      %v881 = vunpack.c.l.b16 %v236
      %v882 = vunpack.c.h.b16 %v236
      %v883 = vunpack.c.l.b16 %v237
      %v884 = vunpack.c.h.b16 %v237
      %v885 = vunpack.c.l.b16 %v238
      %v886 = vunpack.c.h.b16 %v238
      %v887 = vunpack.c.l.b16 %v239
      %v888 = vunpack.c.h.b16 %v239
      %v889 = vunpack.c.l.b16 %v240
      %v890 = vunpack.c.h.b16 %v240
      %v891 = vunpack.c.l.b16 %v241
      %v892 = vunpack.c.h.b16 %v241
      %v893 = vunpack.c.l.b16 %v242
      %v894 = vunpack.c.h.b16 %v242
      %v895 = vunpack.c.l.b16 %v243
      %v896 = vunpack.c.h.b16 %v243
      %v897 = vunpack.c.l.b16 %v244
      %v898 = vunpack.c.h.b16 %v244
      %v899 = vunpack.c.l.b16 %v245
      %v900 = vunpack.c.h.b16 %v245
      %v901 = vunpack.c.l.b16 %v246
      %v902 = vunpack.c.h.b16 %v246
      %v903 = vunpack.c.l.b16 %v247
      %v904 = vunpack.c.h.b16 %v247
      %v905 = vunpack.c.l.b16 %v248
      %v906 = vunpack.c.h.b16 %v248
      %v907 = vunpack.c.l.b16 %v249
      %v908 = vunpack.c.h.b16 %v249
      %v909 = vunpack.c.l.b16 %v250
      %v910 = vunpack.c.h.b16 %v250
      %v911 = vunpack.c.l.b16 %v251
      %v912 = vunpack.c.h.b16 %v251
      %v913 = vunpack.c.l.b16 %v252
      %v914 = vunpack.c.h.b16 %v252
      %v915 = vunpack.c.l.b16 %v253
      %v916 = vunpack.c.h.b16 %v253
      %v917 = vunpack.c.l.b16 %v254
      %v918 = vunpack.c.h.b16 %v254
      %v919 = vunpack.c.l.b16 %v255
      %v920 = vunpack.c.h.b16 %v255
      %v921 = vunpack.c.l.b16 %v256
      %v922 = vunpack.c.h.b16 %v256
      %v923 = vunpack.c.l.b16 %v257
      %v924 = vunpack.c.h.b16 %v257
      %v925 = vunpack.c.l.b16 %v258
      %v926 = vunpack.c.h.b16 %v258
      %v927 = vunpack.c.l.b16 %v259
      %v928 = vunpack.c.h.b16 %v259
      %v929 = vunpack.c.l.b16 %v260
      %v930 = vunpack.c.h.b16 %v260
      %v931 = vunpack.c.l.b16 %v261
      %v932 = vunpack.c.h.b16 %v261
      %v933 = vunpack.c.l.b16 %v262
      %v934 = vunpack.c.h.b16 %v262
      %v935 = vunpack.c.l.b16 %v263
      %v936 = vunpack.c.h.b16 %v263
      %v937 = vunpack.c.l.b16 %v264
      %v938 = vunpack.c.h.b16 %v264
      %v939 = vunpack.c.l.b16 %v265
      %v940 = vunpack.c.h.b16 %v265
      %v941 = vunpack.c.l.b16 %v266
      %v942 = vunpack.c.h.b16 %v266
      %v943 = vunpack.c.l.b16 %v267
      %v944 = vunpack.c.h.b16 %v267
      %v945 = vunpack.c.l.b16 %v268
      %v946 = vunpack.c.h.b16 %v268
      %v947 = vunpack.c.l.b16 %v269
      %v948 = vunpack.c.h.b16 %v269
      %v949 = vunpack.c.l.b16 %v270
      %v950 = vunpack.c.h.b16 %v270
      %v951 = vunpack.c.l.b16 %v271
      %v952 = vunpack.c.h.b16 %v271
      %v953 = vunpack.c.l.b16 %v272
      %v954 = vunpack.c.h.b16 %v272
      %v955 = vunpack.c.l.b16 %v273
      %v956 = vunpack.c.h.b16 %v273
      %v957 = vunpack.c.l.b16 %v274
      %v958 = vunpack.c.h.b16 %v274
      %v959 = vunpack.c.l.b16 %v275
      %v960 = vunpack.c.h.b16 %v275
      %v961 = vunpack.c.l.b16 %v276
      %v962 = vunpack.c.h.b16 %v276
      %v963 = vunpack.c.l.b16 %v277
      %v964 = vunpack.c.h.b16 %v277
      %v965 = vunpack.c.l.b16 %v278
      %v966 = vunpack.c.h.b16 %v278
      %v967 = vunpack.c.l.b16 %v279
      %v968 = vunpack.c.h.b16 %v279
      %v969 = vunpack.c.l.b16 %v280
      %v970 = vunpack.c.h.b16 %v280
      %v971 = vunpack.c.l.b16 %v281
      %v972 = vunpack.c.h.b16 %v281
      %v973 = vunpack.c.l.b16 %v282
      %v974 = vunpack.c.h.b16 %v282
      %v975 = vunpack.c.l.b16 %v283
      %v976 = vunpack.c.h.b16 %v283
      %v977 = vunpack.c.l.b16 %v284
      %v978 = vunpack.c.h.b16 %v284
      %v979 = vunpack.c.l.b16 %v285
      %v980 = vunpack.c.h.b16 %v285
      %v981 = vunpack.c.l.b16 %v286
      %v982 = vunpack.c.h.b16 %v286
      %v983 = vunpack.c.l.b16 %v287
      %v984 = vunpack.c.h.b16 %v287
      %v985 = vunpack.c.l.b16 %v288
      %v986 = vunpack.c.h.b16 %v288
      %v987 = vunpack.c.l.b16 %v289
      %v988 = vunpack.c.h.b16 %v289
      %v989 = vunpack.c.l.b16 %v290
      %v990 = vunpack.c.h.b16 %v290
      %v991 = vunpack.c.l.b16 %v291
      %v992 = vunpack.c.h.b16 %v291
      %v993 = vunpack.c.l.b16 %v292
      %v994 = vunpack.c.h.b16 %v292
      %v995 = vunpack.c.l.b16 %v293
      %v996 = vunpack.c.h.b16 %v293
      %v997 = vunpack.c.l.b16 %v294
      %v998 = vunpack.c.h.b16 %v294
      %v999 = vunpack.c.l.b16 %v295
      %v1000 = vunpack.c.h.b16 %v295
      %v1001 = vunpack.c.l.b16 %v296
      %v1002 = vunpack.c.h.b16 %v296
      %v1003 = vunpack.c.l.b16 %v297
      %v1004 = vunpack.c.h.b16 %v297
      %v1005 = vunpack.c.l.b16 %v298
      %v1006 = vunpack.c.h.b16 %v298
      %v1007 = vunpack.c.l.b16 %v299
      %v1008 = vunpack.c.h.b16 %v299
      %v1009 = vunpack.c.l.b16 %v300
      %v1010 = vunpack.c.h.b16 %v300
      %v1011 = vunpack.c.l.b16 %v301
      %v1012 = vunpack.c.h.b16 %v301
      %v1013 = vunpack.c.l.b16 %v302
      %v1014 = vunpack.c.h.b16 %v302
      %v1015 = vunpack.c.l.b16 %v303
      %v1016 = vunpack.c.h.b16 %v303
      %v1017 = vunpack.c.l.b16 %v304
      %v1018 = vunpack.c.h.b16 %v304
      %v1019 = vunpack.c.l.b16 %v305
      %v1020 = vunpack.c.h.b16 %v305
      %v1021 = vunpack.c.l.b16 %v306
      %v1022 = vunpack.c.h.b16 %v306
      %v1023 = vunpack.c.l.b16 %v307
      %v1024 = vunpack.c.h.b16 %v307
      %v1025 = vunpack.c.l.b16 %v308
      %v1026 = vunpack.c.h.b16 %v308
      %v1027 = vunpack.c.l.b16 %v309
      %v1028 = vunpack.c.h.b16 %v309
      %v1029 = vunpack.c.l.b16 %v310
      %v1030 = vunpack.c.h.b16 %v310
      %v1031 = vunpack.c.l.b16 %v311
      %v1032 = vunpack.c.h.b16 %v311
      %v1033 = vunpack.c.l.b16 %v312
      %v1034 = vunpack.c.h.b16 %v312
      %v1035 = vunpack.c.l.b16 %v313
      %v1036 = vunpack.c.h.b16 %v313
      %v1037 = vunpack.c.l.b16 %v314
      %v1038 = vunpack.c.h.b16 %v314
      %v1039 = vunpack.c.l.b16 %v315
      %v1040 = vunpack.c.h.b16 %v315
      %v1041 = vunpack.c.l.b16 %v316
      %v1042 = vunpack.c.h.b16 %v316
      %v1043 = vunpack.c.l.b16 %v317
      %v1044 = vunpack.c.h.b16 %v317
      %v1045 = vunpack.c.l.b16 %v318
      %v1046 = vunpack.c.h.b16 %v318
      %v1047 = vunpack.c.l.b16 %v319
      %v1048 = vunpack.c.h.b16 %v319
      %v1049 = vunpack.c.l.b16 %v320
      %v1050 = vunpack.c.h.b16 %v320
      %v1051 = vunpack.c.l.b16 %v321
      %v1052 = vunpack.c.h.b16 %v321
      %v1053 = vunpack.c.l.b16 %v322
      %v1054 = vunpack.c.h.b16 %v322
      %v1055 = vunpack.c.l.b16 %v323
      %v1056 = vunpack.c.h.b16 %v323
      %v1057 = vunpack.c.l.b16 %v324
      %v1058 = vunpack.c.h.b16 %v324
      %v1059 = vunpack.c.l.b16 %v325
      %v1060 = vunpack.c.h.b16 %v325
      %v1061 = vunpack.c.l.b16 %v326
      %v1062 = vunpack.c.h.b16 %v326
      %v1063 = vunpack.c.l.b16 %v327
      %v1064 = vunpack.c.h.b16 %v327
      %v1065 = vunpack.c.l.b16 %v328
      %v1066 = vunpack.c.h.b16 %v328
      %v1067 = vunpack.c.l.b16 %v329
      %v1068 = vunpack.c.h.b16 %v329
      %v1069 = vunpack.c.l.b16 %v330
      %v1070 = vunpack.c.h.b16 %v330
      %v1071 = vunpack.c.l.b16 %v331
      %v1072 = vunpack.c.h.b16 %v331
      %v1073 = vunpack.c.l.b16 %v332
      %v1074 = vunpack.c.h.b16 %v332
      %v1075 = vunpack.c.l.b16 %v333
      %v1076 = vunpack.c.h.b16 %v333
      %v1077 = vunpack.c.l.b16 %v334
      %v1078 = vunpack.c.h.b16 %v334
      %v1079 = vunpack.c.l.b16 %v335
      %v1080 = vunpack.c.h.b16 %v335
      %v1081 = vunpack.c.l.b16 %v336
      %v1082 = vunpack.c.h.b16 %v336
      %v1083 = vunpack.c.l.b16 %v337
      %v1084 = vunpack.c.h.b16 %v337
      %v1085 = vunpack.c.l.b16 %v338
      %v1086 = vunpack.c.h.b16 %v338
      %v1087 = vunpack.c.l.b16 %v339
      %v1088 = vunpack.c.h.b16 %v339
      %v1089 = vunpack.c.l.b16 %v340
      %v1090 = vunpack.c.h.b16 %v340
      %v1091 = vunpack.c.l.b16 %v341
      %v1092 = vunpack.c.h.b16 %v341
      %v1093 = vunpack.c.l.b16 %v342
      %v1094 = vunpack.c.h.b16 %v342
      %v1095 = vunpack.c.l.b16 %v343
      %v1096 = vunpack.c.h.b16 %v343
      %v1097 = vunpack.c.l.b16 %v344
      %v1098 = vunpack.c.h.b16 %v344
      %v1099 = vunpack.c.l.b16 %v345
      %v1100 = vunpack.c.h.b16 %v345
      %v1101 = vunpack.c.l.b16 %v346
      %v1102 = vunpack.c.h.b16 %v346
      %v1103 = vunpack.c.l.b16 %v347
      %v1104 = vunpack.c.h.b16 %v347
      %v1105 = vunpack.c.l.b16 %v348
      %v1106 = vunpack.c.h.b16 %v348
      %v1107 = vunpack.c.l.b16 %v349
      %v1108 = vunpack.c.h.b16 %v349
      %v1109 = vunpack.c.l.b16 %v350
      %v1110 = vunpack.c.h.b16 %v350
      %v1111 = vunpack.c.l.b16 %v351
      %v1112 = vunpack.c.h.b16 %v351
      %v1113 = vunpack.c.l.b16 %v352
      %v1114 = vunpack.c.h.b16 %v352
      %v1115 = vunpack.c.l.b16 %v353
      %v1116 = vunpack.c.h.b16 %v353
      %v1117 = vunpack.c.l.b16 %v354
      %v1118 = vunpack.c.h.b16 %v354
      %v1119 = vunpack.c.l.b16 %v355
      %v1120 = vunpack.c.h.b16 %v355
      %v1121 = vunpack.c.l.b16 %v356
      %v1122 = vunpack.c.h.b16 %v356
      %v1123 = vunpack.c.l.b16 %v357
      %v1124 = vunpack.c.h.b16 %v357
      %v1125 = vunpack.c.l.b16 %v358
      %v1126 = vunpack.c.h.b16 %v358
      %v1127 = vunpack.c.l.b16 %v359
      %v1128 = vunpack.c.h.b16 %v359
      %v1129 = vunpack.c.l.b16 %v360
      %v1130 = vunpack.c.h.b16 %v360
      %v1131 = vunpack.c.l.b16 %v361
      %v1132 = vunpack.c.h.b16 %v361
      %v1133 = vunpack.c.l.b16 %v362
      %v1134 = vunpack.c.h.b16 %v362
      %v1135 = vunpack.c.l.b16 %v363
      %v1136 = vunpack.c.h.b16 %v363
      %v1137 = vunpack.c.l.b16 %v364
      %v1138 = vunpack.c.h.b16 %v364
      %v1139 = vunpack.c.l.b16 %v365
      %v1140 = vunpack.c.h.b16 %v365
      %v1141 = vunpack.c.l.b16 %v366
      %v1142 = vunpack.c.h.b16 %v366
      %v1143 = vunpack.c.l.b16 %v367
      %v1144 = vunpack.c.h.b16 %v367
      %v1145 = vunpack.c.l.b16 %v368
      %v1146 = vunpack.c.h.b16 %v368
      %v1147 = vunpack.c.l.b16 %v369
      %v1148 = vunpack.c.h.b16 %v369
      %v1149 = vunpack.c.l.b16 %v370
      %v1150 = vunpack.c.h.b16 %v370
      %v1151 = vunpack.c.l.b16 %v371
      %v1152 = vunpack.c.h.b16 %v371
      %v1153 = vunpack.c.l.b16 %v372
      %v1154 = vunpack.c.h.b16 %v372
      %v1155 = vunpack.c.l.b16 %v373
      %v1156 = vunpack.c.h.b16 %v373
      %v1157 = vunpack.c.l.b16 %v374
      %v1158 = vunpack.c.h.b16 %v374
      %v1159 = vunpack.c.l.b16 %v375
      %v1160 = vunpack.c.h.b16 %v375
      %v1161 = vunpack.c.l.b16 %v376
      %v1162 = vunpack.c.h.b16 %v376
      %v1163 = vunpack.c.l.b16 %v377
      %v1164 = vunpack.c.h.b16 %v377
      %v1165 = vunpack.c.l.b16 %v378
      %v1166 = vunpack.c.h.b16 %v378
      %v1167 = vunpack.c.l.b16 %v379
      %v1168 = vunpack.c.h.b16 %v379
      %v1169 = vunpack.c.l.b16 %v380
      %v1170 = vunpack.c.h.b16 %v380
      %v1171 = vunpack.c.l.b16 %v381
      %v1172 = vunpack.c.h.b16 %v381
      %v1173 = vunpack.c.l.b16 %v382
      %v1174 = vunpack.c.h.b16 %v382
      %v1175 = vunpack.c.l.b16 %v383
      %v1176 = vunpack.c.h.b16 %v383
      %v1177 = vunpack.c.l.b16 %v384
      %v1178 = vunpack.c.h.b16 %v384
      %v1179 = vunpack.c.l.b16 %v385
      %v1180 = vunpack.c.h.b16 %v385
      %v1181 = vunpack.c.l.b16 %v386
      %v1182 = vunpack.c.h.b16 %v386
      %v1183 = vunpack.c.l.b16 %v387
      %v1184 = vunpack.c.h.b16 %v387
      %v1185 = vunpack.c.l.b16 %v388
      %v1186 = vunpack.c.h.b16 %v388
      %v1187 = vunpack.c.l.b16 %v389
      %v1188 = vunpack.c.h.b16 %v389
      %v1189 = vunpack.c.l.b16 %v390
      %v1190 = vunpack.c.h.b16 %v390
      %v1191 = vunpack.c.l.b16 %v391
      %v1192 = vunpack.c.h.b16 %v391
      %v1193 = vunpack.c.l.b16 %v392
      %v1194 = vunpack.c.h.b16 %v392
      %v1195 = vunpack.c.l.b16 %v393
      %v1196 = vunpack.c.h.b16 %v393
      %v1197 = vunpack.c.l.b16 %v394
      %v1198 = vunpack.c.h.b16 %v394
      %v1199 = vunpack.c.l.b16 %v395
      %v1200 = vunpack.c.h.b16 %v395
      %v1201 = vunpack.c.l.b16 %v396
      %v1202 = vunpack.c.h.b16 %v396
      %v1203 = vunpack.c.l.b16 %v397
      %v1204 = vunpack.c.h.b16 %v397
      %v1205 = vunpack.c.l.b16 %v398
      %v1206 = vunpack.c.h.b16 %v398
      %v1207 = vunpack.c.l.b16 %v399
      %v1208 = vunpack.c.h.b16 %v399
      %v1209 = vunpack.c.l.b16 %v400
      %v1210 = vunpack.c.h.b16 %v400
      %v1211 = vunpack.c.l.b16 %v401
      %v1212 = vunpack.c.h.b16 %v401
      %v1213 = vunpack.c.l.b16 %v402
      %v1214 = vunpack.c.h.b16 %v402
      %v1215 = vunpack.c.l.b16 %v403
      %v1216 = vunpack.c.h.b16 %v403
      %v1217 = vunpack.c.l.b16 %v404
      %v1218 = vunpack.c.h.b16 %v404
      %v1219 = vunpack.c.l.b16 %v405
      %v1220 = vunpack.c.h.b16 %v405
      %v1221 = vunpack.c.l.b16 %v406
      %v1222 = vunpack.c.h.b16 %v406
      %v1223 = vunpack.c.l.b16 %v407
      %v1224 = vunpack.c.h.b16 %v407
      %v1225 = vunpack.c.l.b16 %v408
      %v1226 = vunpack.c.h.b16 %v408
      %v1227 = vunpack.c.l.b16 %v409
      %v1228 = vunpack.c.h.b16 %v409
      %v1229 = vunpack.c.l.b16 %v410
      %v1230 = vunpack.c.h.b16 %v410
      %v1231 = vunpack.c.l.b16 %v411
      %v1232 = vunpack.c.h.b16 %v411
      %v1233 = vunpack.c.l.b16 %v412
      %v1234 = vunpack.c.h.b16 %v412
      %v1235 = vunpack.c.l.b16 %v413
      %v1236 = vunpack.c.h.b16 %v413
      %v1237 = vunpack.c.l.b16 %v414
      %v1238 = vunpack.c.h.b16 %v414
      %v1239 = vunpack.c.l.b16 %v415
      %v1240 = vunpack.c.h.b16 %v415
      %v1241 = vunpack.c.l.b16 %v416
      %v1242 = vunpack.c.h.b16 %v416
      %v1243 = vunpack.c.l.b16 %v417
      %v1244 = vunpack.c.h.b16 %v417
      %v1245 = vunpack.c.l.b16 %v418
      %v1246 = vunpack.c.h.b16 %v418
      %v1247 = vunpack.c.l.b16 %v419
      %v1248 = vunpack.c.h.b16 %v419
      %v1249 = vunpack.c.l.b16 %v420
      %v1250 = vunpack.c.h.b16 %v420
      %v1251 = vunpack.c.l.b16 %v421
      %v1252 = vunpack.c.h.b16 %v421
      %v1253 = vunpack.c.l.b16 %v422
      %v1254 = vunpack.c.h.b16 %v422
      %v1255 = vunpack.c.l.b16 %v423
      %v1256 = vunpack.c.h.b16 %v423
      %v1257 = vunpack.c.l.b16 %v424
      %v1258 = vunpack.c.h.b16 %v424
      %v1259 = vunpack.c.l.b16 %v425
      %v1260 = vunpack.c.h.b16 %v425
      %v1261 = vunpack.c.l.b16 %v426
      %v1262 = vunpack.c.h.b16 %v426
      %v1263 = vunpack.c.l.b16 %v427
      %v1264 = vunpack.c.h.b16 %v427
      %v1265 = vunpack.c.l.b16 %v428
      %v1266 = vunpack.c.h.b16 %v428
      %v1267 = vunpack.c.l.b16 %v429
      %v1268 = vunpack.c.h.b16 %v429
      %v1269 = vunpack.c.l.b16 %v430
      %v1270 = vunpack.c.h.b16 %v430
      %v1271 = vunpack.c.l.b16 %v431
      %v1272 = vunpack.c.h.b16 %v431
      %v1273 = vunpack.c.l.b16 %v432
      %v1274 = vunpack.c.h.b16 %v432
      %v1275 = vunpack.c.l.b16 %v433
      %v1276 = vunpack.c.h.b16 %v433
      %v1277 = vunpack.c.l.b16 %v434
      %v1278 = vunpack.c.h.b16 %v434
      %v1279 = vunpack.c.l.b16 %v435
      %v1280 = vunpack.c.h.b16 %v435
      %v1281 = vunpack.c.l.b16 %v436
      %v1282 = vunpack.c.h.b16 %v436
      %v1283 = vunpack.c.l.b16 %v437
      %v1284 = vunpack.c.h.b16 %v437
      %v1285 = vunpack.c.l.b16 %v438
      %v1286 = vunpack.c.h.b16 %v438
      %v1287 = vunpack.c.l.b16 %v439
      %v1288 = vunpack.c.h.b16 %v439
      %v1289 = vunpack.c.l.b16 %v440
      %v1290 = vunpack.c.h.b16 %v440
      %v1291 = vunpack.c.l.b16 %v441
      %v1292 = vunpack.c.h.b16 %v441
      %v1293 = vunpack.c.l.b16 %v442
      %v1294 = vunpack.c.h.b16 %v442
      %v1295 = vunpack.c.l.b16 %v443
      %v1296 = vunpack.c.h.b16 %v443
      %v1297 = vunpack.c.l.b16 %v444
      %v1298 = vunpack.c.h.b16 %v444
      %v1299 = vunpack.c.l.b16 %v445
      %v1300 = vunpack.c.h.b16 %v445
      %v1301 = vunpack.c.l.b16 %v446
      %v1302 = vunpack.c.h.b16 %v446
      %v1303 = vunpack.c.l.b16 %v447
      %v1304 = vunpack.c.h.b16 %v447
      %v1305 = vunpack.c.l.b16 %v448
      %v1306 = vunpack.c.h.b16 %v448
      %v1307 = vunpack.c.l.b16 %v449
      %v1308 = vunpack.c.h.b16 %v449
      %v1309 = vunpack.c.l.b16 %v450
      %v1310 = vunpack.c.h.b16 %v450
      %v1311 = vpack.c.b16 %v801, %v799
      %v1312 = vpack.c.b16 %v802, %v800
      %v1313 = vpack.c.b16 %v805, %v803
      %v1314 = vpack.c.b16 %v806, %v804
      %v1315 = vpack.c.b16 %v809, %v807
      %v1316 = vpack.c.b16 %v810, %v808
      %v1317 = vpack.c.b16 %v813, %v811
      %v1318 = vpack.c.b16 %v814, %v812
      %v1319 = vpack.c.b16 %v817, %v815
      %v1320 = vpack.c.b16 %v818, %v816
      %v1321 = vpack.c.b16 %v821, %v819
      %v1322 = vpack.c.b16 %v822, %v820
      %v1323 = vpack.c.b16 %v825, %v823
      %v1324 = vpack.c.b16 %v826, %v824
      %v1325 = vpack.c.b16 %v829, %v827
      %v1326 = vpack.c.b16 %v830, %v828
      %v1327 = vpack.c.b16 %v833, %v831
      %v1328 = vpack.c.b16 %v834, %v832
      %v1329 = vpack.c.b16 %v837, %v835
      %v1330 = vpack.c.b16 %v838, %v836
      %v1331 = vpack.c.b16 %v841, %v839
      %v1332 = vpack.c.b16 %v842, %v840
      %v1333 = vpack.c.b16 %v845, %v843
      %v1334 = vpack.c.b16 %v846, %v844
      %v1335 = vpack.c.b16 %v849, %v847
      %v1336 = vpack.c.b16 %v850, %v848
      %v1337 = vpack.c.b16 %v853, %v851
      %v1338 = vpack.c.b16 %v854, %v852
      %v1339 = vpack.c.b16 %v857, %v855
      %v1340 = vpack.c.b16 %v858, %v856
      %v1341 = vpack.c.b16 %v861, %v859
      %v1342 = vpack.c.b16 %v862, %v860
      %v1343 = vpack.c.b16 %v865, %v863
      %v1344 = vpack.c.b16 %v866, %v864
      %v1345 = vpack.c.b16 %v869, %v867
      %v1346 = vpack.c.b16 %v870, %v868
      %v1347 = vpack.c.b16 %v873, %v871
      %v1348 = vpack.c.b16 %v874, %v872
      %v1349 = vpack.c.b16 %v877, %v875
      %v1350 = vpack.c.b16 %v878, %v876
      %v1351 = vpack.c.b16 %v881, %v879
      %v1352 = vpack.c.b16 %v882, %v880
      %v1353 = vpack.c.b16 %v885, %v883
      %v1354 = vpack.c.b16 %v886, %v884
      %v1355 = vpack.c.b16 %v889, %v887
      %v1356 = vpack.c.b16 %v890, %v888
      %v1357 = vpack.c.b16 %v893, %v891
      %v1358 = vpack.c.b16 %v894, %v892
      %v1359 = vpack.c.b16 %v897, %v895
      %v1360 = vpack.c.b16 %v898, %v896
      %v1361 = vpack.c.b16 %v901, %v899
      %v1362 = vpack.c.b16 %v902, %v900
      %v1363 = vpack.c.b16 %v905, %v903
      %v1364 = vpack.c.b16 %v906, %v904
      %v1365 = vpack.c.b16 %v909, %v907
      %v1366 = vpack.c.b16 %v910, %v908
      %v1367 = vpack.c.b16 %v913, %v911
      %v1368 = vpack.c.b16 %v914, %v912
      %v1369 = vpack.c.b16 %v917, %v915
      %v1370 = vpack.c.b16 %v918, %v916
      %v1371 = vpack.c.b16 %v921, %v919
      %v1372 = vpack.c.b16 %v922, %v920
      %v1373 = vpack.c.b16 %v925, %v923
      %v1374 = vpack.c.b16 %v926, %v924
      %v1375 = vpack.c.b16 %v929, %v927
      %v1376 = vpack.c.b16 %v930, %v928
      %v1377 = vpack.c.b16 %v933, %v931
      %v1378 = vpack.c.b16 %v934, %v932
      %v1379 = vpack.c.b16 %v937, %v935
      %v1380 = vpack.c.b16 %v938, %v936
      %v1381 = vpack.c.b16 %v941, %v939
      %v1382 = vpack.c.b16 %v942, %v940
      %v1383 = vpack.c.b16 %v945, %v943
      %v1384 = vpack.c.b16 %v946, %v944
      %v1385 = vpack.c.b16 %v949, %v947
      %v1386 = vpack.c.b16 %v950, %v948
      %v1387 = vpack.c.b16 %v953, %v951
      %v1388 = vpack.c.b16 %v954, %v952
      %v1389 = vpack.c.b16 %v957, %v955
      %v1390 = vpack.c.b16 %v958, %v956
      %v1391 = vpack.c.b16 %v961, %v959
      %v1392 = vpack.c.b16 %v962, %v960
      %v1393 = vpack.c.b16 %v965, %v963
      %v1394 = vpack.c.b16 %v966, %v964
      %v1395 = vpack.c.b16 %v969, %v967
      %v1396 = vpack.c.b16 %v970, %v968
      %v1397 = vpack.c.b16 %v973, %v971
      %v1398 = vpack.c.b16 %v974, %v972
      %v1399 = vpack.c.b16 %v977, %v975
      %v1400 = vpack.c.b16 %v978, %v976
      %v1401 = vpack.c.b16 %v981, %v979
      %v1402 = vpack.c.b16 %v982, %v980
      %v1403 = vpack.c.b16 %v985, %v983
      %v1404 = vpack.c.b16 %v986, %v984
      %v1405 = vpack.c.b16 %v989, %v987
      %v1406 = vpack.c.b16 %v990, %v988
      %v1407 = vpack.c.b16 %v993, %v991
      %v1408 = vpack.c.b16 %v994, %v992
      %v1409 = vpack.c.b16 %v997, %v995
      %v1410 = vpack.c.b16 %v998, %v996
      %v1411 = vpack.c.b16 %v1001, %v999
      %v1412 = vpack.c.b16 %v1002, %v1000
      %v1413 = vpack.c.b16 %v1005, %v1003
      %v1414 = vpack.c.b16 %v1006, %v1004
      %v1415 = vpack.c.b16 %v1009, %v1007
      %v1416 = vpack.c.b16 %v1010, %v1008
      %v1417 = vpack.c.b16 %v1013, %v1011
      %v1418 = vpack.c.b16 %v1014, %v1012
      %v1419 = vpack.c.b16 %v1017, %v1015
      %v1420 = vpack.c.b16 %v1018, %v1016
      %v1421 = vpack.c.b16 %v1021, %v1019
      %v1422 = vpack.c.b16 %v1022, %v1020
      %v1423 = vpack.c.b16 %v1025, %v1023
      %v1424 = vpack.c.b16 %v1026, %v1024
      %v1425 = vpack.c.b16 %v1029, %v1027
      %v1426 = vpack.c.b16 %v1030, %v1028
      %v1427 = vpack.c.b16 %v1033, %v1031
      %v1428 = vpack.c.b16 %v1034, %v1032
      %v1429 = vpack.c.b16 %v1037, %v1035
      %v1430 = vpack.c.b16 %v1038, %v1036
      %v1431 = vpack.c.b16 %v1041, %v1039
      %v1432 = vpack.c.b16 %v1042, %v1040
      %v1433 = vpack.c.b16 %v1045, %v1043
      %v1434 = vpack.c.b16 %v1046, %v1044
      %v1435 = vpack.c.b16 %v1049, %v1047
      %v1436 = vpack.c.b16 %v1050, %v1048
      %v1437 = vpack.c.b16 %v1053, %v1051
      %v1438 = vpack.c.b16 %v1054, %v1052
      %v1439 = vpack.c.b16 %v1057, %v1055
      %v1440 = vpack.c.b16 %v1058, %v1056
      %v1441 = vpack.c.b16 %v1061, %v1059
      %v1442 = vpack.c.b16 %v1062, %v1060
      %v1443 = vpack.c.b16 %v1065, %v1063
      %v1444 = vpack.c.b16 %v1066, %v1064
      %v1445 = vpack.c.b16 %v1069, %v1067
      %v1446 = vpack.c.b16 %v1070, %v1068
      %v1447 = vpack.c.b16 %v1073, %v1071
      %v1448 = vpack.c.b16 %v1074, %v1072
      %v1449 = vpack.c.b16 %v1077, %v1075
      %v1450 = vpack.c.b16 %v1078, %v1076
      %v1451 = vpack.c.b16 %v1081, %v1079
      %v1452 = vpack.c.b16 %v1082, %v1080
      %v1453 = vpack.c.b16 %v1085, %v1083
      %v1454 = vpack.c.b16 %v1086, %v1084
      %v1455 = vpack.c.b16 %v1089, %v1087
      %v1456 = vpack.c.b16 %v1090, %v1088
      %v1457 = vpack.c.b16 %v1093, %v1091
      %v1458 = vpack.c.b16 %v1094, %v1092
      %v1459 = vpack.c.b16 %v1097, %v1095
      %v1460 = vpack.c.b16 %v1098, %v1096
      %v1461 = vpack.c.b16 %v1101, %v1099
      %v1462 = vpack.c.b16 %v1102, %v1100
      %v1463 = vpack.c.b16 %v1105, %v1103
      %v1464 = vpack.c.b16 %v1106, %v1104
      %v1465 = vpack.c.b16 %v1109, %v1107
      %v1466 = vpack.c.b16 %v1110, %v1108
      %v1467 = vpack.c.b16 %v1113, %v1111
      %v1468 = vpack.c.b16 %v1114, %v1112
      %v1469 = vpack.c.b16 %v1117, %v1115
      %v1470 = vpack.c.b16 %v1118, %v1116
      %v1471 = vpack.c.b16 %v1121, %v1119
      %v1472 = vpack.c.b16 %v1122, %v1120
      %v1473 = vpack.c.b16 %v1125, %v1123
      %v1474 = vpack.c.b16 %v1126, %v1124
      %v1475 = vpack.c.b16 %v1129, %v1127
      %v1476 = vpack.c.b16 %v1130, %v1128
      %v1477 = vpack.c.b16 %v1133, %v1131
      %v1478 = vpack.c.b16 %v1134, %v1132
      %v1479 = vpack.c.b16 %v1137, %v1135
      %v1480 = vpack.c.b16 %v1138, %v1136
      %v1481 = vpack.c.b16 %v1141, %v1139
      %v1482 = vpack.c.b16 %v1142, %v1140
      %v1483 = vpack.c.b16 %v1145, %v1143
      %v1484 = vpack.c.b16 %v1146, %v1144
      %v1485 = vpack.c.b16 %v1149, %v1147
      %v1486 = vpack.c.b16 %v1150, %v1148
      %v1487 = vpack.c.b16 %v1153, %v1151
      %v1488 = vpack.c.b16 %v1154, %v1152
      %v1489 = vpack.c.b16 %v1157, %v1155
      %v1490 = vpack.c.b16 %v1158, %v1156
      %v1491 = vpack.c.b16 %v1161, %v1159
      %v1492 = vpack.c.b16 %v1162, %v1160
      %v1493 = vpack.c.b16 %v1165, %v1163
      %v1494 = vpack.c.b16 %v1166, %v1164
      %v1495 = vpack.c.b16 %v1169, %v1167
      %v1496 = vpack.c.b16 %v1170, %v1168
      %v1497 = vpack.c.b16 %v1173, %v1171
      %v1498 = vpack.c.b16 %v1174, %v1172
      %v1499 = vpack.c.b16 %v1177, %v1175
      %v1500 = vpack.c.b16 %v1178, %v1176
      %v1501 = vpack.c.b16 %v1181, %v1179
      %v1502 = vpack.c.b16 %v1182, %v1180
      %v1503 = vpack.c.b16 %v1185, %v1183
      %v1504 = vpack.c.b16 %v1186, %v1184
      %v1505 = vpack.c.b16 %v1189, %v1187
      %v1506 = vpack.c.b16 %v1190, %v1188
      %v1507 = vpack.c.b16 %v1193, %v1191
      %v1508 = vpack.c.b16 %v1194, %v1192
      %v1509 = vpack.c.b16 %v1197, %v1195
      %v1510 = vpack.c.b16 %v1198, %v1196
      %v1511 = vpack.c.b16 %v1201, %v1199
      %v1512 = vpack.c.b16 %v1202, %v1200
      %v1513 = vpack.c.b16 %v1205, %v1203
      %v1514 = vpack.c.b16 %v1206, %v1204
      %v1515 = vpack.c.b16 %v1209, %v1207
      %v1516 = vpack.c.b16 %v1210, %v1208
      %v1517 = vpack.c.b16 %v1213, %v1211
      %v1518 = vpack.c.b16 %v1214, %v1212
      %v1519 = vpack.c.b16 %v1217, %v1215
      %v1520 = vpack.c.b16 %v1218, %v1216
      %v1521 = vpack.c.b16 %v1221, %v1219
      %v1522 = vpack.c.b16 %v1222, %v1220
      %v1523 = vpack.c.b16 %v1225, %v1223
      %v1524 = vpack.c.b16 %v1226, %v1224
      %v1525 = vpack.c.b16 %v1229, %v1227
      %v1526 = vpack.c.b16 %v1230, %v1228
      %v1527 = vpack.c.b16 %v1233, %v1231
      %v1528 = vpack.c.b16 %v1234, %v1232
      %v1529 = vpack.c.b16 %v1237, %v1235
      %v1530 = vpack.c.b16 %v1238, %v1236
      %v1531 = vpack.c.b16 %v1241, %v1239
      %v1532 = vpack.c.b16 %v1242, %v1240
      %v1533 = vpack.c.b16 %v1245, %v1243
      %v1534 = vpack.c.b16 %v1246, %v1244
      %v1535 = vpack.c.b16 %v1249, %v1247
      %v1536 = vpack.c.b16 %v1250, %v1248
      %v1537 = vpack.c.b16 %v1253, %v1251
      %v1538 = vpack.c.b16 %v1254, %v1252
      %v1539 = vpack.c.b16 %v1257, %v1255
      %v1540 = vpack.c.b16 %v1258, %v1256
      %v1541 = vpack.c.b16 %v1261, %v1259
      %v1542 = vpack.c.b16 %v1262, %v1260
      %v1543 = vpack.c.b16 %v1265, %v1263
      %v1544 = vpack.c.b16 %v1266, %v1264
      %v1545 = vpack.c.b16 %v1269, %v1267
      %v1546 = vpack.c.b16 %v1270, %v1268
      %v1547 = vpack.c.b16 %v1273, %v1271
      %v1548 = vpack.c.b16 %v1274, %v1272
      %v1549 = vpack.c.b16 %v1277, %v1275
      %v1550 = vpack.c.b16 %v1278, %v1276
      %v1551 = vpack.c.b16 %v1281, %v1279
      %v1552 = vpack.c.b16 %v1282, %v1280
      %v1553 = vpack.c.b16 %v1285, %v1283
      %v1554 = vpack.c.b16 %v1286, %v1284
      %v1555 = vpack.c.b16 %v1289, %v1287
      %v1556 = vpack.c.b16 %v1290, %v1288
      %v1557 = vpack.c.b16 %v1293, %v1291
      %v1558 = vpack.c.b16 %v1294, %v1292
      %v1559 = vpack.c.b16 %v1297, %v1295
      %v1560 = vpack.c.b16 %v1298, %v1296
      %v1561 = vpack.c.b16 %v1301, %v1299
      %v1562 = vpack.c.b16 %v1302, %v1300
      %v1563 = vpack.c.b16 %v1305, %v1303
      %v1564 = vpack.c.b16 %v1306, %v1304
      %v1565 = vpack.c.b16 %v1309, %v1307
      %v1566 = vpack.c.b16 %v1310, %v1308
      %1823 = vmatprep.subr.bf16.mxu0 %v1312
      %1824 = vmatpush1.bf16.msra.mxu0 %v1311
      %1825 = vmatprep.subr.bf16.mxu0 %v1314
      %1826 = vmatpush1.bf16.msra.mxu0 %v1313
      %1827 = vmatprep.subr.bf16.mxu0 %v1316
      %1828 = vmatpush1.bf16.msra.mxu0 %v1315
      %1829 = vmatprep.subr.bf16.mxu0 %v1318
      %1830 = vmatpush1.bf16.msra.mxu0 %v1317
      %1831 = vmatprep.subr.bf16.mxu0 %v1320
      %1832 = vmatpush1.bf16.msra.mxu0 %v1319
      %1833 = vmatprep.subr.bf16.mxu0 %v1322
      %1834 = vmatpush1.bf16.msra.mxu0 %v1321
      %1835 = vmatprep.subr.bf16.mxu0 %v1324
      %1836 = vmatpush1.bf16.msra.mxu0 %v1323
      %1837 = vmatprep.subr.bf16.mxu0 %v1326
      %1838 = vmatpush1.bf16.msra.mxu0 %v1325
      %1839 = vmatprep.subr.bf16.mxu0 %v1328
      %1840 = vmatpush1.bf16.msra.mxu0 %v1327
      %1841 = vmatprep.subr.bf16.mxu0 %v1330
      %1842 = vmatpush1.bf16.msra.mxu0 %v1329
      %1843 = vmatprep.subr.bf16.mxu0 %v1332
      %1844 = vmatpush1.bf16.msra.mxu0 %v1331
      %1845 = vmatprep.subr.bf16.mxu0 %v1334
      %1846 = vmatpush1.bf16.msra.mxu0 %v1333
      %1847 = vmatprep.subr.bf16.mxu0 %v1336
      %1848 = vmatpush1.bf16.msra.mxu0 %v1335
      %1849 = vmatprep.subr.bf16.mxu0 %v1338
      %1850 = vmatpush1.bf16.msra.mxu0 %v1337
      %1851 = vmatprep.subr.bf16.mxu0 %v1340
      %1852 = vmatpush1.bf16.msra.mxu0 %v1339
      %1853 = vmatprep.subr.bf16.mxu0 %v1342
      %1854 = vmatpush1.bf16.msra.mxu0 %v1341
      %1855 = vmatprep.mubr.bf16.mxu0 %v512
      %1856 = vmatmul.mubr.bf16.gmra.mrb[0].mxu0 %v511
      %v1857 = vpop.f32.mrb[0].mxu0
      %v1858 = vadd.f32 %v456, %v1857
      %v1859 = vpop.f32.mrb[0].mxu0
      %v1860 = vadd.f32 %v460, %v1859
      %v1861 = vpop.f32.mrb[0].mxu0
      %v1862 = vadd.f32 %v456, %v1861
      %v1863 = vpop.f32.mrb[0].mxu0
      %v1864 = vadd.f32 %v460, %v1863
      %1865 = vdwg.mxu0
      %1866 = vmatprep.subr.bf16.mxu0 %v1344
      %1867 = vmatpush1.bf16.msra.mxu0 %v1343
      %1868 = vmatprep.subr.bf16.mxu0 %v1346
      %1869 = vmatpush1.bf16.msra.mxu0 %v1345
      %1870 = vmatprep.subr.bf16.mxu0 %v1348
      %1871 = vmatpush1.bf16.msra.mxu0 %v1347
      %1872 = vmatprep.subr.bf16.mxu0 %v1350
      %1873 = vmatpush1.bf16.msra.mxu0 %v1349
      %1874 = vmatprep.subr.bf16.mxu0 %v1352
      %1875 = vmatpush1.bf16.msra.mxu0 %v1351
      %1876 = vmatprep.subr.bf16.mxu0 %v1354
      %1877 = vmatpush1.bf16.msra.mxu0 %v1353
      %1878 = vmatprep.subr.bf16.mxu0 %v1356
      %1879 = vmatpush1.bf16.msra.mxu0 %v1355
      %1880 = vmatprep.subr.bf16.mxu0 %v1358
      %1881 = vmatpush1.bf16.msra.mxu0 %v1357
      %1882 = vmatprep.subr.bf16.mxu0 %v1360
      %1883 = vmatpush1.bf16.msra.mxu0 %v1359
      %1884 = vmatprep.subr.bf16.mxu0 %v1362
      %1885 = vmatpush1.bf16.msra.mxu0 %v1361
      %1886 = vmatprep.subr.bf16.mxu0 %v1364
      %1887 = vmatpush1.bf16.msra.mxu0 %v1363
      %1888 = vmatprep.subr.bf16.mxu0 %v1366
      %1889 = vmatpush1.bf16.msra.mxu0 %v1365
      %1890 = vmatprep.subr.bf16.mxu0 %v1368
      %1891 = vmatpush1.bf16.msra.mxu0 %v1367
      %1892 = vmatprep.subr.bf16.mxu0 %v1370
      %1893 = vmatpush1.bf16.msra.mxu0 %v1369
      %1894 = vmatprep.subr.bf16.mxu0 %v1372
      %1895 = vmatpush1.bf16.msra.mxu0 %v1371
      %1896 = vmatprep.subr.bf16.mxu0 %v1374
      %1897 = vmatpush1.bf16.msra.mxu0 %v1373
      %1898 = vmatprep.mubr.bf16.mxu0 %v514
      %1899 = vmatmul.mubr.bf16.gmra.mrb[0].mxu0 %v513
      %v1900 = vpop.f32.mrb[0].mxu0
      %v1901 = vadd.f32 %v1858, %v1900
      %v1902 = vpop.f32.mrb[0].mxu0
      %v1903 = vadd.f32 %v1860, %v1902
      %v1904 = vpop.f32.mrb[0].mxu0
      %v1905 = vadd.f32 %v1862, %v1904
      %v1906 = vpop.f32.mrb[0].mxu0
      %v1907 = vadd.f32 %v1864, %v1906
      %1908 = vdwg.mxu0
      %1909 = vmatprep.subr.bf16.mxu0 %v1376
      %1910 = vmatpush1.bf16.msra.mxu0 %v1375
      %1911 = vmatprep.subr.bf16.mxu0 %v1378
      %1912 = vmatpush1.bf16.msra.mxu0 %v1377
      %1913 = vmatprep.subr.bf16.mxu0 %v1380
      %1914 = vmatpush1.bf16.msra.mxu0 %v1379
      %1915 = vmatprep.subr.bf16.mxu0 %v1382
      %1916 = vmatpush1.bf16.msra.mxu0 %v1381
      %1917 = vmatprep.subr.bf16.mxu0 %v1384
      %1918 = vmatpush1.bf16.msra.mxu0 %v1383
      %1919 = vmatprep.subr.bf16.mxu0 %v1386
      %1920 = vmatpush1.bf16.msra.mxu0 %v1385
      %1921 = vmatprep.subr.bf16.mxu0 %v1388
      %1922 = vmatpush1.bf16.msra.mxu0 %v1387
      %1923 = vmatprep.subr.bf16.mxu0 %v1390
      %1924 = vmatpush1.bf16.msra.mxu0 %v1389
      %1925 = vmatprep.subr.bf16.mxu0 %v1392
      %1926 = vmatpush1.bf16.msra.mxu0 %v1391
      %1927 = vmatprep.subr.bf16.mxu0 %v1394
      %1928 = vmatpush1.bf16.msra.mxu0 %v1393
      %1929 = vmatprep.subr.bf16.mxu0 %v1396
      %1930 = vmatpush1.bf16.msra.mxu0 %v1395
      %1931 = vmatprep.subr.bf16.mxu0 %v1398
      %1932 = vmatpush1.bf16.msra.mxu0 %v1397
      %1933 = vmatprep.subr.bf16.mxu0 %v1400
      %1934 = vmatpush1.bf16.msra.mxu0 %v1399
      %1935 = vmatprep.subr.bf16.mxu0 %v1402
      %1936 = vmatpush1.bf16.msra.mxu0 %v1401
      %1937 = vmatprep.subr.bf16.mxu0 %v1404
      %1938 = vmatpush1.bf16.msra.mxu0 %v1403
      %1939 = vmatprep.subr.bf16.mxu0 %v1406
      %1940 = vmatpush1.bf16.msra.mxu0 %v1405
      %1941 = vmatprep.mubr.bf16.mxu0 %v516
      %1942 = vmatmul.mubr.bf16.gmra.mrb[0].mxu0 %v515
      %v1943 = vpop.f32.mrb[0].mxu0
      %v1944 = vadd.f32 %v1901, %v1943
      %v1945 = vpop.f32.mrb[0].mxu0
      %v1946 = vadd.f32 %v1903, %v1945
      %v1947 = vpop.f32.mrb[0].mxu0
      %v1948 = vadd.f32 %v1905, %v1947
      %v1949 = vpop.f32.mrb[0].mxu0
      %v1950 = vadd.f32 %v1907, %v1949
      %1951 = vdwg.mxu0
      %1952 = vmatprep.subr.bf16.mxu0 %v1408
      %1953 = vmatpush1.bf16.msra.mxu0 %v1407
      %1954 = vmatprep.subr.bf16.mxu0 %v1410
      %1955 = vmatpush1.bf16.msra.mxu0 %v1409
      %1956 = vmatprep.subr.bf16.mxu0 %v1412
      %1957 = vmatpush1.bf16.msra.mxu0 %v1411
      %1958 = vmatprep.subr.bf16.mxu0 %v1414
      %1959 = vmatpush1.bf16.msra.mxu0 %v1413
      %1960 = vmatprep.subr.bf16.mxu0 %v1416
      %1961 = vmatpush1.bf16.msra.mxu0 %v1415
      %1962 = vmatprep.subr.bf16.mxu0 %v1418
      %1963 = vmatpush1.bf16.msra.mxu0 %v1417
      %1964 = vmatprep.subr.bf16.mxu0 %v1420
      %1965 = vmatpush1.bf16.msra.mxu0 %v1419
      %1966 = vmatprep.subr.bf16.mxu0 %v1422
      %1967 = vmatpush1.bf16.msra.mxu0 %v1421
      %1968 = vmatprep.subr.bf16.mxu0 %v1424
      %1969 = vmatpush1.bf16.msra.mxu0 %v1423
      %1970 = vmatprep.subr.bf16.mxu0 %v1426
      %1971 = vmatpush1.bf16.msra.mxu0 %v1425
      %1972 = vmatprep.subr.bf16.mxu0 %v1428
      %1973 = vmatpush1.bf16.msra.mxu0 %v1427
      %1974 = vmatprep.subr.bf16.mxu0 %v1430
      %1975 = vmatpush1.bf16.msra.mxu0 %v1429
      %1976 = vmatprep.subr.bf16.mxu0 %v1432
      %1977 = vmatpush1.bf16.msra.mxu0 %v1431
      %1978 = vmatprep.subr.bf16.mxu0 %v1434
      %1979 = vmatpush1.bf16.msra.mxu0 %v1433
      %1980 = vmatprep.subr.bf16.mxu0 %v1436
      %1981 = vmatpush1.bf16.msra.mxu0 %v1435
      %1982 = vmatprep.subr.bf16.mxu0 %v1438
      %1983 = vmatpush1.bf16.msra.mxu0 %v1437
      %1984 = vmatprep.mubr.bf16.mxu0 %v518
      %1985 = vmatmul.mubr.bf16.gmra.mrb[0].mxu0 %v517
      %v1986 = vpop.f32.mrb[0].mxu0
      %v1987 = vadd.f32 %v1944, %v1986
      %v1988 = vpop.f32.mrb[0].mxu0
      %v1989 = vadd.f32 %v1946, %v1988
      %v1990 = vpop.f32.mrb[0].mxu0
      %v1991 = vadd.f32 %v1948, %v1990
      %v1992 = vpop.f32.mrb[0].mxu0
      %v1993 = vadd.f32 %v1950, %v1992
      %1994 = vdwg.mxu0
      %1995 = vmatprep.subr.bf16.mxu0 %v1440
      %1996 = vmatpush1.bf16.msra.mxu0 %v1439
      %1997 = vmatprep.subr.bf16.mxu0 %v1442
      %1998 = vmatpush1.bf16.msra.mxu0 %v1441
      %1999 = vmatprep.subr.bf16.mxu0 %v1444
      %2000 = vmatpush1.bf16.msra.mxu0 %v1443
      %2001 = vmatprep.subr.bf16.mxu0 %v1446
      %2002 = vmatpush1.bf16.msra.mxu0 %v1445
      %2003 = vmatprep.subr.bf16.mxu0 %v1448
      %2004 = vmatpush1.bf16.msra.mxu0 %v1447
      %2005 = vmatprep.subr.bf16.mxu0 %v1450
      %2006 = vmatpush1.bf16.msra.mxu0 %v1449
      %2007 = vmatprep.subr.bf16.mxu0 %v1452
      %2008 = vmatpush1.bf16.msra.mxu0 %v1451
      %2009 = vmatprep.subr.bf16.mxu0 %v1454
      %2010 = vmatpush1.bf16.msra.mxu0 %v1453
      %2011 = vmatprep.subr.bf16.mxu0 %v1456
      %2012 = vmatpush1.bf16.msra.mxu0 %v1455
      %2013 = vmatprep.subr.bf16.mxu0 %v1458
      %2014 = vmatpush1.bf16.msra.mxu0 %v1457
      %2015 = vmatprep.subr.bf16.mxu0 %v1460
      %2016 = vmatpush1.bf16.msra.mxu0 %v1459
      %2017 = vmatprep.subr.bf16.mxu0 %v1462
      %2018 = vmatpush1.bf16.msra.mxu0 %v1461
      %2019 = vmatprep.subr.bf16.mxu0 %v1464
      %2020 = vmatpush1.bf16.msra.mxu0 %v1463
      %2021 = vmatprep.subr.bf16.mxu0 %v1466
      %2022 = vmatpush1.bf16.msra.mxu0 %v1465
      %2023 = vmatprep.subr.bf16.mxu0 %v1468
      %2024 = vmatpush1.bf16.msra.mxu0 %v1467
      %2025 = vmatprep.subr.bf16.mxu0 %v1470
      %2026 = vmatpush1.bf16.msra.mxu0 %v1469
      %2027 = vmatprep.mubr.bf16.mxu0 %v520
      %2028 = vmatmul.mubr.bf16.gmra.mrb[0].mxu0 %v519
      %v2029 = vpop.f32.mrb[0].mxu0
      %v2030 = vadd.f32 %v1987, %v2029
      %v2031 = vpop.f32.mrb[0].mxu0
      %v2032 = vadd.f32 %v1989, %v2031
      %v2033 = vpop.f32.mrb[0].mxu0
      %v2034 = vadd.f32 %v1991, %v2033
      %v2035 = vpop.f32.mrb[0].mxu0
      %v2036 = vadd.f32 %v1993, %v2035
      %2037 = vdwg.mxu0
      %2038 = vmatprep.subr.bf16.mxu0 %v1472
      %2039 = vmatpush1.bf16.msra.mxu0 %v1471
      %2040 = vmatprep.subr.bf16.mxu0 %v1474
      %2041 = vmatpush1.bf16.msra.mxu0 %v1473
      %2042 = vmatprep.subr.bf16.mxu0 %v1476
      %2043 = vmatpush1.bf16.msra.mxu0 %v1475
      %2044 = vmatprep.subr.bf16.mxu0 %v1478
      %2045 = vmatpush1.bf16.msra.mxu0 %v1477
      %2046 = vmatprep.subr.bf16.mxu0 %v1480
      %2047 = vmatpush1.bf16.msra.mxu0 %v1479
      %2048 = vmatprep.subr.bf16.mxu0 %v1482
      %2049 = vmatpush1.bf16.msra.mxu0 %v1481
      %2050 = vmatprep.subr.bf16.mxu0 %v1484
      %2051 = vmatpush1.bf16.msra.mxu0 %v1483
      %2052 = vmatprep.subr.bf16.mxu0 %v1486
      %2053 = vmatpush1.bf16.msra.mxu0 %v1485
      %2054 = vmatprep.subr.bf16.mxu0 %v1488
      %2055 = vmatpush1.bf16.msra.mxu0 %v1487
      %2056 = vmatprep.subr.bf16.mxu0 %v1490
      %2057 = vmatpush1.bf16.msra.mxu0 %v1489
      %2058 = vmatprep.subr.bf16.mxu0 %v1492
      %2059 = vmatpush1.bf16.msra.mxu0 %v1491
      %2060 = vmatprep.subr.bf16.mxu0 %v1494
      %2061 = vmatpush1.bf16.msra.mxu0 %v1493
      %2062 = vmatprep.subr.bf16.mxu0 %v1496
      %2063 = vmatpush1.bf16.msra.mxu0 %v1495
      %2064 = vmatprep.subr.bf16.mxu0 %v1498
      %2065 = vmatpush1.bf16.msra.mxu0 %v1497
      %2066 = vmatprep.subr.bf16.mxu0 %v1500
      %2067 = vmatpush1.bf16.msra.mxu0 %v1499
      %2068 = vmatprep.subr.bf16.mxu0 %v1502
      %2069 = vmatpush1.bf16.msra.mxu0 %v1501
      %2070 = vmatprep.mubr.bf16.mxu0 %v522
      %2071 = vmatmul.mubr.bf16.gmra.mrb[0].mxu0 %v521
      %v2072 = vpop.f32.mrb[0].mxu0
      %v2073 = vadd.f32 %v2030, %v2072
      %v2074 = vpop.f32.mrb[0].mxu0
      %v2075 = vadd.f32 %v2032, %v2074
      %v2076 = vpop.f32.mrb[0].mxu0
      %v2077 = vadd.f32 %v2034, %v2076
      %v2078 = vpop.f32.mrb[0].mxu0
      %v2079 = vadd.f32 %v2036, %v2078
      %2080 = vdwg.mxu0
      %2081 = vmatprep.subr.bf16.mxu0 %v1504
      %2082 = vmatpush1.bf16.msra.mxu0 %v1503
      %2083 = vmatprep.subr.bf16.mxu0 %v1506
      %2084 = vmatpush1.bf16.msra.mxu0 %v1505
      %2085 = vmatprep.subr.bf16.mxu0 %v1508
      %2086 = vmatpush1.bf16.msra.mxu0 %v1507
      %2087 = vmatprep.subr.bf16.mxu0 %v1510
      %2088 = vmatpush1.bf16.msra.mxu0 %v1509
      %2089 = vmatprep.subr.bf16.mxu0 %v1512
      %2090 = vmatpush1.bf16.msra.mxu0 %v1511
      %2091 = vmatprep.subr.bf16.mxu0 %v1514
      %2092 = vmatpush1.bf16.msra.mxu0 %v1513
      %2093 = vmatprep.subr.bf16.mxu0 %v1516
      %2094 = vmatpush1.bf16.msra.mxu0 %v1515
      %2095 = vmatprep.subr.bf16.mxu0 %v1518
      %2096 = vmatpush1.bf16.msra.mxu0 %v1517
      %2097 = vmatprep.subr.bf16.mxu0 %v1520
      %2098 = vmatpush1.bf16.msra.mxu0 %v1519
      %2099 = vmatprep.subr.bf16.mxu0 %v1522
      %2100 = vmatpush1.bf16.msra.mxu0 %v1521
      %2101 = vmatprep.subr.bf16.mxu0 %v1524
      %2102 = vmatpush1.bf16.msra.mxu0 %v1523
      %2103 = vmatprep.subr.bf16.mxu0 %v1526
      %2104 = vmatpush1.bf16.msra.mxu0 %v1525
      %2105 = vmatprep.subr.bf16.mxu0 %v1528
      %2106 = vmatpush1.bf16.msra.mxu0 %v1527
      %2107 = vmatprep.subr.bf16.mxu0 %v1530
      %2108 = vmatpush1.bf16.msra.mxu0 %v1529
      %2109 = vmatprep.subr.bf16.mxu0 %v1532
      %2110 = vmatpush1.bf16.msra.mxu0 %v1531
      %2111 = vmatprep.subr.bf16.mxu0 %v1534
      %2112 = vmatpush1.bf16.msra.mxu0 %v1533
      %2113 = vmatprep.mubr.bf16.mxu0 %v524
      %2114 = vmatmul.mubr.bf16.gmra.mrb[0].mxu0 %v523
      %v2115 = vpop.f32.mrb[0].mxu0
      %v2116 = vadd.f32 %v2073, %v2115
      %v2117 = vpop.f32.mrb[0].mxu0
      %v2118 = vadd.f32 %v2075, %v2117
      %v2119 = vpop.f32.mrb[0].mxu0
      %v2120 = vadd.f32 %v2077, %v2119
      %v2121 = vpop.f32.mrb[0].mxu0
      %v2122 = vadd.f32 %v2079, %v2121
      %2123 = vdwg.mxu0
      %2124 = vmatprep.subr.bf16.mxu0 %v1536
      %2125 = vmatpush1.bf16.msra.mxu0 %v1535
      %2126 = vmatprep.subr.bf16.mxu0 %v1538
      %2127 = vmatpush1.bf16.msra.mxu0 %v1537
      %2128 = vmatprep.subr.bf16.mxu0 %v1540
      %2129 = vmatpush1.bf16.msra.mxu0 %v1539
      %2130 = vmatprep.subr.bf16.mxu0 %v1542
      %2131 = vmatpush1.bf16.msra.mxu0 %v1541
      %2132 = vmatprep.subr.bf16.mxu0 %v1544
      %2133 = vmatpush1.bf16.msra.mxu0 %v1543
      %2134 = vmatprep.subr.bf16.mxu0 %v1546
      %2135 = vmatpush1.bf16.msra.mxu0 %v1545
      %2136 = vmatprep.subr.bf16.mxu0 %v1548
      %2137 = vmatpush1.bf16.msra.mxu0 %v1547
      %2138 = vmatprep.subr.bf16.mxu0 %v1550
      %2139 = vmatpush1.bf16.msra.mxu0 %v1549
      %2140 = vmatprep.subr.bf16.mxu0 %v1552
      %2141 = vmatpush1.bf16.msra.mxu0 %v1551
      %2142 = vmatprep.subr.bf16.mxu0 %v1554
      %2143 = vmatpush1.bf16.msra.mxu0 %v1553
      %2144 = vmatprep.subr.bf16.mxu0 %v1556
      %2145 = vmatpush1.bf16.msra.mxu0 %v1555
      %2146 = vmatprep.subr.bf16.mxu0 %v1558
      %2147 = vmatpush1.bf16.msra.mxu0 %v1557
      %2148 = vmatprep.subr.bf16.mxu0 %v1560
      %2149 = vmatpush1.bf16.msra.mxu0 %v1559
      %2150 = vmatprep.subr.bf16.mxu0 %v1562
      %2151 = vmatpush1.bf16.msra.mxu0 %v1561
      %2152 = vmatprep.subr.bf16.mxu0 %v1564
      %2153 = vmatpush1.bf16.msra.mxu0 %v1563
      %2154 = vmatprep.subr.bf16.mxu0 %v1566
      %2155 = vmatpush1.bf16.msra.mxu0 %v1565
      %2156 = vmatprep.mubr.bf16.mxu0 %v526
      %2157 = vmatmul.mubr.bf16.gmra.mrb[0].mxu0 %v525
      %v2158 = vpop.f32.mrb[0].mxu0
      %v2159 = vadd.f32 %v2116, %v2158
      %v2160 = vpop.f32.mrb[0].mxu0
      %v2161 = vadd.f32 %v2118, %v2160
      %v2162 = vpop.f32.mrb[0].mxu0
      %v2163 = vadd.f32 %v2120, %v2162
      %v2164 = vpop.f32.mrb[0].mxu0
      %v2165 = vadd.f32 %v2122, %v2164
      %2166 = vdwg.mxu0
      %v2167 = vmul.f32 %v2159, 0.2
      %v2168 = vmul.f32 %v2161, 0.2
      %v2169 = vmul.f32 %v2163, 0.2
      %v2170 = vmul.f32 %v2165, 0.2
      %v2171 = vmax.f32 %v2159, %v2167
      %v2172 = vmax.f32 %v2161, %v2168
      %v2173 = vmax.f32 %v2163, %v2169
      %v2174 = vmax.f32 %v2165, %v2170
      %v2175 = vpack.c.bf16 %v2173, %v2171
      %v2176 = vpack.c.bf16 %v2174, %v2172
      %v2179 = vunpack.c.l.b16 %v2175
      %v2180 = vunpack.c.l.b16 %v2176
      %v2181 = vunpack.c.h.b16 %v2175
      %v2182 = vunpack.c.h.b16 %v2176
      %v2183 = vpack.c.b16 %v2180, %v2179
      %v2184 = vpack.c.b16 %v2182, %v2181
      %2187 = vst [vmem:[%s177] sm:$0xff] %v2183
      %2188 = vst [vmem:[%s177 + $0x8] sm:$0xff] %v2184
      %s2189 = smul.u32 2, %s14
      %p2190 = scmp.lt.s32.totalorder %s2189, 3
      %s2191 = scalar_select %p2190, %s2189, 3
      %s2192 = smul.addr %s2191, 2
      %s2193 = smul.addr %s2192, 4
      %s2194 = scalar_lea.vmem %s3, %s2193
      // Predicated region
      $region33: #{discriminator_forward.6} parent=31 // pred_check
        %p2195 = pneg %p100
      $region34: #{discriminator_forward.6} parent=31 // pred_check_branch
        %2197 = sbr.rel (%p2195) target = $region36
      $region35: #{discriminator_forward.6} parent=31 // pred_region
        %s2198 = smul.u32 2, %s14
      $region36: #{discriminator_forward.6} parent=31 // pred_fallthru
        _
    $region32: #{discriminator_forward.6} parent=5 // pred_fallthru
      _
    %p2199 = scmp.le.s32.totalorder 2, %s9
    // Predicated region
    $region37: #{discriminator_forward.6} parent=5 // pred_check
      %p2200 = pneg %p2199
    $region38: #{discriminator_forward.6} parent=5 // pred_check_branch
      %2202 = sbr.rel (%p2200) target = $region40
    $region39: #{discriminator_forward.6} parent=5 // pred_region
      %s2203 = ssub.s32 %s9, 2
      // Predicated region
      $region41: #{discriminator_forward.6} parent=39 // pred_check
        %p2204 = pneg %p106
      $region42: #{discriminator_forward.6} parent=39 // pred_check_branch
        %2206 = sbr.rel (%p2204) target = $region44
      $region43: #{discriminator_forward.6} parent=39 // pred_region
        %s2207 = smul.u32 2, %s15
        %p2208 = scmp.lt.s32.totalorder %s2207, 3
        %s2209 = scalar_select %p2208, %s2207, 3
        %s2210 = smul.addr %s2209, 2
        %s2211 = smul.addr %s2210, 4
        %s2212 = scalar_lea.vmem %s3, %s2211
      $region44: #{discriminator_forward.6} parent=39 // pred_fallthru
        _
    $region40: #{discriminator_forward.6} parent=5 // pred_fallthru
      _
  $region6: #{discriminator_forward.6} parent=0 // loop_footer
    %s13 = sadd.s32 1, %s9
  $region7: #{discriminator_forward.6} parent=0 // loop_footer_branch
    %8 = sbr.rel target = $region3
  $region8: #{discriminator_forward.6} parent=0 // loop_exit
    _

</llo_original>
